<compile_context>
chip_gen: v5e
topology: v5e:2x2
jax: 0.10.0
libtpu: 0.0.40
codegen_flags: <defaults>
</compile_context>

<pallas_src>
import functools

import jax
import jax.numpy as jnp
import numpy as np
from jax.experimental import pallas as pl
from jax.experimental.pallas import tpu as pltpu

K = 5          # conv kernel size
PAD = 2        # conv padding
POOL = 3       # maxpool kernel size
POOL_PAD = 1   # maxpool padding


def _make_encoder_kernel(nb, H, W, act_dtype, use_pltpu_roll):
    """Fused conv1+ReLU+pool1 + conv2+ReLU+pool2 for `nb` images per step."""
    HW = H * W
    N = nb * HW
    NK = 2 * PAD + 1                       # 5 offsets per spatial axis

    def lane_roll(a, s):
        # result[c, i] = a[c, (i + s) % N]   (s is a static Python int)
        if use_pltpu_roll and a.dtype.itemsize == 4:
            return pltpu.roll(a, shift=(-s) % N, axis=1)   # one XLU rotation
        # packed sub-32-bit slabs: keep the generic slice+concat lowering
        return jnp.roll(a, -s, axis=1)

    def kernel(masks_ref, x_ref, w1_ref, b1_ref, w2_ref, b2_ref, out_ref):
        def mask_row(dh, dw):
            idx = (dh + PAD) * NK + (dw + PAD)
            return masks_ref[idx:idx + 1, :]                # (1, N)

        def shift2d(a, dh, dw):
            # a[c, (n,h,w)] -> a[c, (n,h+dh,w+dw)], exactly 0 outside the
            # image; the mask also zeroes lanes that wrapped across images.
            s = dh * W + dw
            if s == 0:
                return a
            return lane_roll(a, s) * mask_row(dh, dw)

        def conv5x5_relu(a, w_ref_, b_ref_):
            # dh-chunked im2col: 5 accumulated MXU matmuls
            #   (Cout, K*cin) @ (K*cin, N)   — MXU has slack, VMEM does not.
            cin = a.shape[0]
            acc = None
            for kh in range(K):
                patches = jnp.concatenate(
                    [shift2d(a, kh - PAD, kw - PAD) for kw in range(K)],
                    axis=0)                                 # (K*cin, N)
                part = jnp.dot(w_ref_[kh], patches,
                               preferred_element_type=jnp.float32)
                acc = part if acc is None else acc + part
            # bias + ReLU in f32 from the accumulator, then one cast.
            return jnp.maximum(acc + b_ref_[...], 0.0).astype(act_dtype)

        def maxpool3x3(a):
            # Separable 3x3 / stride 1 / pad 1 max pool (4 shifts, not 8).
            # NOTE: the zero fill only emulates PyTorch's -inf padding because
            # `a` is post-ReLU (>= 0).  Keep that invariant.
            row = jnp.maximum(a, jnp.maximum(shift2d(a, 0, -1),
                                             shift2d(a, 0, 1)))
            return jnp.maximum(row, jnp.maximum(shift2d(row, -1, 0),
                                                shift2d(row, 1, 0)))

        x = x_ref[...].astype(act_dtype)                    # (1, nb*H*W)
        h1 = maxpool3x3(conv5x5_relu(x, w1_ref, b1_ref))    # (16, nb*H*W)
        h2 = maxpool3x3(conv5x5_relu(h1, w2_ref, b2_ref))   # (32, nb*H*W)

        # lane-dense, vreg-aligned stores: one (32, H*W) slab per image.
        for n in range(nb):
            out_ref[n, :, :] = h2[:, n * HW:(n + 1) * HW].astype(out_ref.dtype)

    return kernel


def _conv_weight_chunks(w, act_dtype):
    # (Cout, Cin, K, K) -> (K_h, Cout, K_w*Cin); chunk kh is w3[kh] and its
    # column order [kw, cin] matches the im2col patch concatenation order.
    cout, cin = w.shape[0], w.shape[1]
    return jnp.transpose(w, (2, 0, 3, 1)).reshape(K, cout, K * cin).astype(act_dtype)


def _edge_masks(nb, H, W, dtype):
    # Grid-invariant (25, nb*H*W) 0/1 validity masks (one row per (dh, dw)),
    # built once on the host and DMA'd in via a constant index_map.
    HW = H * W
    hw = np.arange(nb * HW) % HW
    hh, ww = hw // W, hw % W
    rows = [((hh + dh >= 0) & (hh + dh < H) & (ww + dw >= 0) & (ww + dw < W))
            for dh in range(-PAD, PAD + 1) for dw in range(-PAD, PAD + 1)]
    return jnp.asarray(np.stack(rows, axis=0), dtype=dtype)


def _default_act_dtype():
    # bf16 slabs halve the XLU/VPU/VMEM work on bf16-native VPUs (v6e, v7x);
    # keep f32 on v5e and older chips (no bf16 vector ALU -> no win there).
    try:
        kind = jax.devices()[0].device_kind.lower()
    except Exception:
        return jnp.float32
    return jnp.bfloat16 if any(t in kind for t in ("v6", "v7", "tpu7")) else jnp.float32


def _pick_images_per_step(B, act_dtype):
    # Biggest nb within the scoped-VMEM budget (16 MiB default on v5e -> cap
    # 16 with f32 slabs; 32 MiB on v6e/v7x -> cap 32 with bf16 slabs) while
    # keeping >= 2 grid steps when possible so both v7x TensorCores get work.
    cap = 32 if jnp.dtype(act_dtype).itemsize == 2 else 16
    cands = [nb for nb in (32, 16, 8, 4, 2, 1) if nb <= cap and B % nb == 0]
    multi = [nb for nb in cands if B // nb >= 2]
    return (multi or cands)[0]


def encoder_forward(x, params, *, images_per_step=None, act_dtype=None,
                    use_pltpu_roll=True):
    """x: (B, 1, H, W) f32 -> (B, 32*H*W) f32 (matches Encoder.forward)."""
    w1, b1, w2, b2 = params
    B, cin, H, W = x.shape
    assert cin == 1, "Encoder.conv1 expects a single input channel"
    c1, c2 = w1.shape[0], w2.shape[0]
    HW = H * W

    if act_dtype is None:
        act_dtype = _default_act_dtype()
    if images_per_step is None:
        images_per_step = _pick_images_per_step(B, act_dtype)
    nb = images_per_step
    assert B % nb == 0
    N = nb * HW

    # glue: contiguous reshapes (free) + tiny weight reordering into kh-chunks
    x_rows = x.reshape(B // nb, 1, N)             # nb images folded into lanes
    w1_c = _conv_weight_chunks(w1, act_dtype)     # (K, c1, K*1)
    w2_c = _conv_weight_chunks(w2, act_dtype)     # (K, c2, K*c1)
    b1_2d = b1.reshape(c1, 1).astype(jnp.float32)
    b2_2d = b2.reshape(c2, 1).astype(jnp.float32)
    masks = _edge_masks(nb, H, W, act_dtype)      # (25, N), grid-invariant

    kernel = _make_encoder_kernel(nb, H, W, act_dtype, use_pltpu_roll)

    out = pl.pallas_call(
        kernel,
        out_shape=jax.ShapeDtypeStruct((B, c2, HW), jnp.float32),
        grid=(B // nb,),
        in_specs=[
            pl.BlockSpec((K * K, N), lambda b: (0, 0)),           # masks (resident)
            pl.BlockSpec((None, 1, N), lambda b: (b, 0, 0)),      # images
            pl.BlockSpec((K, c1, K * cin), lambda b: (0, 0, 0)),  # w1 kh-chunks
            pl.BlockSpec((c1, 1), lambda b: (0, 0)),              # b1
            pl.BlockSpec((K, c2, K * c1), lambda b: (0, 0, 0)),   # w2 kh-chunks
            pl.BlockSpec((c2, 1), lambda b: (0, 0)),              # b2
        ],
        out_specs=pl.BlockSpec((nb, c2, HW), lambda b: (b, 0, 0)),
        compiler_params=pltpu.CompilerParams(
            dimension_semantics=("parallel",)),   # batch steps are independent
    )(masks, x_rows, w1_c, b1_2d, w2_c, b2_2d)

    return out.reshape(B, c2 * HW)                # == x.view(B, -1)


def init_params(key):
    """Deterministic synthetic parameters matching the module's shapes."""
    k1, k2, k3, k4 = jax.random.split(key, 4)
    w1 = jax.random.normal(k1, (16, 1, K, K), jnp.float32) * 0.1
    b1 = jax.random.normal(k2, (16,), jnp.float32) * 0.1
    w2 = jax.random.normal(k3, (32, 16, K, K), jnp.float32) * 0.05
    b2 = jax.random.normal(k4, (32,), jnp.float32) * 0.05
    return w1, b1, w2, b2


def _ref_forward(x, params):
    """Pure-JAX f32 reference (mirrors the PyTorch forward) for verification."""
    w1, b1, w2, b2 = params

    def block(x, w, b):
        y = jax.lax.conv_general_dilated(
            x, w, window_strides=(1, 1), padding=((PAD, PAD), (PAD, PAD)),
            dimension_numbers=("NCHW", "OIHW", "NCHW"),
            precision=jax.lax.Precision.HIGHEST)
        y = jax.nn.relu(y + b.reshape(1, -1, 1, 1))
        y = jax.lax.reduce_window(
            y, -jnp.inf, jax.lax.max,
            window_dimensions=(1, 1, POOL, POOL),
            window_strides=(1, 1, 1, 1),
            padding=((0, 0), (0, 0), (POOL_PAD, POOL_PAD), (POOL_PAD, POOL_PAD)))
        return y

    y = block(block(x, w1, b1), w2, b2)
    return y.reshape(y.shape[0], -1)


if __name__ == "__main__":
    key = jax.random.PRNGKey(0)
    kx, kp = jax.random.split(key)

    B, Cin, H, W = 2, 1, 16, 16
    x = jax.random.normal(kx, (B, Cin, H, W), jnp.float32)
    params = init_params(kp)

    try:
        out = jax.block_until_ready(jax.jit(encoder_forward)(x, params))
        act = _default_act_dtype()
    except Exception:
        # Conservative fallback (f32 slabs + generic roll lowering) if the
        # bf16-slab / rotate variant is unsupported on this chip/toolchain.
        fwd = jax.jit(functools.partial(encoder_forward,
                                        act_dtype=jnp.float32,
                                        use_pltpu_roll=False))
        out = jax.block_until_ready(fwd(x, params))
        act = jnp.float32

    assert out.shape == (B, 32 * H * W), out.shape

    # Kernel matmuls use the MXU's default (bf16-input) precision; with bf16
    # activation slabs (v6e/v7x) h1/patches are rounded once more, so allow a
    # correspondingly looser tolerance vs. the f32 HIGHEST-precision reference.
    ref = _ref_forward(x, params)
    tol = 3e-2 if jnp.dtype(act).itemsize == 4 else 8e-2
    max_err = float(jnp.max(jnp.abs(out - ref)))
    assert jnp.allclose(out, ref, atol=tol, rtol=tol), f"max_err={max_err}"

    print("KERNEL_OK")
</pallas_src>

<mosaic_0001>
module attributes {stable_mosaic.version = 11 : i64} {
  func.func @kernel(%arg0: i32, %arg1: memref<25x256xf32, #tpu.memory_space<vmem>>, %arg2: memref<1x1x256xf32, #tpu.memory_space<vmem>>, %arg3: memref<5x16x5xf32, #tpu.memory_space<vmem>>, %arg4: memref<16x1xf32, #tpu.memory_space<vmem>>, %arg5: memref<5x32x80xf32, #tpu.memory_space<vmem>>, %arg6: memref<32x1xf32, #tpu.memory_space<vmem>>, %arg7: memref<1x32x256xf32, #tpu.memory_space<vmem>>) attributes {dimension_semantics = [#tpu.dimension_semantics<parallel>], iteration_bounds = array<i64: 2>, scalar_prefetch = 0 : i64, scratch_operands = 0 : i64, tpu.core_type = #tpu.core_type<tc>, window_params = [{pipeline_mode = #tpu.pipeline_mode<synchronous>, transform_indices = @transform_0, window_bounds = array<i64: 25, 256>}, {transform_indices = @transform_1, window_bounds = array<i64: 1, 1, 256>}, {pipeline_mode = #tpu.pipeline_mode<synchronous>, transform_indices = @transform_2, window_bounds = array<i64: 5, 16, 5>}, {pipeline_mode = #tpu.pipeline_mode<synchronous>, transform_indices = @transform_3, window_bounds = array<i64: 16, 1>}, {pipeline_mode = #tpu.pipeline_mode<synchronous>, transform_indices = @transform_4, window_bounds = array<i64: 5, 32, 80>}, {pipeline_mode = #tpu.pipeline_mode<synchronous>, transform_indices = @transform_5, window_bounds = array<i64: 32, 1>}, {transform_indices = @transform_6, window_bounds = array<i64: 1, 32, 256>}]} {
    %c0 = arith.constant 0 : index
    %c0_0 = arith.constant 0 : index
    %c0_1 = arith.constant 0 : index
    %0 = vector.load %arg2[%c0, %c0_0, %c0_1] : memref<1x1x256xf32, #tpu.memory_space<vmem>>, vector<1x1x256xf32>
    %1 = vector.shape_cast %0 : vector<1x1x256xf32> to vector<1x256xf32>
    %c34_i32 = arith.constant 34 : i32
    %2 = tpu.dynamic_rotate %1 by %c34_i32 dim 1 : vector<1x256xf32>, i32 -> vector<1x256xf32>
    %c0_2 = arith.constant 0 : index
    %c0_3 = arith.constant 0 : index
    %3 = vector.load %arg1[%c0_2, %c0_3] : memref<25x256xf32, #tpu.memory_space<vmem>>, vector<1x256xf32>
    %4 = arith.mulf %2, %3 : vector<1x256xf32>
    %c33_i32 = arith.constant 33 : i32
    %5 = tpu.dynamic_rotate %1 by %c33_i32 dim 1 : vector<1x256xf32>, i32 -> vector<1x256xf32>
    %c1 = arith.constant 1 : index
    %c0_4 = arith.constant 0 : index
    %6 = vector.load %arg1[%c1, %c0_4] : memref<25x256xf32, #tpu.memory_space<vmem>>, vector<1x256xf32>
    %7 = arith.mulf %5, %6 : vector<1x256xf32>
    %c32_i32 = arith.constant 32 : i32
    %8 = tpu.dynamic_rotate %1 by %c32_i32 dim 1 : vector<1x256xf32>, i32 -> vector<1x256xf32>
    %c2 = arith.constant 2 : index
    %c0_5 = arith.constant 0 : index
    %9 = vector.load %arg1[%c2, %c0_5] : memref<25x256xf32, #tpu.memory_space<vmem>>, vector<1x256xf32>
    %10 = arith.mulf %8, %9 : vector<1x256xf32>
    %c31_i32 = arith.constant 31 : i32
    %11 = tpu.dynamic_rotate %1 by %c31_i32 dim 1 : vector<1x256xf32>, i32 -> vector<1x256xf32>
    %c3 = arith.constant 3 : index
    %c0_6 = arith.constant 0 : index
    %12 = vector.load %arg1[%c3, %c0_6] : memref<25x256xf32, #tpu.memory_space<vmem>>, vector<1x256xf32>
    %13 = arith.mulf %11, %12 : vector<1x256xf32>
    %c30_i32 = arith.constant 30 : i32
    %14 = tpu.dynamic_rotate %1 by %c30_i32 dim 1 : vector<1x256xf32>, i32 -> vector<1x256xf32>
    %c4 = arith.constant 4 : index
    %c0_7 = arith.constant 0 : index
    %15 = vector.load %arg1[%c4, %c0_7] : memref<25x256xf32, #tpu.memory_space<vmem>>, vector<1x256xf32>
    %16 = arith.mulf %14, %15 : vector<1x256xf32>
    %17 = tpu.concatenate %4, %7, %10, %13, %16 in 0 : vector<1x256xf32>, vector<1x256xf32>, vector<1x256xf32>, vector<1x256xf32>, vector<1x256xf32> -> vector<5x256xf32>
    %c0_8 = arith.constant 0 : index
    %c0_9 = arith.constant 0 : index
    %c0_10 = arith.constant 0 : index
    %18 = vector.load %arg3[%c0_8, %c0_9, %c0_10] : memref<5x16x5xf32, #tpu.memory_space<vmem>>, vector<1x16x5xf32>
    %19 = vector.shape_cast %18 : vector<1x16x5xf32> to vector<16x5xf32>
    %cst = arith.constant dense<0.000000e+00> : vector<16x256xf32>
    %20 = tpu.matmul %19, %17, %cst {dimension_numbers = #tpu.dot_dimension_numbers<[1], [0], [0], [1], [0, 0, 1, 1], [], []>} : vector<16x5xf32>, vector<5x256xf32>, vector<16x256xf32> -> vector<16x256xf32>
    %c18_i32 = arith.constant 18 : i32
    %21 = tpu.dynamic_rotate %1 by %c18_i32 dim 1 : vector<1x256xf32>, i32 -> vector<1x256xf32>
    %c5 = arith.constant 5 : index
    %c0_11 = arith.constant 0 : index
    %22 = vector.load %arg1[%c5, %c0_11] : memref<25x256xf32, #tpu.memory_space<vmem>>, vector<1x256xf32>
    %23 = arith.mulf %21, %22 : vector<1x256xf32>
    %c17_i32 = arith.constant 17 : i32
    %24 = tpu.dynamic_rotate %1 by %c17_i32 dim 1 : vector<1x256xf32>, i32 -> vector<1x256xf32>
    %c6 = arith.constant 6 : index
    %c0_12 = arith.constant 0 : index
    %25 = vector.load %arg1[%c6, %c0_12] : memref<25x256xf32, #tpu.memory_space<vmem>>, vector<1x256xf32>
    %26 = arith.mulf %24, %25 : vector<1x256xf32>
    %c16_i32 = arith.constant 16 : i32
    %27 = tpu.dynamic_rotate %1 by %c16_i32 dim 1 : vector<1x256xf32>, i32 -> vector<1x256xf32>
    %c7 = arith.constant 7 : index
    %c0_13 = arith.constant 0 : index
    %28 = vector.load %arg1[%c7, %c0_13] : memref<25x256xf32, #tpu.memory_space<vmem>>, vector<1x256xf32>
    %29 = arith.mulf %27, %28 : vector<1x256xf32>
    %c15_i32 = arith.constant 15 : i32
    %30 = tpu.dynamic_rotate %1 by %c15_i32 dim 1 : vector<1x256xf32>, i32 -> vector<1x256xf32>
    %c8 = arith.constant 8 : index
    %c0_14 = arith.constant 0 : index
    %31 = vector.load %arg1[%c8, %c0_14] : memref<25x256xf32, #tpu.memory_space<vmem>>, vector<1x256xf32>
    %32 = arith.mulf %30, %31 : vector<1x256xf32>
    %c14_i32 = arith.constant 14 : i32
    %33 = tpu.dynamic_rotate %1 by %c14_i32 dim 1 : vector<1x256xf32>, i32 -> vector<1x256xf32>
    %c9 = arith.constant 9 : index
    %c0_15 = arith.constant 0 : index
    %34 = vector.load %arg1[%c9, %c0_15] : memref<25x256xf32, #tpu.memory_space<vmem>>, vector<1x256xf32>
    %35 = arith.mulf %33, %34 : vector<1x256xf32>
    %36 = tpu.concatenate %23, %26, %29, %32, %35 in 0 : vector<1x256xf32>, vector<1x256xf32>, vector<1x256xf32>, vector<1x256xf32>, vector<1x256xf32> -> vector<5x256xf32>
    %c1_16 = arith.constant 1 : index
    %c0_17 = arith.constant 0 : index
    %c0_18 = arith.constant 0 : index
    %37 = vector.load %arg3[%c1_16, %c0_17, %c0_18] : memref<5x16x5xf32, #tpu.memory_space<vmem>>, vector<1x16x5xf32>
    %38 = vector.shape_cast %37 : vector<1x16x5xf32> to vector<16x5xf32>
    %cst_19 = arith.constant dense<0.000000e+00> : vector<16x256xf32>
    %39 = tpu.matmul %38, %36, %cst_19 {dimension_numbers = #tpu.dot_dimension_numbers<[1], [0], [0], [1], [0, 0, 1, 1], [], []>} : vector<16x5xf32>, vector<5x256xf32>, vector<16x256xf32> -> vector<16x256xf32>
    %40 = arith.addf %20, %39 : vector<16x256xf32>
    %c2_i32 = arith.constant 2 : i32
    %41 = tpu.dynamic_rotate %1 by %c2_i32 dim 1 : vector<1x256xf32>, i32 -> vector<1x256xf32>
    %c10 = arith.constant 10 : index
    %c0_20 = arith.constant 0 : index
    %42 = vector.load %arg1[%c10, %c0_20] : memref<25x256xf32, #tpu.memory_space<vmem>>, vector<1x256xf32>
    %43 = arith.mulf %41, %42 : vector<1x256xf32>
    %c1_i32 = arith.constant 1 : i32
    %44 = tpu.dynamic_rotate %1 by %c1_i32 dim 1 : vector<1x256xf32>, i32 -> vector<1x256xf32>
    %c11 = arith.constant 11 : index
    %c0_21 = arith.constant 0 : index
    %45 = vector.load %arg1[%c11, %c0_21] : memref<25x256xf32, #tpu.memory_space<vmem>>, vector<1x256xf32>
    %46 = arith.mulf %44, %45 : vector<1x256xf32>
    %c255_i32 = arith.constant 255 : i32
    %47 = tpu.dynamic_rotate %1 by %c255_i32 dim 1 : vector<1x256xf32>, i32 -> vector<1x256xf32>
    %c13 = arith.constant 13 : index
    %c0_22 = arith.constant 0 : index
    %48 = vector.load %arg1[%c13, %c0_22] : memref<25x256xf32, #tpu.memory_space<vmem>>, vector<1x256xf32>
    %49 = arith.mulf %47, %48 : vector<1x256xf32>
    %c254_i32 = arith.constant 254 : i32
    %50 = tpu.dynamic_rotate %1 by %c254_i32 dim 1 : vector<1x256xf32>, i32 -> vector<1x256xf32>
    %c14 = arith.constant 14 : index
    %c0_23 = arith.constant 0 : index
    %51 = vector.load %arg1[%c14, %c0_23] : memref<25x256xf32, #tpu.memory_space<vmem>>, vector<1x256xf32>
    %52 = arith.mulf %50, %51 : vector<1x256xf32>
    %53 = tpu.concatenate %43, %46, %1, %49, %52 in 0 : vector<1x256xf32>, vector<1x256xf32>, vector<1x256xf32>, vector<1x256xf32>, vector<1x256xf32> -> vector<5x256xf32>
    %c2_24 = arith.constant 2 : index
    %c0_25 = arith.constant 0 : index
    %c0_26 = arith.constant 0 : index
    %54 = vector.load %arg3[%c2_24, %c0_25, %c0_26] : memref<5x16x5xf32, #tpu.memory_space<vmem>>, vector<1x16x5xf32>
    %55 = vector.shape_cast %54 : vector<1x16x5xf32> to vector<16x5xf32>
    %cst_27 = arith.constant dense<0.000000e+00> : vector<16x256xf32>
    %56 = tpu.matmul %55, %53, %cst_27 {dimension_numbers = #tpu.dot_dimension_numbers<[1], [0], [0], [1], [0, 0, 1, 1], [], []>} : vector<16x5xf32>, vector<5x256xf32>, vector<16x256xf32> -> vector<16x256xf32>
    %57 = arith.addf %40, %56 : vector<16x256xf32>
    %c242_i32 = arith.constant 242 : i32
    %58 = tpu.dynamic_rotate %1 by %c242_i32 dim 1 : vector<1x256xf32>, i32 -> vector<1x256xf32>
    %c15 = arith.constant 15 : index
    %c0_28 = arith.constant 0 : index
    %59 = vector.load %arg1[%c15, %c0_28] : memref<25x256xf32, #tpu.memory_space<vmem>>, vector<1x256xf32>
    %60 = arith.mulf %58, %59 : vector<1x256xf32>
    %c241_i32 = arith.constant 241 : i32
    %61 = tpu.dynamic_rotate %1 by %c241_i32 dim 1 : vector<1x256xf32>, i32 -> vector<1x256xf32>
    %c16 = arith.constant 16 : index
    %c0_29 = arith.constant 0 : index
    %62 = vector.load %arg1[%c16, %c0_29] : memref<25x256xf32, #tpu.memory_space<vmem>>, vector<1x256xf32>
    %63 = arith.mulf %61, %62 : vector<1x256xf32>
    %c240_i32 = arith.constant 240 : i32
    %64 = tpu.dynamic_rotate %1 by %c240_i32 dim 1 : vector<1x256xf32>, i32 -> vector<1x256xf32>
    %c17 = arith.constant 17 : index
    %c0_30 = arith.constant 0 : index
    %65 = vector.load %arg1[%c17, %c0_30] : memref<25x256xf32, #tpu.memory_space<vmem>>, vector<1x256xf32>
    %66 = arith.mulf %64, %65 : vector<1x256xf32>
    %c239_i32 = arith.constant 239 : i32
    %67 = tpu.dynamic_rotate %1 by %c239_i32 dim 1 : vector<1x256xf32>, i32 -> vector<1x256xf32>
    %c18 = arith.constant 18 : index
    %c0_31 = arith.constant 0 : index
    %68 = vector.load %arg1[%c18, %c0_31] : memref<25x256xf32, #tpu.memory_space<vmem>>, vector<1x256xf32>
    %69 = arith.mulf %67, %68 : vector<1x256xf32>
    %c238_i32 = arith.constant 238 : i32
    %70 = tpu.dynamic_rotate %1 by %c238_i32 dim 1 : vector<1x256xf32>, i32 -> vector<1x256xf32>
    %c19 = arith.constant 19 : index
    %c0_32 = arith.constant 0 : index
    %71 = vector.load %arg1[%c19, %c0_32] : memref<25x256xf32, #tpu.memory_space<vmem>>, vector<1x256xf32>
    %72 = arith.mulf %70, %71 : vector<1x256xf32>
    %73 = tpu.concatenate %60, %63, %66, %69, %72 in 0 : vector<1x256xf32>, vector<1x256xf32>, vector<1x256xf32>, vector<1x256xf32>, vector<1x256xf32> -> vector<5x256xf32>
    %c3_33 = arith.constant 3 : index
    %c0_34 = arith.constant 0 : index
    %c0_35 = arith.constant 0 : index
    %74 = vector.load %arg3[%c3_33, %c0_34, %c0_35] : memref<5x16x5xf32, #tpu.memory_space<vmem>>, vector<1x16x5xf32>
    %75 = vector.shape_cast %74 : vector<1x16x5xf32> to vector<16x5xf32>
    %cst_36 = arith.constant dense<0.000000e+00> : vector<16x256xf32>
    %76 = tpu.matmul %75, %73, %cst_36 {dimension_numbers = #tpu.dot_dimension_numbers<[1], [0], [0], [1], [0, 0, 1, 1], [], []>} : vector<16x5xf32>, vector<5x256xf32>, vector<16x256xf32> -> vector<16x256xf32>
    %77 = arith.addf %57, %76 : vector<16x256xf32>
    %c226_i32 = arith.constant 226 : i32
    %78 = tpu.dynamic_rotate %1 by %c226_i32 dim 1 : vector<1x256xf32>, i32 -> vector<1x256xf32>
    %c20 = arith.constant 20 : index
    %c0_37 = arith.constant 0 : index
    %79 = vector.load %arg1[%c20, %c0_37] : memref<25x256xf32, #tpu.memory_space<vmem>>, vector<1x256xf32>
    %80 = arith.mulf %78, %79 : vector<1x256xf32>
    %c225_i32 = arith.constant 225 : i32
    %81 = tpu.dynamic_rotate %1 by %c225_i32 dim 1 : vector<1x256xf32>, i32 -> vector<1x256xf32>
    %c21 = arith.constant 21 : index
    %c0_38 = arith.constant 0 : index
    %82 = vector.load %arg1[%c21, %c0_38] : memref<25x256xf32, #tpu.memory_space<vmem>>, vector<1x256xf32>
    %83 = arith.mulf %81, %82 : vector<1x256xf32>
    %c224_i32 = arith.constant 224 : i32
    %84 = tpu.dynamic_rotate %1 by %c224_i32 dim 1 : vector<1x256xf32>, i32 -> vector<1x256xf32>
    %c22 = arith.constant 22 : index
    %c0_39 = arith.constant 0 : index
    %85 = vector.load %arg1[%c22, %c0_39] : memref<25x256xf32, #tpu.memory_space<vmem>>, vector<1x256xf32>
    %86 = arith.mulf %84, %85 : vector<1x256xf32>
    %c223_i32 = arith.constant 223 : i32
    %87 = tpu.dynamic_rotate %1 by %c223_i32 dim 1 : vector<1x256xf32>, i32 -> vector<1x256xf32>
    %c23 = arith.constant 23 : index
    %c0_40 = arith.constant 0 : index
    %88 = vector.load %arg1[%c23, %c0_40] : memref<25x256xf32, #tpu.memory_space<vmem>>, vector<1x256xf32>
    %89 = arith.mulf %87, %88 : vector<1x256xf32>
    %c222_i32 = arith.constant 222 : i32
    %90 = tpu.dynamic_rotate %1 by %c222_i32 dim 1 : vector<1x256xf32>, i32 -> vector<1x256xf32>
    %c24 = arith.constant 24 : index
    %c0_41 = arith.constant 0 : index
    %91 = vector.load %arg1[%c24, %c0_41] : memref<25x256xf32, #tpu.memory_space<vmem>>, vector<1x256xf32>
    %92 = arith.mulf %90, %91 : vector<1x256xf32>
    %93 = tpu.concatenate %80, %83, %86, %89, %92 in 0 : vector<1x256xf32>, vector<1x256xf32>, vector<1x256xf32>, vector<1x256xf32>, vector<1x256xf32> -> vector<5x256xf32>
    %c4_42 = arith.constant 4 : index
    %c0_43 = arith.constant 0 : index
    %c0_44 = arith.constant 0 : index
    %94 = vector.load %arg3[%c4_42, %c0_43, %c0_44] : memref<5x16x5xf32, #tpu.memory_space<vmem>>, vector<1x16x5xf32>
    %95 = vector.shape_cast %94 : vector<1x16x5xf32> to vector<16x5xf32>
    %cst_45 = arith.constant dense<0.000000e+00> : vector<16x256xf32>
    %96 = tpu.matmul %95, %93, %cst_45 {dimension_numbers = #tpu.dot_dimension_numbers<[1], [0], [0], [1], [0, 0, 1, 1], [], []>} : vector<16x5xf32>, vector<5x256xf32>, vector<16x256xf32> -> vector<16x256xf32>
    %97 = arith.addf %77, %96 : vector<16x256xf32>
    %c0_46 = arith.constant 0 : index
    %c0_47 = arith.constant 0 : index
    %98 = vector.load %arg4[%c0_46, %c0_47] : memref<16x1xf32, #tpu.memory_space<vmem>>, vector<16x1xf32>
    %99 = vector.broadcast %98 : vector<16x1xf32> to vector<16x256xf32>
    %100 = arith.addf %97, %99 : vector<16x256xf32>
    %cst_48 = arith.constant 0.000000e+00 : f32
    %101 = vector.broadcast %cst_48 : f32 to vector<16x256xf32>
    %102 = arith.maximumf %100, %101 : vector<16x256xf32>
    %c1_i32_49 = arith.constant 1 : i32
    %103 = tpu.dynamic_rotate %102 by %c1_i32_49 dim 1 : vector<16x256xf32>, i32 -> vector<16x256xf32>
    %c11_50 = arith.constant 11 : index
    %c0_51 = arith.constant 0 : index
    %104 = vector.load %arg1[%c11_50, %c0_51] : memref<25x256xf32, #tpu.memory_space<vmem>>, vector<1x256xf32>
    %105 = vector.broadcast %104 : vector<1x256xf32> to vector<16x256xf32>
    %106 = arith.mulf %103, %105 : vector<16x256xf32>
    %c255_i32_52 = arith.constant 255 : i32
    %107 = tpu.dynamic_rotate %102 by %c255_i32_52 dim 1 : vector<16x256xf32>, i32 -> vector<16x256xf32>
    %c13_53 = arith.constant 13 : index
    %c0_54 = arith.constant 0 : index
    %108 = vector.load %arg1[%c13_53, %c0_54] : memref<25x256xf32, #tpu.memory_space<vmem>>, vector<1x256xf32>
    %109 = vector.broadcast %108 : vector<1x256xf32> to vector<16x256xf32>
    %110 = arith.mulf %107, %109 : vector<16x256xf32>
    %111 = arith.maximumf %106, %110 : vector<16x256xf32>
    %112 = arith.maximumf %102, %111 : vector<16x256xf32>
    %c16_i32_55 = arith.constant 16 : i32
    %113 = tpu.dynamic_rotate %112 by %c16_i32_55 dim 1 : vector<16x256xf32>, i32 -> vector<16x256xf32>
    %c7_56 = arith.constant 7 : index
    %c0_57 = arith.constant 0 : index
    %114 = vector.load %arg1[%c7_56, %c0_57] : memref<25x256xf32, #tpu.memory_space<vmem>>, vector<1x256xf32>
    %115 = vector.broadcast %114 : vector<1x256xf32> to vector<16x256xf32>
    %116 = arith.mulf %113, %115 : vector<16x256xf32>
    %c240_i32_58 = arith.constant 240 : i32
    %117 = tpu.dynamic_rotate %112 by %c240_i32_58 dim 1 : vector<16x256xf32>, i32 -> vector<16x256xf32>
    %c17_59 = arith.constant 17 : index
    %c0_60 = arith.constant 0 : index
    %118 = vector.load %arg1[%c17_59, %c0_60] : memref<25x256xf32, #tpu.memory_space<vmem>>, vector<1x256xf32>
    %119 = vector.broadcast %118 : vector<1x256xf32> to vector<16x256xf32>
    %120 = arith.mulf %117, %119 : vector<16x256xf32>
    %121 = arith.maximumf %116, %120 : vector<16x256xf32>
    %122 = arith.maximumf %112, %121 : vector<16x256xf32>
    %c34_i32_61 = arith.constant 34 : i32
    %123 = tpu.dynamic_rotate %122 by %c34_i32_61 dim 1 : vector<16x256xf32>, i32 -> vector<16x256xf32>
    %c0_62 = arith.constant 0 : index
    %c0_63 = arith.constant 0 : index
    %124 = vector.load %arg1[%c0_62, %c0_63] : memref<25x256xf32, #tpu.memory_space<vmem>>, vector<1x256xf32>
    %125 = vector.broadcast %124 : vector<1x256xf32> to vector<16x256xf32>
    %126 = arith.mulf %123, %125 : vector<16x256xf32>
    %c33_i32_64 = arith.constant 33 : i32
    %127 = tpu.dynamic_rotate %122 by %c33_i32_64 dim 1 : vector<16x256xf32>, i32 -> vector<16x256xf32>
    %c1_65 = arith.constant 1 : index
    %c0_66 = arith.constant 0 : index
    %128 = vector.load %arg1[%c1_65, %c0_66] : memref<25x256xf32, #tpu.memory_space<vmem>>, vector<1x256xf32>
    %129 = vector.broadcast %128 : vector<1x256xf32> to vector<16x256xf32>
    %130 = arith.mulf %127, %129 : vector<16x256xf32>
    %c32_i32_67 = arith.constant 32 : i32
    %131 = tpu.dynamic_rotate %122 by %c32_i32_67 dim 1 : vector<16x256xf32>, i32 -> vector<16x256xf32>
    %c2_68 = arith.constant 2 : index
    %c0_69 = arith.constant 0 : index
    %132 = vector.load %arg1[%c2_68, %c0_69] : memref<25x256xf32, #tpu.memory_space<vmem>>, vector<1x256xf32>
    %133 = vector.broadcast %132 : vector<1x256xf32> to vector<16x256xf32>
    %134 = arith.mulf %131, %133 : vector<16x256xf32>
    %c31_i32_70 = arith.constant 31 : i32
    %135 = tpu.dynamic_rotate %122 by %c31_i32_70 dim 1 : vector<16x256xf32>, i32 -> vector<16x256xf32>
    %c3_71 = arith.constant 3 : index
    %c0_72 = arith.constant 0 : index
    %136 = vector.load %arg1[%c3_71, %c0_72] : memref<25x256xf32, #tpu.memory_space<vmem>>, vector<1x256xf32>
    %137 = vector.broadcast %136 : vector<1x256xf32> to vector<16x256xf32>
    %138 = arith.mulf %135, %137 : vector<16x256xf32>
    %c30_i32_73 = arith.constant 30 : i32
    %139 = tpu.dynamic_rotate %122 by %c30_i32_73 dim 1 : vector<16x256xf32>, i32 -> vector<16x256xf32>
    %c4_74 = arith.constant 4 : index
    %c0_75 = arith.constant 0 : index
    %140 = vector.load %arg1[%c4_74, %c0_75] : memref<25x256xf32, #tpu.memory_space<vmem>>, vector<1x256xf32>
    %141 = vector.broadcast %140 : vector<1x256xf32> to vector<16x256xf32>
    %142 = arith.mulf %139, %141 : vector<16x256xf32>
    %143 = tpu.concatenate %126, %130, %134, %138, %142 in 0 : vector<16x256xf32>, vector<16x256xf32>, vector<16x256xf32>, vector<16x256xf32>, vector<16x256xf32> -> vector<80x256xf32>
    %c0_76 = arith.constant 0 : index
    %c0_77 = arith.constant 0 : index
    %c0_78 = arith.constant 0 : index
    %144 = vector.load %arg5[%c0_76, %c0_77, %c0_78] : memref<5x32x80xf32, #tpu.memory_space<vmem>>, vector<1x32x80xf32>
    %145 = vector.shape_cast %144 : vector<1x32x80xf32> to vector<32x80xf32>
    %cst_79 = arith.constant dense<0.000000e+00> : vector<32x256xf32>
    %146 = tpu.matmul %145, %143, %cst_79 {dimension_numbers = #tpu.dot_dimension_numbers<[1], [0], [0], [1], [0, 0, 1, 1], [], []>} : vector<32x80xf32>, vector<80x256xf32>, vector<32x256xf32> -> vector<32x256xf32>
    %c18_i32_80 = arith.constant 18 : i32
    %147 = tpu.dynamic_rotate %122 by %c18_i32_80 dim 1 : vector<16x256xf32>, i32 -> vector<16x256xf32>
    %c5_81 = arith.constant 5 : index
    %c0_82 = arith.constant 0 : index
    %148 = vector.load %arg1[%c5_81, %c0_82] : memref<25x256xf32, #tpu.memory_space<vmem>>, vector<1x256xf32>
    %149 = vector.broadcast %148 : vector<1x256xf32> to vector<16x256xf32>
    %150 = arith.mulf %147, %149 : vector<16x256xf32>
    %c17_i32_83 = arith.constant 17 : i32
    %151 = tpu.dynamic_rotate %122 by %c17_i32_83 dim 1 : vector<16x256xf32>, i32 -> vector<16x256xf32>
    %c6_84 = arith.constant 6 : index
    %c0_85 = arith.constant 0 : index
    %152 = vector.load %arg1[%c6_84, %c0_85] : memref<25x256xf32, #tpu.memory_space<vmem>>, vector<1x256xf32>
    %153 = vector.broadcast %152 : vector<1x256xf32> to vector<16x256xf32>
    %154 = arith.mulf %151, %153 : vector<16x256xf32>
    %c16_i32_86 = arith.constant 16 : i32
    %155 = tpu.dynamic_rotate %122 by %c16_i32_86 dim 1 : vector<16x256xf32>, i32 -> vector<16x256xf32>
    %c7_87 = arith.constant 7 : index
    %c0_88 = arith.constant 0 : index
    %156 = vector.load %arg1[%c7_87, %c0_88] : memref<25x256xf32, #tpu.memory_space<vmem>>, vector<1x256xf32>
    %157 = vector.broadcast %156 : vector<1x256xf32> to vector<16x256xf32>
    %158 = arith.mulf %155, %157 : vector<16x256xf32>
    %c15_i32_89 = arith.constant 15 : i32
    %159 = tpu.dynamic_rotate %122 by %c15_i32_89 dim 1 : vector<16x256xf32>, i32 -> vector<16x256xf32>
    %c8_90 = arith.constant 8 : index
    %c0_91 = arith.constant 0 : index
    %160 = vector.load %arg1[%c8_90, %c0_91] : memref<25x256xf32, #tpu.memory_space<vmem>>, vector<1x256xf32>
    %161 = vector.broadcast %160 : vector<1x256xf32> to vector<16x256xf32>
    %162 = arith.mulf %159, %161 : vector<16x256xf32>
    %c14_i32_92 = arith.constant 14 : i32
    %163 = tpu.dynamic_rotate %122 by %c14_i32_92 dim 1 : vector<16x256xf32>, i32 -> vector<16x256xf32>
    %c9_93 = arith.constant 9 : index
    %c0_94 = arith.constant 0 : index
    %164 = vector.load %arg1[%c9_93, %c0_94] : memref<25x256xf32, #tpu.memory_space<vmem>>, vector<1x256xf32>
    %165 = vector.broadcast %164 : vector<1x256xf32> to vector<16x256xf32>
    %166 = arith.mulf %163, %165 : vector<16x256xf32>
    %167 = tpu.concatenate %150, %154, %158, %162, %166 in 0 : vector<16x256xf32>, vector<16x256xf32>, vector<16x256xf32>, vector<16x256xf32>, vector<16x256xf32> -> vector<80x256xf32>
    %c1_95 = arith.constant 1 : index
    %c0_96 = arith.constant 0 : index
    %c0_97 = arith.constant 0 : index
    %168 = vector.load %arg5[%c1_95, %c0_96, %c0_97] : memref<5x32x80xf32, #tpu.memory_space<vmem>>, vector<1x32x80xf32>
    %169 = vector.shape_cast %168 : vector<1x32x80xf32> to vector<32x80xf32>
    %cst_98 = arith.constant dense<0.000000e+00> : vector<32x256xf32>
    %170 = tpu.matmul %169, %167, %cst_98 {dimension_numbers = #tpu.dot_dimension_numbers<[1], [0], [0], [1], [0, 0, 1, 1], [], []>} : vector<32x80xf32>, vector<80x256xf32>, vector<32x256xf32> -> vector<32x256xf32>
    %171 = arith.addf %146, %170 : vector<32x256xf32>
    %c2_i32_99 = arith.constant 2 : i32
    %172 = tpu.dynamic_rotate %122 by %c2_i32_99 dim 1 : vector<16x256xf32>, i32 -> vector<16x256xf32>
    %c10_100 = arith.constant 10 : index
    %c0_101 = arith.constant 0 : index
    %173 = vector.load %arg1[%c10_100, %c0_101] : memref<25x256xf32, #tpu.memory_space<vmem>>, vector<1x256xf32>
    %174 = vector.broadcast %173 : vector<1x256xf32> to vector<16x256xf32>
    %175 = arith.mulf %172, %174 : vector<16x256xf32>
    %c1_i32_102 = arith.constant 1 : i32
    %176 = tpu.dynamic_rotate %122 by %c1_i32_102 dim 1 : vector<16x256xf32>, i32 -> vector<16x256xf32>
    %c11_103 = arith.constant 11 : index
    %c0_104 = arith.constant 0 : index
    %177 = vector.load %arg1[%c11_103, %c0_104] : memref<25x256xf32, #tpu.memory_space<vmem>>, vector<1x256xf32>
    %178 = vector.broadcast %177 : vector<1x256xf32> to vector<16x256xf32>
    %179 = arith.mulf %176, %178 : vector<16x256xf32>
    %c255_i32_105 = arith.constant 255 : i32
    %180 = tpu.dynamic_rotate %122 by %c255_i32_105 dim 1 : vector<16x256xf32>, i32 -> vector<16x256xf32>
    %c13_106 = arith.constant 13 : index
    %c0_107 = arith.constant 0 : index
    %181 = vector.load %arg1[%c13_106, %c0_107] : memref<25x256xf32, #tpu.memory_space<vmem>>, vector<1x256xf32>
    %182 = vector.broadcast %181 : vector<1x256xf32> to vector<16x256xf32>
    %183 = arith.mulf %180, %182 : vector<16x256xf32>
    %c254_i32_108 = arith.constant 254 : i32
    %184 = tpu.dynamic_rotate %122 by %c254_i32_108 dim 1 : vector<16x256xf32>, i32 -> vector<16x256xf32>
    %c14_109 = arith.constant 14 : index
    %c0_110 = arith.constant 0 : index
    %185 = vector.load %arg1[%c14_109, %c0_110] : memref<25x256xf32, #tpu.memory_space<vmem>>, vector<1x256xf32>
    %186 = vector.broadcast %185 : vector<1x256xf32> to vector<16x256xf32>
    %187 = arith.mulf %184, %186 : vector<16x256xf32>
    %188 = tpu.concatenate %175, %179, %122, %183, %187 in 0 : vector<16x256xf32>, vector<16x256xf32>, vector<16x256xf32>, vector<16x256xf32>, vector<16x256xf32> -> vector<80x256xf32>
    %c2_111 = arith.constant 2 : index
    %c0_112 = arith.constant 0 : index
    %c0_113 = arith.constant 0 : index
    %189 = vector.load %arg5[%c2_111, %c0_112, %c0_113] : memref<5x32x80xf32, #tpu.memory_space<vmem>>, vector<1x32x80xf32>
    %190 = vector.shape_cast %189 : vector<1x32x80xf32> to vector<32x80xf32>
    %cst_114 = arith.constant dense<0.000000e+00> : vector<32x256xf32>
    %191 = tpu.matmul %190, %188, %cst_114 {dimension_numbers = #tpu.dot_dimension_numbers<[1], [0], [0], [1], [0, 0, 1, 1], [], []>} : vector<32x80xf32>, vector<80x256xf32>, vector<32x256xf32> -> vector<32x256xf32>
    %192 = arith.addf %171, %191 : vector<32x256xf32>
    %c242_i32_115 = arith.constant 242 : i32
    %193 = tpu.dynamic_rotate %122 by %c242_i32_115 dim 1 : vector<16x256xf32>, i32 -> vector<16x256xf32>
    %c15_116 = arith.constant 15 : index
    %c0_117 = arith.constant 0 : index
    %194 = vector.load %arg1[%c15_116, %c0_117] : memref<25x256xf32, #tpu.memory_space<vmem>>, vector<1x256xf32>
    %195 = vector.broadcast %194 : vector<1x256xf32> to vector<16x256xf32>
    %196 = arith.mulf %193, %195 : vector<16x256xf32>
    %c241_i32_118 = arith.constant 241 : i32
    %197 = tpu.dynamic_rotate %122 by %c241_i32_118 dim 1 : vector<16x256xf32>, i32 -> vector<16x256xf32>
    %c16_119 = arith.constant 16 : index
    %c0_120 = arith.constant 0 : index
    %198 = vector.load %arg1[%c16_119, %c0_120] : memref<25x256xf32, #tpu.memory_space<vmem>>, vector<1x256xf32>
    %199 = vector.broadcast %198 : vector<1x256xf32> to vector<16x256xf32>
    %200 = arith.mulf %197, %199 : vector<16x256xf32>
    %c240_i32_121 = arith.constant 240 : i32
    %201 = tpu.dynamic_rotate %122 by %c240_i32_121 dim 1 : vector<16x256xf32>, i32 -> vector<16x256xf32>
    %c17_122 = arith.constant 17 : index
    %c0_123 = arith.constant 0 : index
    %202 = vector.load %arg1[%c17_122, %c0_123] : memref<25x256xf32, #tpu.memory_space<vmem>>, vector<1x256xf32>
    %203 = vector.broadcast %202 : vector<1x256xf32> to vector<16x256xf32>
    %204 = arith.mulf %201, %203 : vector<16x256xf32>
    %c239_i32_124 = arith.constant 239 : i32
    %205 = tpu.dynamic_rotate %122 by %c239_i32_124 dim 1 : vector<16x256xf32>, i32 -> vector<16x256xf32>
    %c18_125 = arith.constant 18 : index
    %c0_126 = arith.constant 0 : index
    %206 = vector.load %arg1[%c18_125, %c0_126] : memref<25x256xf32, #tpu.memory_space<vmem>>, vector<1x256xf32>
    %207 = vector.broadcast %206 : vector<1x256xf32> to vector<16x256xf32>
    %208 = arith.mulf %205, %207 : vector<16x256xf32>
    %c238_i32_127 = arith.constant 238 : i32
    %209 = tpu.dynamic_rotate %122 by %c238_i32_127 dim 1 : vector<16x256xf32>, i32 -> vector<16x256xf32>
    %c19_128 = arith.constant 19 : index
    %c0_129 = arith.constant 0 : index
    %210 = vector.load %arg1[%c19_128, %c0_129] : memref<25x256xf32, #tpu.memory_space<vmem>>, vector<1x256xf32>
    %211 = vector.broadcast %210 : vector<1x256xf32> to vector<16x256xf32>
    %212 = arith.mulf %209, %211 : vector<16x256xf32>
    %213 = tpu.concatenate %196, %200, %204, %208, %212 in 0 : vector<16x256xf32>, vector<16x256xf32>, vector<16x256xf32>, vector<16x256xf32>, vector<16x256xf32> -> vector<80x256xf32>
    %c3_130 = arith.constant 3 : index
    %c0_131 = arith.constant 0 : index
    %c0_132 = arith.constant 0 : index
    %214 = vector.load %arg5[%c3_130, %c0_131, %c0_132] : memref<5x32x80xf32, #tpu.memory_space<vmem>>, vector<1x32x80xf32>
    %215 = vector.shape_cast %214 : vector<1x32x80xf32> to vector<32x80xf32>
    %cst_133 = arith.constant dense<0.000000e+00> : vector<32x256xf32>
    %216 = tpu.matmul %215, %213, %cst_133 {dimension_numbers = #tpu.dot_dimension_numbers<[1], [0], [0], [1], [0, 0, 1, 1], [], []>} : vector<32x80xf32>, vector<80x256xf32>, vector<32x256xf32> -> vector<32x256xf32>
    %217 = arith.addf %192, %216 : vector<32x256xf32>
    %c226_i32_134 = arith.constant 226 : i32
    %218 = tpu.dynamic_rotate %122 by %c226_i32_134 dim 1 : vector<16x256xf32>, i32 -> vector<16x256xf32>
    %c20_135 = arith.constant 20 : index
    %c0_136 = arith.constant 0 : index
    %219 = vector.load %arg1[%c20_135, %c0_136] : memref<25x256xf32, #tpu.memory_space<vmem>>, vector<1x256xf32>
    %220 = vector.broadcast %219 : vector<1x256xf32> to vector<16x256xf32>
    %221 = arith.mulf %218, %220 : vector<16x256xf32>
    %c225_i32_137 = arith.constant 225 : i32
    %222 = tpu.dynamic_rotate %122 by %c225_i32_137 dim 1 : vector<16x256xf32>, i32 -> vector<16x256xf32>
    %c21_138 = arith.constant 21 : index
    %c0_139 = arith.constant 0 : index
    %223 = vector.load %arg1[%c21_138, %c0_139] : memref<25x256xf32, #tpu.memory_space<vmem>>, vector<1x256xf32>
    %224 = vector.broadcast %223 : vector<1x256xf32> to vector<16x256xf32>
    %225 = arith.mulf %222, %224 : vector<16x256xf32>
    %c224_i32_140 = arith.constant 224 : i32
    %226 = tpu.dynamic_rotate %122 by %c224_i32_140 dim 1 : vector<16x256xf32>, i32 -> vector<16x256xf32>
    %c22_141 = arith.constant 22 : index
    %c0_142 = arith.constant 0 : index
    %227 = vector.load %arg1[%c22_141, %c0_142] : memref<25x256xf32, #tpu.memory_space<vmem>>, vector<1x256xf32>
    %228 = vector.broadcast %227 : vector<1x256xf32> to vector<16x256xf32>
    %229 = arith.mulf %226, %228 : vector<16x256xf32>
    %c223_i32_143 = arith.constant 223 : i32
    %230 = tpu.dynamic_rotate %122 by %c223_i32_143 dim 1 : vector<16x256xf32>, i32 -> vector<16x256xf32>
    %c23_144 = arith.constant 23 : index
    %c0_145 = arith.constant 0 : index
    %231 = vector.load %arg1[%c23_144, %c0_145] : memref<25x256xf32, #tpu.memory_space<vmem>>, vector<1x256xf32>
    %232 = vector.broadcast %231 : vector<1x256xf32> to vector<16x256xf32>
    %233 = arith.mulf %230, %232 : vector<16x256xf32>
    %c222_i32_146 = arith.constant 222 : i32
    %234 = tpu.dynamic_rotate %122 by %c222_i32_146 dim 1 : vector<16x256xf32>, i32 -> vector<16x256xf32>
    %c24_147 = arith.constant 24 : index
    %c0_148 = arith.constant 0 : index
    %235 = vector.load %arg1[%c24_147, %c0_148] : memref<25x256xf32, #tpu.memory_space<vmem>>, vector<1x256xf32>
    %236 = vector.broadcast %235 : vector<1x256xf32> to vector<16x256xf32>
    %237 = arith.mulf %234, %236 : vector<16x256xf32>
    %238 = tpu.concatenate %221, %225, %229, %233, %237 in 0 : vector<16x256xf32>, vector<16x256xf32>, vector<16x256xf32>, vector<16x256xf32>, vector<16x256xf32> -> vector<80x256xf32>
    %c4_149 = arith.constant 4 : index
    %c0_150 = arith.constant 0 : index
    %c0_151 = arith.constant 0 : index
    %239 = vector.load %arg5[%c4_149, %c0_150, %c0_151] : memref<5x32x80xf32, #tpu.memory_space<vmem>>, vector<1x32x80xf32>
    %240 = vector.shape_cast %239 : vector<1x32x80xf32> to vector<32x80xf32>
    %cst_152 = arith.constant dense<0.000000e+00> : vector<32x256xf32>
    %241 = tpu.matmul %240, %238, %cst_152 {dimension_numbers = #tpu.dot_dimension_numbers<[1], [0], [0], [1], [0, 0, 1, 1], [], []>} : vector<32x80xf32>, vector<80x256xf32>, vector<32x256xf32> -> vector<32x256xf32>
    %242 = arith.addf %217, %241 : vector<32x256xf32>
    %c0_153 = arith.constant 0 : index
    %c0_154 = arith.constant 0 : index
    %243 = vector.load %arg6[%c0_153, %c0_154] : memref<32x1xf32, #tpu.memory_space<vmem>>, vector<32x1xf32>
    %244 = vector.broadcast %243 : vector<32x1xf32> to vector<32x256xf32>
    %245 = arith.addf %242, %244 : vector<32x256xf32>
    %cst_155 = arith.constant 0.000000e+00 : f32
    %246 = vector.broadcast %cst_155 : f32 to vector<32x256xf32>
    %247 = arith.maximumf %245, %246 : vector<32x256xf32>
    %c1_i32_156 = arith.constant 1 : i32
    %248 = tpu.dynamic_rotate %247 by %c1_i32_156 dim 1 : vector<32x256xf32>, i32 -> vector<32x256xf32>
    %c11_157 = arith.constant 11 : index
    %c0_158 = arith.constant 0 : index
    %249 = vector.load %arg1[%c11_157, %c0_158] : memref<25x256xf32, #tpu.memory_space<vmem>>, vector<1x256xf32>
    %250 = vector.broadcast %249 : vector<1x256xf32> to vector<32x256xf32>
    %251 = arith.mulf %248, %250 : vector<32x256xf32>
    %c255_i32_159 = arith.constant 255 : i32
    %252 = tpu.dynamic_rotate %247 by %c255_i32_159 dim 1 : vector<32x256xf32>, i32 -> vector<32x256xf32>
    %c13_160 = arith.constant 13 : index
    %c0_161 = arith.constant 0 : index
    %253 = vector.load %arg1[%c13_160, %c0_161] : memref<25x256xf32, #tpu.memory_space<vmem>>, vector<1x256xf32>
    %254 = vector.broadcast %253 : vector<1x256xf32> to vector<32x256xf32>
    %255 = arith.mulf %252, %254 : vector<32x256xf32>
    %256 = arith.maximumf %251, %255 : vector<32x256xf32>
    %257 = arith.maximumf %247, %256 : vector<32x256xf32>
    %c16_i32_162 = arith.constant 16 : i32
    %258 = tpu.dynamic_rotate %257 by %c16_i32_162 dim 1 : vector<32x256xf32>, i32 -> vector<32x256xf32>
    %c7_163 = arith.constant 7 : index
    %c0_164 = arith.constant 0 : index
    %259 = vector.load %arg1[%c7_163, %c0_164] : memref<25x256xf32, #tpu.memory_space<vmem>>, vector<1x256xf32>
    %260 = vector.broadcast %259 : vector<1x256xf32> to vector<32x256xf32>
    %261 = arith.mulf %258, %260 : vector<32x256xf32>
    %c240_i32_165 = arith.constant 240 : i32
    %262 = tpu.dynamic_rotate %257 by %c240_i32_165 dim 1 : vector<32x256xf32>, i32 -> vector<32x256xf32>
    %c17_166 = arith.constant 17 : index
    %c0_167 = arith.constant 0 : index
    %263 = vector.load %arg1[%c17_166, %c0_167] : memref<25x256xf32, #tpu.memory_space<vmem>>, vector<1x256xf32>
    %264 = vector.broadcast %263 : vector<1x256xf32> to vector<32x256xf32>
    %265 = arith.mulf %262, %264 : vector<32x256xf32>
    %266 = arith.maximumf %261, %265 : vector<32x256xf32>
    %267 = arith.maximumf %257, %266 : vector<32x256xf32>
    %c0_168 = arith.constant 0 : index
    %c0_169 = arith.constant 0 : index
    %c0_170 = arith.constant 0 : index
    %268 = vector.load %arg7[%c0_168, %c0_169, %c0_170] : memref<1x32x256xf32, #tpu.memory_space<vmem>>, vector<1x32x256xf32>
    %269 = vector.shape_cast %268 : vector<1x32x256xf32> to vector<32x256xf32>
    %270 = vector.shape_cast %267 : vector<32x256xf32> to vector<1x32x256xf32>
    tpu.vector_store %arg7[%c0_168, %c0_169, %c0_170], %270 {strides = array<i32>} : memref<1x32x256xf32, #tpu.memory_space<vmem>>, vector<1x32x256xf32>,
    return
  }
  func.func @transform_0(%arg0: i32) -> (i32, i32) {
    %c0_i32 = arith.constant 0 : i32
    %c0_i32_0 = arith.constant 0 : i32
    %c0_i32_1 = arith.constant 0 : i32
    return %c0_i32, %c0_i32_0 : i32, i32
  }
  func.func @transform_1(%arg0: i32) -> (i32, i32, i32) {
    %c0_i32 = arith.constant 0 : i32
    %c0_i32_0 = arith.constant 0 : i32
    %c0_i32_1 = arith.constant 0 : i32
    return %arg0, %c0_i32, %c0_i32_0 : i32, i32, i32
  }
  func.func @transform_2(%arg0: i32) -> (i32, i32, i32) {
    %c0_i32 = arith.constant 0 : i32
    %c0_i32_0 = arith.constant 0 : i32
    %c0_i32_1 = arith.constant 0 : i32
    %c0_i32_2 = arith.constant 0 : i32
    return %c0_i32, %c0_i32_0, %c0_i32_1 : i32, i32, i32
  }
  func.func @transform_3(%arg0: i32) -> (i32, i32) {
    %c0_i32 = arith.constant 0 : i32
    %c0_i32_0 = arith.constant 0 : i32
    %c0_i32_1 = arith.constant 0 : i32
    return %c0_i32, %c0_i32_0 : i32, i32
  }
  func.func @transform_4(%arg0: i32) -> (i32, i32, i32) {
    %c0_i32 = arith.constant 0 : i32
    %c0_i32_0 = arith.constant 0 : i32
    %c0_i32_1 = arith.constant 0 : i32
    %c0_i32_2 = arith.constant 0 : i32
    return %c0_i32, %c0_i32_0, %c0_i32_1 : i32, i32, i32
  }
  func.func @transform_5(%arg0: i32) -> (i32, i32) {
    %c0_i32 = arith.constant 0 : i32
    %c0_i32_0 = arith.constant 0 : i32
    %c0_i32_1 = arith.constant 0 : i32
    return %c0_i32, %c0_i32_0 : i32, i32
  }
  func.func @transform_6(%arg0: i32) -> (i32, i32, i32) {
    %c0_i32 = arith.constant 0 : i32
    %c0_i32_0 = arith.constant 0 : i32
    %c0_i32_1 = arith.constant 0 : i32
    return %arg0, %c0_i32, %c0_i32_0 : i32, i32, i32
  }
}

module attributes {stable_mosaic.version = 11 : i64} {
  func.func @kernel(%arg0: i32, %arg1: memref<25x256xf32, #tpu.memory_space<vmem>>, %arg2: memref<1x1x256xf32, #tpu.memory_space<vmem>>, %arg3: memref<5x16x5xf32, #tpu.memory_space<vmem>>, %arg4: memref<16x1xf32, #tpu.memory_space<vmem>>, %arg5: memref<5x32x80xf32, #tpu.memory_space<vmem>>, %arg6: memref<32x1xf32, #tpu.memory_space<vmem>>, %arg7: memref<1x32x256xf32, #tpu.memory_space<vmem>>) attributes {dimension_semantics = [#tpu.dimension_semantics<parallel>], iteration_bounds = array<i64: 2>, scalar_prefetch = 0 : i64, scratch_operands = 0 : i64, tpu.core_type = #tpu.core_type<tc>, window_params = [{pipeline_mode = #tpu.pipeline_mode<synchronous>, transform_indices = @transform_0, window_bounds = array<i64: 25, 256>}, {transform_indices = @transform_1, window_bounds = array<i64: 1, 1, 256>}, {pipeline_mode = #tpu.pipeline_mode<synchronous>, transform_indices = @transform_2, window_bounds = array<i64: 5, 16, 5>}, {pipeline_mode = #tpu.pipeline_mode<synchronous>, transform_indices = @transform_3, window_bounds = array<i64: 16, 1>}, {pipeline_mode = #tpu.pipeline_mode<synchronous>, transform_indices = @transform_4, window_bounds = array<i64: 5, 32, 80>}, {pipeline_mode = #tpu.pipeline_mode<synchronous>, transform_indices = @transform_5, window_bounds = array<i64: 32, 1>}, {transform_indices = @transform_6, window_bounds = array<i64: 1, 32, 256>}]} {
    %c0 = arith.constant 0 : index
    %c0_0 = arith.constant 0 : index
    %c0_1 = arith.constant 0 : index
    %0 = vector.load %arg2[%c0, %c0_0, %c0_1] : memref<1x1x256xf32, #tpu.memory_space<vmem>>, vector<1x1x256xf32>
    %1 = vector.shape_cast %0 : vector<1x1x256xf32> to vector<1x256xf32>
    %2 = vector.extract_strided_slice %1 {offsets = [0, 222], sizes = [1, 34], strides = [1, 1]} : vector<1x256xf32> to vector<1x34xf32>
    %3 = vector.extract_strided_slice %1 {offsets = [0, 0], sizes = [1, 222], strides = [1, 1]} : vector<1x256xf32> to vector<1x222xf32>
    %4 = tpu.concatenate %2, %3 in 1 : vector<1x34xf32>, vector<1x222xf32> -> vector<1x256xf32>
    %c0_2 = arith.constant 0 : index
    %c0_3 = arith.constant 0 : index
    %5 = vector.load %arg1[%c0_2, %c0_3] : memref<25x256xf32, #tpu.memory_space<vmem>>, vector<1x256xf32>
    %6 = arith.mulf %4, %5 : vector<1x256xf32>
    %7 = vector.extract_strided_slice %1 {offsets = [0, 223], sizes = [1, 33], strides = [1, 1]} : vector<1x256xf32> to vector<1x33xf32>
    %8 = vector.extract_strided_slice %1 {offsets = [0, 0], sizes = [1, 223], strides = [1, 1]} : vector<1x256xf32> to vector<1x223xf32>
    %9 = tpu.concatenate %7, %8 in 1 : vector<1x33xf32>, vector<1x223xf32> -> vector<1x256xf32>
    %c1 = arith.constant 1 : index
    %c0_4 = arith.constant 0 : index
    %10 = vector.load %arg1[%c1, %c0_4] : memref<25x256xf32, #tpu.memory_space<vmem>>, vector<1x256xf32>
    %11 = arith.mulf %9, %10 : vector<1x256xf32>
    %12 = vector.extract_strided_slice %1 {offsets = [0, 224], sizes = [1, 32], strides = [1, 1]} : vector<1x256xf32> to vector<1x32xf32>
    %13 = vector.extract_strided_slice %1 {offsets = [0, 0], sizes = [1, 224], strides = [1, 1]} : vector<1x256xf32> to vector<1x224xf32>
    %14 = tpu.concatenate %12, %13 in 1 : vector<1x32xf32>, vector<1x224xf32> -> vector<1x256xf32>
    %c2 = arith.constant 2 : index
    %c0_5 = arith.constant 0 : index
    %15 = vector.load %arg1[%c2, %c0_5] : memref<25x256xf32, #tpu.memory_space<vmem>>, vector<1x256xf32>
    %16 = arith.mulf %14, %15 : vector<1x256xf32>
    %17 = vector.extract_strided_slice %1 {offsets = [0, 225], sizes = [1, 31], strides = [1, 1]} : vector<1x256xf32> to vector<1x31xf32>
    %18 = vector.extract_strided_slice %1 {offsets = [0, 0], sizes = [1, 225], strides = [1, 1]} : vector<1x256xf32> to vector<1x225xf32>
    %19 = tpu.concatenate %17, %18 in 1 : vector<1x31xf32>, vector<1x225xf32> -> vector<1x256xf32>
    %c3 = arith.constant 3 : index
    %c0_6 = arith.constant 0 : index
    %20 = vector.load %arg1[%c3, %c0_6] : memref<25x256xf32, #tpu.memory_space<vmem>>, vector<1x256xf32>
    %21 = arith.mulf %19, %20 : vector<1x256xf32>
    %22 = vector.extract_strided_slice %1 {offsets = [0, 226], sizes = [1, 30], strides = [1, 1]} : vector<1x256xf32> to vector<1x30xf32>
    %23 = vector.extract_strided_slice %1 {offsets = [0, 0], sizes = [1, 226], strides = [1, 1]} : vector<1x256xf32> to vector<1x226xf32>
    %24 = tpu.concatenate %22, %23 in 1 : vector<1x30xf32>, vector<1x226xf32> -> vector<1x256xf32>
    %c4 = arith.constant 4 : index
    %c0_7 = arith.constant 0 : index
    %25 = vector.load %arg1[%c4, %c0_7] : memref<25x256xf32, #tpu.memory_space<vmem>>, vector<1x256xf32>
    %26 = arith.mulf %24, %25 : vector<1x256xf32>
    %27 = tpu.concatenate %6, %11, %16, %21, %26 in 0 : vector<1x256xf32>, vector<1x256xf32>, vector<1x256xf32>, vector<1x256xf32>, vector<1x256xf32> -> vector<5x256xf32>
    %c0_8 = arith.constant 0 : index
    %c0_9 = arith.constant 0 : index
    %c0_10 = arith.constant 0 : index
    %28 = vector.load %arg3[%c0_8, %c0_9, %c0_10] : memref<5x16x5xf32, #tpu.memory_space<vmem>>, vector<1x16x5xf32>
    %29 = vector.shape_cast %28 : vector<1x16x5xf32> to vector<16x5xf32>
    %cst = arith.constant dense<0.000000e+00> : vector<16x256xf32>
    %30 = tpu.matmul %29, %27, %cst {dimension_numbers = #tpu.dot_dimension_numbers<[1], [0], [0], [1], [0, 0, 1, 1], [], []>} : vector<16x5xf32>, vector<5x256xf32>, vector<16x256xf32> -> vector<16x256xf32>
    %31 = vector.extract_strided_slice %1 {offsets = [0, 238], sizes = [1, 18], strides = [1, 1]} : vector<1x256xf32> to vector<1x18xf32>
    %32 = vector.extract_strided_slice %1 {offsets = [0, 0], sizes = [1, 238], strides = [1, 1]} : vector<1x256xf32> to vector<1x238xf32>
    %33 = tpu.concatenate %31, %32 in 1 : vector<1x18xf32>, vector<1x238xf32> -> vector<1x256xf32>
    %c5 = arith.constant 5 : index
    %c0_11 = arith.constant 0 : index
    %34 = vector.load %arg1[%c5, %c0_11] : memref<25x256xf32, #tpu.memory_space<vmem>>, vector<1x256xf32>
    %35 = arith.mulf %33, %34 : vector<1x256xf32>
    %36 = vector.extract_strided_slice %1 {offsets = [0, 239], sizes = [1, 17], strides = [1, 1]} : vector<1x256xf32> to vector<1x17xf32>
    %37 = vector.extract_strided_slice %1 {offsets = [0, 0], sizes = [1, 239], strides = [1, 1]} : vector<1x256xf32> to vector<1x239xf32>
    %38 = tpu.concatenate %36, %37 in 1 : vector<1x17xf32>, vector<1x239xf32> -> vector<1x256xf32>
    %c6 = arith.constant 6 : index
    %c0_12 = arith.constant 0 : index
    %39 = vector.load %arg1[%c6, %c0_12] : memref<25x256xf32, #tpu.memory_space<vmem>>, vector<1x256xf32>
    %40 = arith.mulf %38, %39 : vector<1x256xf32>
    %41 = vector.extract_strided_slice %1 {offsets = [0, 240], sizes = [1, 16], strides = [1, 1]} : vector<1x256xf32> to vector<1x16xf32>
    %42 = vector.extract_strided_slice %1 {offsets = [0, 0], sizes = [1, 240], strides = [1, 1]} : vector<1x256xf32> to vector<1x240xf32>
    %43 = tpu.concatenate %41, %42 in 1 : vector<1x16xf32>, vector<1x240xf32> -> vector<1x256xf32>
    %c7 = arith.constant 7 : index
    %c0_13 = arith.constant 0 : index
    %44 = vector.load %arg1[%c7, %c0_13] : memref<25x256xf32, #tpu.memory_space<vmem>>, vector<1x256xf32>
    %45 = arith.mulf %43, %44 : vector<1x256xf32>
    %46 = vector.extract_strided_slice %1 {offsets = [0, 241], sizes = [1, 15], strides = [1, 1]} : vector<1x256xf32> to vector<1x15xf32>
    %47 = vector.extract_strided_slice %1 {offsets = [0, 0], sizes = [1, 241], strides = [1, 1]} : vector<1x256xf32> to vector<1x241xf32>
    %48 = tpu.concatenate %46, %47 in 1 : vector<1x15xf32>, vector<1x241xf32> -> vector<1x256xf32>
    %c8 = arith.constant 8 : index
    %c0_14 = arith.constant 0 : index
    %49 = vector.load %arg1[%c8, %c0_14] : memref<25x256xf32, #tpu.memory_space<vmem>>, vector<1x256xf32>
    %50 = arith.mulf %48, %49 : vector<1x256xf32>
    %51 = vector.extract_strided_slice %1 {offsets = [0, 242], sizes = [1, 14], strides = [1, 1]} : vector<1x256xf32> to vector<1x14xf32>
    %52 = vector.extract_strided_slice %1 {offsets = [0, 0], sizes = [1, 242], strides = [1, 1]} : vector<1x256xf32> to vector<1x242xf32>
    %53 = tpu.concatenate %51, %52 in 1 : vector<1x14xf32>, vector<1x242xf32> -> vector<1x256xf32>
    %c9 = arith.constant 9 : index
    %c0_15 = arith.constant 0 : index
    %54 = vector.load %arg1[%c9, %c0_15] : memref<25x256xf32, #tpu.memory_space<vmem>>, vector<1x256xf32>
    %55 = arith.mulf %53, %54 : vector<1x256xf32>
    %56 = tpu.concatenate %35, %40, %45, %50, %55 in 0 : vector<1x256xf32>, vector<1x256xf32>, vector<1x256xf32>, vector<1x256xf32>, vector<1x256xf32> -> vector<5x256xf32>
    %c1_16 = arith.constant 1 : index
    %c0_17 = arith.constant 0 : index
    %c0_18 = arith.constant 0 : index
    %57 = vector.load %arg3[%c1_16, %c0_17, %c0_18] : memref<5x16x5xf32, #tpu.memory_space<vmem>>, vector<1x16x5xf32>
    %58 = vector.shape_cast %57 : vector<1x16x5xf32> to vector<16x5xf32>
    %cst_19 = arith.constant dense<0.000000e+00> : vector<16x256xf32>
    %59 = tpu.matmul %58, %56, %cst_19 {dimension_numbers = #tpu.dot_dimension_numbers<[1], [0], [0], [1], [0, 0, 1, 1], [], []>} : vector<16x5xf32>, vector<5x256xf32>, vector<16x256xf32> -> vector<16x256xf32>
    %60 = arith.addf %30, %59 : vector<16x256xf32>
    %61 = vector.extract_strided_slice %1 {offsets = [0, 254], sizes = [1, 2], strides = [1, 1]} : vector<1x256xf32> to vector<1x2xf32>
    %62 = vector.extract_strided_slice %1 {offsets = [0, 0], sizes = [1, 254], strides = [1, 1]} : vector<1x256xf32> to vector<1x254xf32>
    %63 = tpu.concatenate %61, %62 in 1 : vector<1x2xf32>, vector<1x254xf32> -> vector<1x256xf32>
    %c10 = arith.constant 10 : index
    %c0_20 = arith.constant 0 : index
    %64 = vector.load %arg1[%c10, %c0_20] : memref<25x256xf32, #tpu.memory_space<vmem>>, vector<1x256xf32>
    %65 = arith.mulf %63, %64 : vector<1x256xf32>
    %66 = vector.extract_strided_slice %1 {offsets = [0, 255], sizes = [1, 1], strides = [1, 1]} : vector<1x256xf32> to vector<1x1xf32>
    %67 = vector.extract_strided_slice %1 {offsets = [0, 0], sizes = [1, 255], strides = [1, 1]} : vector<1x256xf32> to vector<1x255xf32>
    %68 = tpu.concatenate %66, %67 in 1 : vector<1x1xf32>, vector<1x255xf32> -> vector<1x256xf32>
    %c11 = arith.constant 11 : index
    %c0_21 = arith.constant 0 : index
    %69 = vector.load %arg1[%c11, %c0_21] : memref<25x256xf32, #tpu.memory_space<vmem>>, vector<1x256xf32>
    %70 = arith.mulf %68, %69 : vector<1x256xf32>
    %71 = vector.extract_strided_slice %1 {offsets = [0, 1], sizes = [1, 255], strides = [1, 1]} : vector<1x256xf32> to vector<1x255xf32>
    %72 = vector.extract_strided_slice %1 {offsets = [0, 0], sizes = [1, 1], strides = [1, 1]} : vector<1x256xf32> to vector<1x1xf32>
    %73 = tpu.concatenate %71, %72 in 1 : vector<1x255xf32>, vector<1x1xf32> -> vector<1x256xf32>
    %c13 = arith.constant 13 : index
    %c0_22 = arith.constant 0 : index
    %74 = vector.load %arg1[%c13, %c0_22] : memref<25x256xf32, #tpu.memory_space<vmem>>, vector<1x256xf32>
    %75 = arith.mulf %73, %74 : vector<1x256xf32>
    %76 = vector.extract_strided_slice %1 {offsets = [0, 2], sizes = [1, 254], strides = [1, 1]} : vector<1x256xf32> to vector<1x254xf32>
    %77 = vector.extract_strided_slice %1 {offsets = [0, 0], sizes = [1, 2], strides = [1, 1]} : vector<1x256xf32> to vector<1x2xf32>
    %78 = tpu.concatenate %76, %77 in 1 : vector<1x254xf32>, vector<1x2xf32> -> vector<1x256xf32>
    %c14 = arith.constant 14 : index
    %c0_23 = arith.constant 0 : index
    %79 = vector.load %arg1[%c14, %c0_23] : memref<25x256xf32, #tpu.memory_space<vmem>>, vector<1x256xf32>
    %80 = arith.mulf %78, %79 : vector<1x256xf32>
    %81 = tpu.concatenate %65, %70, %1, %75, %80 in 0 : vector<1x256xf32>, vector<1x256xf32>, vector<1x256xf32>, vector<1x256xf32>, vector<1x256xf32> -> vector<5x256xf32>
    %c2_24 = arith.constant 2 : index
    %c0_25 = arith.constant 0 : index
    %c0_26 = arith.constant 0 : index
    %82 = vector.load %arg3[%c2_24, %c0_25, %c0_26] : memref<5x16x5xf32, #tpu.memory_space<vmem>>, vector<1x16x5xf32>
    %83 = vector.shape_cast %82 : vector<1x16x5xf32> to vector<16x5xf32>
    %cst_27 = arith.constant dense<0.000000e+00> : vector<16x256xf32>
    %84 = tpu.matmul %83, %81, %cst_27 {dimension_numbers = #tpu.dot_dimension_numbers<[1], [0], [0], [1], [0, 0, 1, 1], [], []>} : vector<16x5xf32>, vector<5x256xf32>, vector<16x256xf32> -> vector<16x256xf32>
    %85 = arith.addf %60, %84 : vector<16x256xf32>
    %86 = vector.extract_strided_slice %1 {offsets = [0, 14], sizes = [1, 242], strides = [1, 1]} : vector<1x256xf32> to vector<1x242xf32>
    %87 = vector.extract_strided_slice %1 {offsets = [0, 0], sizes = [1, 14], strides = [1, 1]} : vector<1x256xf32> to vector<1x14xf32>
    %88 = tpu.concatenate %86, %87 in 1 : vector<1x242xf32>, vector<1x14xf32> -> vector<1x256xf32>
    %c15 = arith.constant 15 : index
    %c0_28 = arith.constant 0 : index
    %89 = vector.load %arg1[%c15, %c0_28] : memref<25x256xf32, #tpu.memory_space<vmem>>, vector<1x256xf32>
    %90 = arith.mulf %88, %89 : vector<1x256xf32>
    %91 = vector.extract_strided_slice %1 {offsets = [0, 15], sizes = [1, 241], strides = [1, 1]} : vector<1x256xf32> to vector<1x241xf32>
    %92 = vector.extract_strided_slice %1 {offsets = [0, 0], sizes = [1, 15], strides = [1, 1]} : vector<1x256xf32> to vector<1x15xf32>
    %93 = tpu.concatenate %91, %92 in 1 : vector<1x241xf32>, vector<1x15xf32> -> vector<1x256xf32>
    %c16 = arith.constant 16 : index
    %c0_29 = arith.constant 0 : index
    %94 = vector.load %arg1[%c16, %c0_29] : memref<25x256xf32, #tpu.memory_space<vmem>>, vector<1x256xf32>
    %95 = arith.mulf %93, %94 : vector<1x256xf32>
    %96 = vector.extract_strided_slice %1 {offsets = [0, 16], sizes = [1, 240], strides = [1, 1]} : vector<1x256xf32> to vector<1x240xf32>
    %97 = vector.extract_strided_slice %1 {offsets = [0, 0], sizes = [1, 16], strides = [1, 1]} : vector<1x256xf32> to vector<1x16xf32>
    %98 = tpu.concatenate %96, %97 in 1 : vector<1x240xf32>, vector<1x16xf32> -> vector<1x256xf32>
    %c17 = arith.constant 17 : index
    %c0_30 = arith.constant 0 : index
    %99 = vector.load %arg1[%c17, %c0_30] : memref<25x256xf32, #tpu.memory_space<vmem>>, vector<1x256xf32>
    %100 = arith.mulf %98, %99 : vector<1x256xf32>
    %101 = vector.extract_strided_slice %1 {offsets = [0, 17], sizes = [1, 239], strides = [1, 1]} : vector<1x256xf32> to vector<1x239xf32>
    %102 = vector.extract_strided_slice %1 {offsets = [0, 0], sizes = [1, 17], strides = [1, 1]} : vector<1x256xf32> to vector<1x17xf32>
    %103 = tpu.concatenate %101, %102 in 1 : vector<1x239xf32>, vector<1x17xf32> -> vector<1x256xf32>
    %c18 = arith.constant 18 : index
    %c0_31 = arith.constant 0 : index
    %104 = vector.load %arg1[%c18, %c0_31] : memref<25x256xf32, #tpu.memory_space<vmem>>, vector<1x256xf32>
    %105 = arith.mulf %103, %104 : vector<1x256xf32>
    %106 = vector.extract_strided_slice %1 {offsets = [0, 18], sizes = [1, 238], strides = [1, 1]} : vector<1x256xf32> to vector<1x238xf32>
    %107 = vector.extract_strided_slice %1 {offsets = [0, 0], sizes = [1, 18], strides = [1, 1]} : vector<1x256xf32> to vector<1x18xf32>
    %108 = tpu.concatenate %106, %107 in 1 : vector<1x238xf32>, vector<1x18xf32> -> vector<1x256xf32>
    %c19 = arith.constant 19 : index
    %c0_32 = arith.constant 0 : index
    %109 = vector.load %arg1[%c19, %c0_32] : memref<25x256xf32, #tpu.memory_space<vmem>>, vector<1x256xf32>
    %110 = arith.mulf %108, %109 : vector<1x256xf32>
    %111 = tpu.concatenate %90, %95, %100, %105, %110 in 0 : vector<1x256xf32>, vector<1x256xf32>, vector<1x256xf32>, vector<1x256xf32>, vector<1x256xf32> -> vector<5x256xf32>
    %c3_33 = arith.constant 3 : index
    %c0_34 = arith.constant 0 : index
    %c0_35 = arith.constant 0 : index
    %112 = vector.load %arg3[%c3_33, %c0_34, %c0_35] : memref<5x16x5xf32, #tpu.memory_space<vmem>>, vector<1x16x5xf32>
    %113 = vector.shape_cast %112 : vector<1x16x5xf32> to vector<16x5xf32>
    %cst_36 = arith.constant dense<0.000000e+00> : vector<16x256xf32>
    %114 = tpu.matmul %113, %111, %cst_36 {dimension_numbers = #tpu.dot_dimension_numbers<[1], [0], [0], [1], [0, 0, 1, 1], [], []>} : vector<16x5xf32>, vector<5x256xf32>, vector<16x256xf32> -> vector<16x256xf32>
    %115 = arith.addf %85, %114 : vector<16x256xf32>
    %116 = vector.extract_strided_slice %1 {offsets = [0, 30], sizes = [1, 226], strides = [1, 1]} : vector<1x256xf32> to vector<1x226xf32>
    %117 = vector.extract_strided_slice %1 {offsets = [0, 0], sizes = [1, 30], strides = [1, 1]} : vector<1x256xf32> to vector<1x30xf32>
    %118 = tpu.concatenate %116, %117 in 1 : vector<1x226xf32>, vector<1x30xf32> -> vector<1x256xf32>
    %c20 = arith.constant 20 : index
    %c0_37 = arith.constant 0 : index
    %119 = vector.load %arg1[%c20, %c0_37] : memref<25x256xf32, #tpu.memory_space<vmem>>, vector<1x256xf32>
    %120 = arith.mulf %118, %119 : vector<1x256xf32>
    %121 = vector.extract_strided_slice %1 {offsets = [0, 31], sizes = [1, 225], strides = [1, 1]} : vector<1x256xf32> to vector<1x225xf32>
    %122 = vector.extract_strided_slice %1 {offsets = [0, 0], sizes = [1, 31], strides = [1, 1]} : vector<1x256xf32> to vector<1x31xf32>
    %123 = tpu.concatenate %121, %122 in 1 : vector<1x225xf32>, vector<1x31xf32> -> vector<1x256xf32>
    %c21 = arith.constant 21 : index
    %c0_38 = arith.constant 0 : index
    %124 = vector.load %arg1[%c21, %c0_38] : memref<25x256xf32, #tpu.memory_space<vmem>>, vector<1x256xf32>
    %125 = arith.mulf %123, %124 : vector<1x256xf32>
    %126 = vector.extract_strided_slice %1 {offsets = [0, 32], sizes = [1, 224], strides = [1, 1]} : vector<1x256xf32> to vector<1x224xf32>
    %127 = vector.extract_strided_slice %1 {offsets = [0, 0], sizes = [1, 32], strides = [1, 1]} : vector<1x256xf32> to vector<1x32xf32>
    %128 = tpu.concatenate %126, %127 in 1 : vector<1x224xf32>, vector<1x32xf32> -> vector<1x256xf32>
    %c22 = arith.constant 22 : index
    %c0_39 = arith.constant 0 : index
    %129 = vector.load %arg1[%c22, %c0_39] : memref<25x256xf32, #tpu.memory_space<vmem>>, vector<1x256xf32>
    %130 = arith.mulf %128, %129 : vector<1x256xf32>
    %131 = vector.extract_strided_slice %1 {offsets = [0, 33], sizes = [1, 223], strides = [1, 1]} : vector<1x256xf32> to vector<1x223xf32>
    %132 = vector.extract_strided_slice %1 {offsets = [0, 0], sizes = [1, 33], strides = [1, 1]} : vector<1x256xf32> to vector<1x33xf32>
    %133 = tpu.concatenate %131, %132 in 1 : vector<1x223xf32>, vector<1x33xf32> -> vector<1x256xf32>
    %c23 = arith.constant 23 : index
    %c0_40 = arith.constant 0 : index
    %134 = vector.load %arg1[%c23, %c0_40] : memref<25x256xf32, #tpu.memory_space<vmem>>, vector<1x256xf32>
    %135 = arith.mulf %133, %134 : vector<1x256xf32>
    %136 = vector.extract_strided_slice %1 {offsets = [0, 34], sizes = [1, 222], strides = [1, 1]} : vector<1x256xf32> to vector<1x222xf32>
    %137 = vector.extract_strided_slice %1 {offsets = [0, 0], sizes = [1, 34], strides = [1, 1]} : vector<1x256xf32> to vector<1x34xf32>
    %138 = tpu.concatenate %136, %137 in 1 : vector<1x222xf32>, vector<1x34xf32> -> vector<1x256xf32>
    %c24 = arith.constant 24 : index
    %c0_41 = arith.constant 0 : index
    %139 = vector.load %arg1[%c24, %c0_41] : memref<25x256xf32, #tpu.memory_space<vmem>>, vector<1x256xf32>
    %140 = arith.mulf %138, %139 : vector<1x256xf32>
    %141 = tpu.concatenate %120, %125, %130, %135, %140 in 0 : vector<1x256xf32>, vector<1x256xf32>, vector<1x256xf32>, vector<1x256xf32>, vector<1x256xf32> -> vector<5x256xf32>
    %c4_42 = arith.constant 4 : index
    %c0_43 = arith.constant 0 : index
    %c0_44 = arith.constant 0 : index
    %142 = vector.load %arg3[%c4_42, %c0_43, %c0_44] : memref<5x16x5xf32, #tpu.memory_space<vmem>>, vector<1x16x5xf32>
    %143 = vector.shape_cast %142 : vector<1x16x5xf32> to vector<16x5xf32>
    %cst_45 = arith.constant dense<0.000000e+00> : vector<16x256xf32>
    %144 = tpu.matmul %143, %141, %cst_45 {dimension_numbers = #tpu.dot_dimension_numbers<[1], [0], [0], [1], [0, 0, 1, 1], [], []>} : vector<16x5xf32>, vector<5x256xf32>, vector<16x256xf32> -> vector<16x256xf32>
    %145 = arith.addf %115, %144 : vector<16x256xf32>
    %c0_46 = arith.constant 0 : index
    %c0_47 = arith.constant 0 : index
    %146 = vector.load %arg4[%c0_46, %c0_47] : memref<16x1xf32, #tpu.memory_space<vmem>>, vector<16x1xf32>
    %147 = vector.broadcast %146 : vector<16x1xf32> to vector<16x256xf32>
    %148 = arith.addf %145, %147 : vector<16x256xf32>
    %cst_48 = arith.constant 0.000000e+00 : f32
    %149 = vector.broadcast %cst_48 : f32 to vector<16x256xf32>
    %150 = arith.maximumf %148, %149 : vector<16x256xf32>
    %151 = vector.extract_strided_slice %150 {offsets = [0, 255], sizes = [16, 1], strides = [1, 1]} : vector<16x256xf32> to vector<16x1xf32>
    %152 = vector.extract_strided_slice %150 {offsets = [0, 0], sizes = [16, 255], strides = [1, 1]} : vector<16x256xf32> to vector<16x255xf32>
    %153 = tpu.concatenate %151, %152 in 1 : vector<16x1xf32>, vector<16x255xf32> -> vector<16x256xf32>
    %c11_49 = arith.constant 11 : index
    %c0_50 = arith.constant 0 : index
    %154 = vector.load %arg1[%c11_49, %c0_50] : memref<25x256xf32, #tpu.memory_space<vmem>>, vector<1x256xf32>
    %155 = vector.broadcast %154 : vector<1x256xf32> to vector<16x256xf32>
    %156 = arith.mulf %153, %155 : vector<16x256xf32>
    %157 = vector.extract_strided_slice %150 {offsets = [0, 1], sizes = [16, 255], strides = [1, 1]} : vector<16x256xf32> to vector<16x255xf32>
    %158 = vector.extract_strided_slice %150 {offsets = [0, 0], sizes = [16, 1], strides = [1, 1]} : vector<16x256xf32> to vector<16x1xf32>
    %159 = tpu.concatenate %157, %158 in 1 : vector<16x255xf32>, vector<16x1xf32> -> vector<16x256xf32>
    %c13_51 = arith.constant 13 : index
    %c0_52 = arith.constant 0 : index
    %160 = vector.load %arg1[%c13_51, %c0_52] : memref<25x256xf32, #tpu.memory_space<vmem>>, vector<1x256xf32>
    %161 = vector.broadcast %160 : vector<1x256xf32> to vector<16x256xf32>
    %162 = arith.mulf %159, %161 : vector<16x256xf32>
    %163 = arith.maximumf %156, %162 : vector<16x256xf32>
    %164 = arith.maximumf %150, %163 : vector<16x256xf32>
    %165 = vector.extract_strided_slice %164 {offsets = [0, 240], sizes = [16, 16], strides = [1, 1]} : vector<16x256xf32> to vector<16x16xf32>
    %166 = vector.extract_strided_slice %164 {offsets = [0, 0], sizes = [16, 240], strides = [1, 1]} : vector<16x256xf32> to vector<16x240xf32>
    %167 = tpu.concatenate %165, %166 in 1 : vector<16x16xf32>, vector<16x240xf32> -> vector<16x256xf32>
    %c7_53 = arith.constant 7 : index
    %c0_54 = arith.constant 0 : index
    %168 = vector.load %arg1[%c7_53, %c0_54] : memref<25x256xf32, #tpu.memory_space<vmem>>, vector<1x256xf32>
    %169 = vector.broadcast %168 : vector<1x256xf32> to vector<16x256xf32>
    %170 = arith.mulf %167, %169 : vector<16x256xf32>
    %171 = vector.extract_strided_slice %164 {offsets = [0, 16], sizes = [16, 240], strides = [1, 1]} : vector<16x256xf32> to vector<16x240xf32>
    %172 = vector.extract_strided_slice %164 {offsets = [0, 0], sizes = [16, 16], strides = [1, 1]} : vector<16x256xf32> to vector<16x16xf32>
    %173 = tpu.concatenate %171, %172 in 1 : vector<16x240xf32>, vector<16x16xf32> -> vector<16x256xf32>
    %c17_55 = arith.constant 17 : index
    %c0_56 = arith.constant 0 : index
    %174 = vector.load %arg1[%c17_55, %c0_56] : memref<25x256xf32, #tpu.memory_space<vmem>>, vector<1x256xf32>
    %175 = vector.broadcast %174 : vector<1x256xf32> to vector<16x256xf32>
    %176 = arith.mulf %173, %175 : vector<16x256xf32>
    %177 = arith.maximumf %170, %176 : vector<16x256xf32>
    %178 = arith.maximumf %164, %177 : vector<16x256xf32>
    %179 = vector.extract_strided_slice %178 {offsets = [0, 222], sizes = [16, 34], strides = [1, 1]} : vector<16x256xf32> to vector<16x34xf32>
    %180 = vector.extract_strided_slice %178 {offsets = [0, 0], sizes = [16, 222], strides = [1, 1]} : vector<16x256xf32> to vector<16x222xf32>
    %181 = tpu.concatenate %179, %180 in 1 : vector<16x34xf32>, vector<16x222xf32> -> vector<16x256xf32>
    %c0_57 = arith.constant 0 : index
    %c0_58 = arith.constant 0 : index
    %182 = vector.load %arg1[%c0_57, %c0_58] : memref<25x256xf32, #tpu.memory_space<vmem>>, vector<1x256xf32>
    %183 = vector.broadcast %182 : vector<1x256xf32> to vector<16x256xf32>
    %184 = arith.mulf %181, %183 : vector<16x256xf32>
    %185 = vector.extract_strided_slice %178 {offsets = [0, 223], sizes = [16, 33], strides = [1, 1]} : vector<16x256xf32> to vector<16x33xf32>
    %186 = vector.extract_strided_slice %178 {offsets = [0, 0], sizes = [16, 223], strides = [1, 1]} : vector<16x256xf32> to vector<16x223xf32>
    %187 = tpu.concatenate %185, %186 in 1 : vector<16x33xf32>, vector<16x223xf32> -> vector<16x256xf32>
    %c1_59 = arith.constant 1 : index
    %c0_60 = arith.constant 0 : index
    %188 = vector.load %arg1[%c1_59, %c0_60] : memref<25x256xf32, #tpu.memory_space<vmem>>, vector<1x256xf32>
    %189 = vector.broadcast %188 : vector<1x256xf32> to vector<16x256xf32>
    %190 = arith.mulf %187, %189 : vector<16x256xf32>
    %191 = vector.extract_strided_slice %178 {offsets = [0, 224], sizes = [16, 32], strides = [1, 1]} : vector<16x256xf32> to vector<16x32xf32>
    %192 = vector.extract_strided_slice %178 {offsets = [0, 0], sizes = [16, 224], strides = [1, 1]} : vector<16x256xf32> to vector<16x224xf32>
    %193 = tpu.concatenate %191, %192 in 1 : vector<16x32xf32>, vector<16x224xf32> -> vector<16x256xf32>
    %c2_61 = arith.constant 2 : index
    %c0_62 = arith.constant 0 : index
    %194 = vector.load %arg1[%c2_61, %c0_62] : memref<25x256xf32, #tpu.memory_space<vmem>>, vector<1x256xf32>
    %195 = vector.broadcast %194 : vector<1x256xf32> to vector<16x256xf32>
    %196 = arith.mulf %193, %195 : vector<16x256xf32>
    %197 = vector.extract_strided_slice %178 {offsets = [0, 225], sizes = [16, 31], strides = [1, 1]} : vector<16x256xf32> to vector<16x31xf32>
    %198 = vector.extract_strided_slice %178 {offsets = [0, 0], sizes = [16, 225], strides = [1, 1]} : vector<16x256xf32> to vector<16x225xf32>
    %199 = tpu.concatenate %197, %198 in 1 : vector<16x31xf32>, vector<16x225xf32> -> vector<16x256xf32>
    %c3_63 = arith.constant 3 : index
    %c0_64 = arith.constant 0 : index
    %200 = vector.load %arg1[%c3_63, %c0_64] : memref<25x256xf32, #tpu.memory_space<vmem>>, vector<1x256xf32>
    %201 = vector.broadcast %200 : vector<1x256xf32> to vector<16x256xf32>
    %202 = arith.mulf %199, %201 : vector<16x256xf32>
    %203 = vector.extract_strided_slice %178 {offsets = [0, 226], sizes = [16, 30], strides = [1, 1]} : vector<16x256xf32> to vector<16x30xf32>
    %204 = vector.extract_strided_slice %178 {offsets = [0, 0], sizes = [16, 226], strides = [1, 1]} : vector<16x256xf32> to vector<16x226xf32>
    %205 = tpu.concatenate %203, %204 in 1 : vector<16x30xf32>, vector<16x226xf32> -> vector<16x256xf32>
    %c4_65 = arith.constant 4 : index
    %c0_66 = arith.constant 0 : index
    %206 = vector.load %arg1[%c4_65, %c0_66] : memref<25x256xf32, #tpu.memory_space<vmem>>, vector<1x256xf32>
    %207 = vector.broadcast %206 : vector<1x256xf32> to vector<16x256xf32>
    %208 = arith.mulf %205, %207 : vector<16x256xf32>
    %209 = tpu.concatenate %184, %190, %196, %202, %208 in 0 : vector<16x256xf32>, vector<16x256xf32>, vector<16x256xf32>, vector<16x256xf32>, vector<16x256xf32> -> vector<80x256xf32>
    %c0_67 = arith.constant 0 : index
    %c0_68 = arith.constant 0 : index
    %c0_69 = arith.constant 0 : index
    %210 = vector.load %arg5[%c0_67, %c0_68, %c0_69] : memref<5x32x80xf32, #tpu.memory_space<vmem>>, vector<1x32x80xf32>
    %211 = vector.shape_cast %210 : vector<1x32x80xf32> to vector<32x80xf32>
    %cst_70 = arith.constant dense<0.000000e+00> : vector<32x256xf32>
    %212 = tpu.matmul %211, %209, %cst_70 {dimension_numbers = #tpu.dot_dimension_numbers<[1], [0], [0], [1], [0, 0, 1, 1], [], []>} : vector<32x80xf32>, vector<80x256xf32>, vector<32x256xf32> -> vector<32x256xf32>
    %213 = vector.extract_strided_slice %178 {offsets = [0, 238], sizes = [16, 18], strides = [1, 1]} : vector<16x256xf32> to vector<16x18xf32>
    %214 = vector.extract_strided_slice %178 {offsets = [0, 0], sizes = [16, 238], strides = [1, 1]} : vector<16x256xf32> to vector<16x238xf32>
    %215 = tpu.concatenate %213, %214 in 1 : vector<16x18xf32>, vector<16x238xf32> -> vector<16x256xf32>
    %c5_71 = arith.constant 5 : index
    %c0_72 = arith.constant 0 : index
    %216 = vector.load %arg1[%c5_71, %c0_72] : memref<25x256xf32, #tpu.memory_space<vmem>>, vector<1x256xf32>
    %217 = vector.broadcast %216 : vector<1x256xf32> to vector<16x256xf32>
    %218 = arith.mulf %215, %217 : vector<16x256xf32>
    %219 = vector.extract_strided_slice %178 {offsets = [0, 239], sizes = [16, 17], strides = [1, 1]} : vector<16x256xf32> to vector<16x17xf32>
    %220 = vector.extract_strided_slice %178 {offsets = [0, 0], sizes = [16, 239], strides = [1, 1]} : vector<16x256xf32> to vector<16x239xf32>
    %221 = tpu.concatenate %219, %220 in 1 : vector<16x17xf32>, vector<16x239xf32> -> vector<16x256xf32>
    %c6_73 = arith.constant 6 : index
    %c0_74 = arith.constant 0 : index
    %222 = vector.load %arg1[%c6_73, %c0_74] : memref<25x256xf32, #tpu.memory_space<vmem>>, vector<1x256xf32>
    %223 = vector.broadcast %222 : vector<1x256xf32> to vector<16x256xf32>
    %224 = arith.mulf %221, %223 : vector<16x256xf32>
    %225 = vector.extract_strided_slice %178 {offsets = [0, 240], sizes = [16, 16], strides = [1, 1]} : vector<16x256xf32> to vector<16x16xf32>
    %226 = vector.extract_strided_slice %178 {offsets = [0, 0], sizes = [16, 240], strides = [1, 1]} : vector<16x256xf32> to vector<16x240xf32>
    %227 = tpu.concatenate %225, %226 in 1 : vector<16x16xf32>, vector<16x240xf32> -> vector<16x256xf32>
    %c7_75 = arith.constant 7 : index
    %c0_76 = arith.constant 0 : index
    %228 = vector.load %arg1[%c7_75, %c0_76] : memref<25x256xf32, #tpu.memory_space<vmem>>, vector<1x256xf32>
    %229 = vector.broadcast %228 : vector<1x256xf32> to vector<16x256xf32>
    %230 = arith.mulf %227, %229 : vector<16x256xf32>
    %231 = vector.extract_strided_slice %178 {offsets = [0, 241], sizes = [16, 15], strides = [1, 1]} : vector<16x256xf32> to vector<16x15xf32>
    %232 = vector.extract_strided_slice %178 {offsets = [0, 0], sizes = [16, 241], strides = [1, 1]} : vector<16x256xf32> to vector<16x241xf32>
    %233 = tpu.concatenate %231, %232 in 1 : vector<16x15xf32>, vector<16x241xf32> -> vector<16x256xf32>
    %c8_77 = arith.constant 8 : index
    %c0_78 = arith.constant 0 : index
    %234 = vector.load %arg1[%c8_77, %c0_78] : memref<25x256xf32, #tpu.memory_space<vmem>>, vector<1x256xf32>
    %235 = vector.broadcast %234 : vector<1x256xf32> to vector<16x256xf32>
    %236 = arith.mulf %233, %235 : vector<16x256xf32>
    %237 = vector.extract_strided_slice %178 {offsets = [0, 242], sizes = [16, 14], strides = [1, 1]} : vector<16x256xf32> to vector<16x14xf32>
    %238 = vector.extract_strided_slice %178 {offsets = [0, 0], sizes = [16, 242], strides = [1, 1]} : vector<16x256xf32> to vector<16x242xf32>
    %239 = tpu.concatenate %237, %238 in 1 : vector<16x14xf32>, vector<16x242xf32> -> vector<16x256xf32>
    %c9_79 = arith.constant 9 : index
    %c0_80 = arith.constant 0 : index
    %240 = vector.load %arg1[%c9_79, %c0_80] : memref<25x256xf32, #tpu.memory_space<vmem>>, vector<1x256xf32>
    %241 = vector.broadcast %240 : vector<1x256xf32> to vector<16x256xf32>
    %242 = arith.mulf %239, %241 : vector<16x256xf32>
    %243 = tpu.concatenate %218, %224, %230, %236, %242 in 0 : vector<16x256xf32>, vector<16x256xf32>, vector<16x256xf32>, vector<16x256xf32>, vector<16x256xf32> -> vector<80x256xf32>
    %c1_81 = arith.constant 1 : index
    %c0_82 = arith.constant 0 : index
    %c0_83 = arith.constant 0 : index
    %244 = vector.load %arg5[%c1_81, %c0_82, %c0_83] : memref<5x32x80xf32, #tpu.memory_space<vmem>>, vector<1x32x80xf32>
    %245 = vector.shape_cast %244 : vector<1x32x80xf32> to vector<32x80xf32>
    %cst_84 = arith.constant dense<0.000000e+00> : vector<32x256xf32>
    %246 = tpu.matmul %245, %243, %cst_84 {dimension_numbers = #tpu.dot_dimension_numbers<[1], [0], [0], [1], [0, 0, 1, 1], [], []>} : vector<32x80xf32>, vector<80x256xf32>, vector<32x256xf32> -> vector<32x256xf32>
    %247 = arith.addf %212, %246 : vector<32x256xf32>
    %248 = vector.extract_strided_slice %178 {offsets = [0, 254], sizes = [16, 2], strides = [1, 1]} : vector<16x256xf32> to vector<16x2xf32>
    %249 = vector.extract_strided_slice %178 {offsets = [0, 0], sizes = [16, 254], strides = [1, 1]} : vector<16x256xf32> to vector<16x254xf32>
    %250 = tpu.concatenate %248, %249 in 1 : vector<16x2xf32>, vector<16x254xf32> -> vector<16x256xf32>
    %c10_85 = arith.constant 10 : index
    %c0_86 = arith.constant 0 : index
    %251 = vector.load %arg1[%c10_85, %c0_86] : memref<25x256xf32, #tpu.memory_space<vmem>>, vector<1x256xf32>
    %252 = vector.broadcast %251 : vector<1x256xf32> to vector<16x256xf32>
    %253 = arith.mulf %250, %252 : vector<16x256xf32>
    %254 = vector.extract_strided_slice %178 {offsets = [0, 255], sizes = [16, 1], strides = [1, 1]} : vector<16x256xf32> to vector<16x1xf32>
    %255 = vector.extract_strided_slice %178 {offsets = [0, 0], sizes = [16, 255], strides = [1, 1]} : vector<16x256xf32> to vector<16x255xf32>
    %256 = tpu.concatenate %254, %255 in 1 : vector<16x1xf32>, vector<16x255xf32> -> vector<16x256xf32>
    %c11_87 = arith.constant 11 : index
    %c0_88 = arith.constant 0 : index
    %257 = vector.load %arg1[%c11_87, %c0_88] : memref<25x256xf32, #tpu.memory_space<vmem>>, vector<1x256xf32>
    %258 = vector.broadcast %257 : vector<1x256xf32> to vector<16x256xf32>
    %259 = arith.mulf %256, %258 : vector<16x256xf32>
    %260 = vector.extract_strided_slice %178 {offsets = [0, 1], sizes = [16, 255], strides = [1, 1]} : vector<16x256xf32> to vector<16x255xf32>
    %261 = vector.extract_strided_slice %178 {offsets = [0, 0], sizes = [16, 1], strides = [1, 1]} : vector<16x256xf32> to vector<16x1xf32>
    %262 = tpu.concatenate %260, %261 in 1 : vector<16x255xf32>, vector<16x1xf32> -> vector<16x256xf32>
    %c13_89 = arith.constant 13 : index
    %c0_90 = arith.constant 0 : index
    %263 = vector.load %arg1[%c13_89, %c0_90] : memref<25x256xf32, #tpu.memory_space<vmem>>, vector<1x256xf32>
    %264 = vector.broadcast %263 : vector<1x256xf32> to vector<16x256xf32>
    %265 = arith.mulf %262, %264 : vector<16x256xf32>
    %266 = vector.extract_strided_slice %178 {offsets = [0, 2], sizes = [16, 254], strides = [1, 1]} : vector<16x256xf32> to vector<16x254xf32>
    %267 = vector.extract_strided_slice %178 {offsets = [0, 0], sizes = [16, 2], strides = [1, 1]} : vector<16x256xf32> to vector<16x2xf32>
    %268 = tpu.concatenate %266, %267 in 1 : vector<16x254xf32>, vector<16x2xf32> -> vector<16x256xf32>
    %c14_91 = arith.constant 14 : index
    %c0_92 = arith.constant 0 : index
    %269 = vector.load %arg1[%c14_91, %c0_92] : memref<25x256xf32, #tpu.memory_space<vmem>>, vector<1x256xf32>
    %270 = vector.broadcast %269 : vector<1x256xf32> to vector<16x256xf32>
    %271 = arith.mulf %268, %270 : vector<16x256xf32>
    %272 = tpu.concatenate %253, %259, %178, %265, %271 in 0 : vector<16x256xf32>, vector<16x256xf32>, vector<16x256xf32>, vector<16x256xf32>, vector<16x256xf32> -> vector<80x256xf32>
    %c2_93 = arith.constant 2 : index
    %c0_94 = arith.constant 0 : index
    %c0_95 = arith.constant 0 : index
    %273 = vector.load %arg5[%c2_93, %c0_94, %c0_95] : memref<5x32x80xf32, #tpu.memory_space<vmem>>, vector<1x32x80xf32>
    %274 = vector.shape_cast %273 : vector<1x32x80xf32> to vector<32x80xf32>
    %cst_96 = arith.constant dense<0.000000e+00> : vector<32x256xf32>
    %275 = tpu.matmul %274, %272, %cst_96 {dimension_numbers = #tpu.dot_dimension_numbers<[1], [0], [0], [1], [0, 0, 1, 1], [], []>} : vector<32x80xf32>, vector<80x256xf32>, vector<32x256xf32> -> vector<32x256xf32>
    %276 = arith.addf %247, %275 : vector<32x256xf32>
    %277 = vector.extract_strided_slice %178 {offsets = [0, 14], sizes = [16, 242], strides = [1, 1]} : vector<16x256xf32> to vector<16x242xf32>
    %278 = vector.extract_strided_slice %178 {offsets = [0, 0], sizes = [16, 14], strides = [1, 1]} : vector<16x256xf32> to vector<16x14xf32>
    %279 = tpu.concatenate %277, %278 in 1 : vector<16x242xf32>, vector<16x14xf32> -> vector<16x256xf32>
    %c15_97 = arith.constant 15 : index
    %c0_98 = arith.constant 0 : index
    %280 = vector.load %arg1[%c15_97, %c0_98] : memref<25x256xf32, #tpu.memory_space<vmem>>, vector<1x256xf32>
    %281 = vector.broadcast %280 : vector<1x256xf32> to vector<16x256xf32>
    %282 = arith.mulf %279, %281 : vector<16x256xf32>
    %283 = vector.extract_strided_slice %178 {offsets = [0, 15], sizes = [16, 241], strides = [1, 1]} : vector<16x256xf32> to vector<16x241xf32>
    %284 = vector.extract_strided_slice %178 {offsets = [0, 0], sizes = [16, 15], strides = [1, 1]} : vector<16x256xf32> to vector<16x15xf32>
    %285 = tpu.concatenate %283, %284 in 1 : vector<16x241xf32>, vector<16x15xf32> -> vector<16x256xf32>
    %c16_99 = arith.constant 16 : index
    %c0_100 = arith.constant 0 : index
    %286 = vector.load %arg1[%c16_99, %c0_100] : memref<25x256xf32, #tpu.memory_space<vmem>>, vector<1x256xf32>
    %287 = vector.broadcast %286 : vector<1x256xf32> to vector<16x256xf32>
    %288 = arith.mulf %285, %287 : vector<16x256xf32>
    %289 = vector.extract_strided_slice %178 {offsets = [0, 16], sizes = [16, 240], strides = [1, 1]} : vector<16x256xf32> to vector<16x240xf32>
    %290 = vector.extract_strided_slice %178 {offsets = [0, 0], sizes = [16, 16], strides = [1, 1]} : vector<16x256xf32> to vector<16x16xf32>
    %291 = tpu.concatenate %289, %290 in 1 : vector<16x240xf32>, vector<16x16xf32> -> vector<16x256xf32>
    %c17_101 = arith.constant 17 : index
    %c0_102 = arith.constant 0 : index
    %292 = vector.load %arg1[%c17_101, %c0_102] : memref<25x256xf32, #tpu.memory_space<vmem>>, vector<1x256xf32>
    %293 = vector.broadcast %292 : vector<1x256xf32> to vector<16x256xf32>
    %294 = arith.mulf %291, %293 : vector<16x256xf32>
    %295 = vector.extract_strided_slice %178 {offsets = [0, 17], sizes = [16, 239], strides = [1, 1]} : vector<16x256xf32> to vector<16x239xf32>
    %296 = vector.extract_strided_slice %178 {offsets = [0, 0], sizes = [16, 17], strides = [1, 1]} : vector<16x256xf32> to vector<16x17xf32>
    %297 = tpu.concatenate %295, %296 in 1 : vector<16x239xf32>, vector<16x17xf32> -> vector<16x256xf32>
    %c18_103 = arith.constant 18 : index
    %c0_104 = arith.constant 0 : index
    %298 = vector.load %arg1[%c18_103, %c0_104] : memref<25x256xf32, #tpu.memory_space<vmem>>, vector<1x256xf32>
    %299 = vector.broadcast %298 : vector<1x256xf32> to vector<16x256xf32>
    %300 = arith.mulf %297, %299 : vector<16x256xf32>
    %301 = vector.extract_strided_slice %178 {offsets = [0, 18], sizes = [16, 238], strides = [1, 1]} : vector<16x256xf32> to vector<16x238xf32>
    %302 = vector.extract_strided_slice %178 {offsets = [0, 0], sizes = [16, 18], strides = [1, 1]} : vector<16x256xf32> to vector<16x18xf32>
    %303 = tpu.concatenate %301, %302 in 1 : vector<16x238xf32>, vector<16x18xf32> -> vector<16x256xf32>
    %c19_105 = arith.constant 19 : index
    %c0_106 = arith.constant 0 : index
    %304 = vector.load %arg1[%c19_105, %c0_106] : memref<25x256xf32, #tpu.memory_space<vmem>>, vector<1x256xf32>
    %305 = vector.broadcast %304 : vector<1x256xf32> to vector<16x256xf32>
    %306 = arith.mulf %303, %305 : vector<16x256xf32>
    %307 = tpu.concatenate %282, %288, %294, %300, %306 in 0 : vector<16x256xf32>, vector<16x256xf32>, vector<16x256xf32>, vector<16x256xf32>, vector<16x256xf32> -> vector<80x256xf32>
    %c3_107 = arith.constant 3 : index
    %c0_108 = arith.constant 0 : index
    %c0_109 = arith.constant 0 : index
    %308 = vector.load %arg5[%c3_107, %c0_108, %c0_109] : memref<5x32x80xf32, #tpu.memory_space<vmem>>, vector<1x32x80xf32>
    %309 = vector.shape_cast %308 : vector<1x32x80xf32> to vector<32x80xf32>
    %cst_110 = arith.constant dense<0.000000e+00> : vector<32x256xf32>
    %310 = tpu.matmul %309, %307, %cst_110 {dimension_numbers = #tpu.dot_dimension_numbers<[1], [0], [0], [1], [0, 0, 1, 1], [], []>} : vector<32x80xf32>, vector<80x256xf32>, vector<32x256xf32> -> vector<32x256xf32>
    %311 = arith.addf %276, %310 : vector<32x256xf32>
    %312 = vector.extract_strided_slice %178 {offsets = [0, 30], sizes = [16, 226], strides = [1, 1]} : vector<16x256xf32> to vector<16x226xf32>
    %313 = vector.extract_strided_slice %178 {offsets = [0, 0], sizes = [16, 30], strides = [1, 1]} : vector<16x256xf32> to vector<16x30xf32>
    %314 = tpu.concatenate %312, %313 in 1 : vector<16x226xf32>, vector<16x30xf32> -> vector<16x256xf32>
    %c20_111 = arith.constant 20 : index
    %c0_112 = arith.constant 0 : index
    %315 = vector.load %arg1[%c20_111, %c0_112] : memref<25x256xf32, #tpu.memory_space<vmem>>, vector<1x256xf32>
    %316 = vector.broadcast %315 : vector<1x256xf32> to vector<16x256xf32>
    %317 = arith.mulf %314, %316 : vector<16x256xf32>
    %318 = vector.extract_strided_slice %178 {offsets = [0, 31], sizes = [16, 225], strides = [1, 1]} : vector<16x256xf32> to vector<16x225xf32>
    %319 = vector.extract_strided_slice %178 {offsets = [0, 0], sizes = [16, 31], strides = [1, 1]} : vector<16x256xf32> to vector<16x31xf32>
    %320 = tpu.concatenate %318, %319 in 1 : vector<16x225xf32>, vector<16x31xf32> -> vector<16x256xf32>
    %c21_113 = arith.constant 21 : index
    %c0_114 = arith.constant 0 : index
    %321 = vector.load %arg1[%c21_113, %c0_114] : memref<25x256xf32, #tpu.memory_space<vmem>>, vector<1x256xf32>
    %322 = vector.broadcast %321 : vector<1x256xf32> to vector<16x256xf32>
    %323 = arith.mulf %320, %322 : vector<16x256xf32>
    %324 = vector.extract_strided_slice %178 {offsets = [0, 32], sizes = [16, 224], strides = [1, 1]} : vector<16x256xf32> to vector<16x224xf32>
    %325 = vector.extract_strided_slice %178 {offsets = [0, 0], sizes = [16, 32], strides = [1, 1]} : vector<16x256xf32> to vector<16x32xf32>
    %326 = tpu.concatenate %324, %325 in 1 : vector<16x224xf32>, vector<16x32xf32> -> vector<16x256xf32>
    %c22_115 = arith.constant 22 : index
    %c0_116 = arith.constant 0 : index
    %327 = vector.load %arg1[%c22_115, %c0_116] : memref<25x256xf32, #tpu.memory_space<vmem>>, vector<1x256xf32>
    %328 = vector.broadcast %327 : vector<1x256xf32> to vector<16x256xf32>
    %329 = arith.mulf %326, %328 : vector<16x256xf32>
    %330 = vector.extract_strided_slice %178 {offsets = [0, 33], sizes = [16, 223], strides = [1, 1]} : vector<16x256xf32> to vector<16x223xf32>
    %331 = vector.extract_strided_slice %178 {offsets = [0, 0], sizes = [16, 33], strides = [1, 1]} : vector<16x256xf32> to vector<16x33xf32>
    %332 = tpu.concatenate %330, %331 in 1 : vector<16x223xf32>, vector<16x33xf32> -> vector<16x256xf32>
    %c23_117 = arith.constant 23 : index
    %c0_118 = arith.constant 0 : index
    %333 = vector.load %arg1[%c23_117, %c0_118] : memref<25x256xf32, #tpu.memory_space<vmem>>, vector<1x256xf32>
    %334 = vector.broadcast %333 : vector<1x256xf32> to vector<16x256xf32>
    %335 = arith.mulf %332, %334 : vector<16x256xf32>
    %336 = vector.extract_strided_slice %178 {offsets = [0, 34], sizes = [16, 222], strides = [1, 1]} : vector<16x256xf32> to vector<16x222xf32>
    %337 = vector.extract_strided_slice %178 {offsets = [0, 0], sizes = [16, 34], strides = [1, 1]} : vector<16x256xf32> to vector<16x34xf32>
    %338 = tpu.concatenate %336, %337 in 1 : vector<16x222xf32>, vector<16x34xf32> -> vector<16x256xf32>
    %c24_119 = arith.constant 24 : index
    %c0_120 = arith.constant 0 : index
    %339 = vector.load %arg1[%c24_119, %c0_120] : memref<25x256xf32, #tpu.memory_space<vmem>>, vector<1x256xf32>
    %340 = vector.broadcast %339 : vector<1x256xf32> to vector<16x256xf32>
    %341 = arith.mulf %338, %340 : vector<16x256xf32>
    %342 = tpu.concatenate %317, %323, %329, %335, %341 in 0 : vector<16x256xf32>, vector<16x256xf32>, vector<16x256xf32>, vector<16x256xf32>, vector<16x256xf32> -> vector<80x256xf32>
    %c4_121 = arith.constant 4 : index
    %c0_122 = arith.constant 0 : index
    %c0_123 = arith.constant 0 : index
    %343 = vector.load %arg5[%c4_121, %c0_122, %c0_123] : memref<5x32x80xf32, #tpu.memory_space<vmem>>, vector<1x32x80xf32>
    %344 = vector.shape_cast %343 : vector<1x32x80xf32> to vector<32x80xf32>
    %cst_124 = arith.constant dense<0.000000e+00> : vector<32x256xf32>
    %345 = tpu.matmul %344, %342, %cst_124 {dimension_numbers = #tpu.dot_dimension_numbers<[1], [0], [0], [1], [0, 0, 1, 1], [], []>} : vector<32x80xf32>, vector<80x256xf32>, vector<32x256xf32> -> vector<32x256xf32>
    %346 = arith.addf %311, %345 : vector<32x256xf32>
    %c0_125 = arith.constant 0 : index
    %c0_126 = arith.constant 0 : index
    %347 = vector.load %arg6[%c0_125, %c0_126] : memref<32x1xf32, #tpu.memory_space<vmem>>, vector<32x1xf32>
    %348 = vector.broadcast %347 : vector<32x1xf32> to vector<32x256xf32>
    %349 = arith.addf %346, %348 : vector<32x256xf32>
    %cst_127 = arith.constant 0.000000e+00 : f32
    %350 = vector.broadcast %cst_127 : f32 to vector<32x256xf32>
    %351 = arith.maximumf %349, %350 : vector<32x256xf32>
    %352 = vector.extract_strided_slice %351 {offsets = [0, 255], sizes = [32, 1], strides = [1, 1]} : vector<32x256xf32> to vector<32x1xf32>
    %353 = vector.extract_strided_slice %351 {offsets = [0, 0], sizes = [32, 255], strides = [1, 1]} : vector<32x256xf32> to vector<32x255xf32>
    %354 = tpu.concatenate %352, %353 in 1 : vector<32x1xf32>, vector<32x255xf32> -> vector<32x256xf32>
    %c11_128 = arith.constant 11 : index
    %c0_129 = arith.constant 0 : index
    %355 = vector.load %arg1[%c11_128, %c0_129] : memref<25x256xf32, #tpu.memory_space<vmem>>, vector<1x256xf32>
    %356 = vector.broadcast %355 : vector<1x256xf32> to vector<32x256xf32>
    %357 = arith.mulf %354, %356 : vector<32x256xf32>
    %358 = vector.extract_strided_slice %351 {offsets = [0, 1], sizes = [32, 255], strides = [1, 1]} : vector<32x256xf32> to vector<32x255xf32>
    %359 = vector.extract_strided_slice %351 {offsets = [0, 0], sizes = [32, 1], strides = [1, 1]} : vector<32x256xf32> to vector<32x1xf32>
    %360 = tpu.concatenate %358, %359 in 1 : vector<32x255xf32>, vector<32x1xf32> -> vector<32x256xf32>
    %c13_130 = arith.constant 13 : index
    %c0_131 = arith.constant 0 : index
    %361 = vector.load %arg1[%c13_130, %c0_131] : memref<25x256xf32, #tpu.memory_space<vmem>>, vector<1x256xf32>
    %362 = vector.broadcast %361 : vector<1x256xf32> to vector<32x256xf32>
    %363 = arith.mulf %360, %362 : vector<32x256xf32>
    %364 = arith.maximumf %357, %363 : vector<32x256xf32>
    %365 = arith.maximumf %351, %364 : vector<32x256xf32>
    %366 = vector.extract_strided_slice %365 {offsets = [0, 240], sizes = [32, 16], strides = [1, 1]} : vector<32x256xf32> to vector<32x16xf32>
    %367 = vector.extract_strided_slice %365 {offsets = [0, 0], sizes = [32, 240], strides = [1, 1]} : vector<32x256xf32> to vector<32x240xf32>
    %368 = tpu.concatenate %366, %367 in 1 : vector<32x16xf32>, vector<32x240xf32> -> vector<32x256xf32>
    %c7_132 = arith.constant 7 : index
    %c0_133 = arith.constant 0 : index
    %369 = vector.load %arg1[%c7_132, %c0_133] : memref<25x256xf32, #tpu.memory_space<vmem>>, vector<1x256xf32>
    %370 = vector.broadcast %369 : vector<1x256xf32> to vector<32x256xf32>
    %371 = arith.mulf %368, %370 : vector<32x256xf32>
    %372 = vector.extract_strided_slice %365 {offsets = [0, 16], sizes = [32, 240], strides = [1, 1]} : vector<32x256xf32> to vector<32x240xf32>
    %373 = vector.extract_strided_slice %365 {offsets = [0, 0], sizes = [32, 16], strides = [1, 1]} : vector<32x256xf32> to vector<32x16xf32>
    %374 = tpu.concatenate %372, %373 in 1 : vector<32x240xf32>, vector<32x16xf32> -> vector<32x256xf32>
    %c17_134 = arith.constant 17 : index
    %c0_135 = arith.constant 0 : index
    %375 = vector.load %arg1[%c17_134, %c0_135] : memref<25x256xf32, #tpu.memory_space<vmem>>, vector<1x256xf32>
    %376 = vector.broadcast %375 : vector<1x256xf32> to vector<32x256xf32>
    %377 = arith.mulf %374, %376 : vector<32x256xf32>
    %378 = arith.maximumf %371, %377 : vector<32x256xf32>
    %379 = arith.maximumf %365, %378 : vector<32x256xf32>
    %c0_136 = arith.constant 0 : index
    %c0_137 = arith.constant 0 : index
    %c0_138 = arith.constant 0 : index
    %380 = vector.load %arg7[%c0_136, %c0_137, %c0_138] : memref<1x32x256xf32, #tpu.memory_space<vmem>>, vector<1x32x256xf32>
    %381 = vector.shape_cast %380 : vector<1x32x256xf32> to vector<32x256xf32>
    %382 = vector.shape_cast %379 : vector<32x256xf32> to vector<1x32x256xf32>
    tpu.vector_store %arg7[%c0_136, %c0_137, %c0_138], %382 {strides = array<i32>} : memref<1x32x256xf32, #tpu.memory_space<vmem>>, vector<1x32x256xf32>,
    return
  }
  func.func @transform_0(%arg0: i32) -> (i32, i32) {
    %c0_i32 = arith.constant 0 : i32
    %c0_i32_0 = arith.constant 0 : i32
    %c0_i32_1 = arith.constant 0 : i32
    return %c0_i32, %c0_i32_0 : i32, i32
  }
  func.func @transform_1(%arg0: i32) -> (i32, i32, i32) {
    %c0_i32 = arith.constant 0 : i32
    %c0_i32_0 = arith.constant 0 : i32
    %c0_i32_1 = arith.constant 0 : i32
    return %arg0, %c0_i32, %c0_i32_0 : i32, i32, i32
  }
  func.func @transform_2(%arg0: i32) -> (i32, i32, i32) {
    %c0_i32 = arith.constant 0 : i32
    %c0_i32_0 = arith.constant 0 : i32
    %c0_i32_1 = arith.constant 0 : i32
    %c0_i32_2 = arith.constant 0 : i32
    return %c0_i32, %c0_i32_0, %c0_i32_1 : i32, i32, i32
  }
  func.func @transform_3(%arg0: i32) -> (i32, i32) {
    %c0_i32 = arith.constant 0 : i32
    %c0_i32_0 = arith.constant 0 : i32
    %c0_i32_1 = arith.constant 0 : i32
    return %c0_i32, %c0_i32_0 : i32, i32
  }
  func.func @transform_4(%arg0: i32) -> (i32, i32, i32) {
    %c0_i32 = arith.constant 0 : i32
    %c0_i32_0 = arith.constant 0 : i32
    %c0_i32_1 = arith.constant 0 : i32
    %c0_i32_2 = arith.constant 0 : i32
    return %c0_i32, %c0_i32_0, %c0_i32_1 : i32, i32, i32
  }
  func.func @transform_5(%arg0: i32) -> (i32, i32) {
    %c0_i32 = arith.constant 0 : i32
    %c0_i32_0 = arith.constant 0 : i32
    %c0_i32_1 = arith.constant 0 : i32
    return %c0_i32, %c0_i32_0 : i32, i32
  }
  func.func @transform_6(%arg0: i32) -> (i32, i32, i32) {
    %c0_i32 = arith.constant 0 : i32
    %c0_i32_0 = arith.constant 0 : i32
    %c0_i32_1 = arith.constant 0 : i32
    return %arg0, %c0_i32, %c0_i32_0 : i32, i32, i32
  }
}

</mosaic_0001>

<llo_original>
// kernel: encoder_forward.1
$region0: #{encoder_forward.1}
  #allocation0 [shape = 'u32[]', space=smem, size = 0x4, offset = 0x4, fixed_abs, tag = 'smem constant byte address 0x4 - core index']
  #allocation1 [shape = 'u32[72,128]{1,0:T(1,128)}', space=vmem, size = 0x9000, scoped, tag = 'internal scratch']
  %s0 = inlined_call_operand.vmem [shape: f32[25,256], index: 0, kind: input, shape index: {}]
  %s1 = inlined_call_operand.vmem [shape: f32[2,1,256], index: 1, kind: input, shape index: {}]
  %s2 = inlined_call_operand.vmem [shape: f32[5,16,5], index: 2, kind: input, shape index: {}]
  %s3 = inlined_call_operand.vmem [shape: f32[16,1], index: 3, kind: input, shape index: {}]
  %s4 = inlined_call_operand.vmem [shape: f32[5,32,80], index: 4, kind: input, shape index: {}]
  %s5 = inlined_call_operand.vmem [shape: f32[32,1], index: 5, kind: input, shape index: {}]
  %s6 = inlined_call_operand.vmem [shape: f32[2,32,256], index: 6, kind: output, shape index: {}]
  %s7 = sld [smem:[#allocation0]]
  $region57: #{encoder_forward.1} parent=0
    _
  %s9 = ssub.s32 1, %s7
  %s10 = scalar_select 0, %s9, %s7
  loop: start=0, step=1, limit=4
  $region2: #{encoder_forward.1} parent=0 // loop_pre_header
    _
  $region3: #{encoder_forward.1} parent=0 // loop_header
    %s12 = sphi 0, %s16
    %p13 = scmp.ge.s32.totalorder %s12, 4
    %s20 = sphi 0, %s20
    %s22 = sphi 0, %s20
    %s23 = sphi 0, %s22
    %s37 = sphi 0, %s23
    %s43 = sphi 0, %s45
    %s46 = sphi 0, %s43
    %s47 = sphi 0, %s46
    %s63 = sphi 0, %s47
    %s67 = sphi 0, %s67
    %s69 = sphi 0, %s67
    %s70 = sphi 0, %s69
    %s84 = sphi 0, %s70
    %s88 = sphi 0, %s88
    %s90 = sphi 0, %s88
    %s91 = sphi 0, %s90
    %s105 = sphi 0, %s91
    %s109 = sphi 0, %s109
    %s111 = sphi 0, %s109
    %s112 = sphi 0, %s111
    %s126 = sphi 0, %s112
    %s130 = sphi 0, %s130
    %s132 = sphi 0, %s130
    %s133 = sphi 0, %s132
    %s147 = sphi 0, %s133
    %s153 = sphi 0, %s155
    %s156 = sphi 0, %s153
    %s157 = sphi 0, %s156
    %s173 = sphi 0, %s157
  $region4: #{encoder_forward.1} parent=0 // loop_header_branch
    %15 = sbr.rel (%p13) target = $region8
  $region5: #{encoder_forward.1} parent=0 // loop_body
    %s17 = ssub.s32 %s12, 1
    %s18 = ssub.s32 %s12, 2
    %s19 = sadd.s32 %s12, 1
    %s21 = sadd.s32 %s20, 1
    %p24 = scmp.eq.s32.totalorder %s12, 1
    %p25 = scmp.ne.s32.totalorder %s20, %s22
    %p26 = scmp.eq.s32.totalorder %s12, 0
    %p27 = por %p25, %p26
    %p28 = scmp.ne.s32.totalorder %s20, %s22
    %p29 = scmp.eq.s32.totalorder %s17, 1
    %p30 = por %p28, %p29
    %p31 = scmp.ne.s32.totalorder %s22, %s23
    %p32 = scmp.eq.s32.totalorder %s17, 0
    %p33 = por %p31, %p32
    %p34 = scmp.ne.s32.totalorder %s22, %s23
    %p35 = scmp.eq.s32.totalorder %s18, 1
    %p36 = por %p34, %p35
    %p38 = scmp.ne.s32.totalorder %s23, %s37
    %p39 = scmp.eq.s32.totalorder %s18, 0
    %p40 = por %p38, %p39
    %s41 = ssub.s32 %s12, %s19
    %p42 = scmp.eq.s32.totalorder %s41, 0
    %s44 = sadd.s32 %s43, 1
    %s45 = scalar_select %p42, %s43, %s44
    %p48 = pneg %p42
    %p49 = scmp.eq.s32.totalorder %s12, 1
    %p50 = por %p48, %p49
    %p51 = scmp.ne.s32.totalorder %s43, %s46
    %p52 = scmp.eq.s32.totalorder %s12, 0
    %p53 = por %p51, %p52
    %p54 = scmp.ne.s32.totalorder %s43, %s46
    %p55 = scmp.eq.s32.totalorder %s17, 1
    %p56 = por %p54, %p55
    %p57 = scmp.ne.s32.totalorder %s46, %s47
    %p58 = scmp.eq.s32.totalorder %s17, 0
    %p59 = por %p57, %p58
    %p60 = scmp.ne.s32.totalorder %s46, %s47
    %p61 = scmp.eq.s32.totalorder %s18, 1
    %p62 = por %p60, %p61
    %p64 = scmp.ne.s32.totalorder %s47, %s63
    %p65 = scmp.eq.s32.totalorder %s18, 0
    %p66 = por %p64, %p65
    %s68 = sadd.s32 %s67, 1
    %p71 = scmp.eq.s32.totalorder %s12, 1
    %p72 = scmp.ne.s32.totalorder %s67, %s69
    %p73 = scmp.eq.s32.totalorder %s12, 0
    %p74 = por %p72, %p73
    %p75 = scmp.ne.s32.totalorder %s67, %s69
    %p76 = scmp.eq.s32.totalorder %s17, 1
    %p77 = por %p75, %p76
    %p78 = scmp.ne.s32.totalorder %s69, %s70
    %p79 = scmp.eq.s32.totalorder %s17, 0
    %p80 = por %p78, %p79
    %p81 = scmp.ne.s32.totalorder %s69, %s70
    %p82 = scmp.eq.s32.totalorder %s18, 1
    %p83 = por %p81, %p82
    %p85 = scmp.ne.s32.totalorder %s70, %s84
    %p86 = scmp.eq.s32.totalorder %s18, 0
    %p87 = por %p85, %p86
    %s89 = sadd.s32 %s88, 1
    %p92 = scmp.eq.s32.totalorder %s12, 1
    %p93 = scmp.ne.s32.totalorder %s88, %s90
    %p94 = scmp.eq.s32.totalorder %s12, 0
    %p95 = por %p93, %p94
    %p96 = scmp.ne.s32.totalorder %s88, %s90
    %p97 = scmp.eq.s32.totalorder %s17, 1
    %p98 = por %p96, %p97
    %p99 = scmp.ne.s32.totalorder %s90, %s91
    %p100 = scmp.eq.s32.totalorder %s17, 0
    %p101 = por %p99, %p100
    %p102 = scmp.ne.s32.totalorder %s90, %s91
    %p103 = scmp.eq.s32.totalorder %s18, 1
    %p104 = por %p102, %p103
    %p106 = scmp.ne.s32.totalorder %s91, %s105
    %p107 = scmp.eq.s32.totalorder %s18, 0
    %p108 = por %p106, %p107
    %s110 = sadd.s32 %s109, 1
    %p113 = scmp.eq.s32.totalorder %s12, 1
    %p114 = scmp.ne.s32.totalorder %s109, %s111
    %p115 = scmp.eq.s32.totalorder %s12, 0
    %p116 = por %p114, %p115
    %p117 = scmp.ne.s32.totalorder %s109, %s111
    %p118 = scmp.eq.s32.totalorder %s17, 1
    %p119 = por %p117, %p118
    %p120 = scmp.ne.s32.totalorder %s111, %s112
    %p121 = scmp.eq.s32.totalorder %s17, 0
    %p122 = por %p120, %p121
    %p123 = scmp.ne.s32.totalorder %s111, %s112
    %p124 = scmp.eq.s32.totalorder %s18, 1
    %p125 = por %p123, %p124
    %p127 = scmp.ne.s32.totalorder %s112, %s126
    %p128 = scmp.eq.s32.totalorder %s18, 0
    %p129 = por %p127, %p128
    %s131 = sadd.s32 %s130, 1
    %p134 = scmp.eq.s32.totalorder %s12, 1
    %p135 = scmp.ne.s32.totalorder %s130, %s132
    %p136 = scmp.eq.s32.totalorder %s12, 0
    %p137 = por %p135, %p136
    %p138 = scmp.ne.s32.totalorder %s130, %s132
    %p139 = scmp.eq.s32.totalorder %s17, 1
    %p140 = por %p138, %p139
    %p141 = scmp.ne.s32.totalorder %s132, %s133
    %p142 = scmp.eq.s32.totalorder %s17, 0
    %p143 = por %p141, %p142
    %p144 = scmp.ne.s32.totalorder %s132, %s133
    %p145 = scmp.eq.s32.totalorder %s18, 1
    %p146 = por %p144, %p145
    %p148 = scmp.ne.s32.totalorder %s133, %s147
    %p149 = scmp.eq.s32.totalorder %s18, 0
    %p150 = por %p148, %p149
    %s151 = ssub.s32 %s12, %s19
    %p152 = scmp.eq.s32.totalorder %s151, 0
    %s154 = sadd.s32 %s153, 1
    %s155 = scalar_select %p152, %s153, %s154
    %p158 = pneg %p152
    %p159 = scmp.eq.s32.totalorder %s12, 1
    %p160 = por %p158, %p159
    %p161 = scmp.ne.s32.totalorder %s153, %s156
    %p162 = scmp.eq.s32.totalorder %s12, 0
    %p163 = por %p161, %p162
    %p164 = scmp.ne.s32.totalorder %s153, %s156
    %p165 = scmp.eq.s32.totalorder %s17, 1
    %p166 = por %p164, %p165
    %p167 = scmp.ne.s32.totalorder %s156, %s157
    %p168 = scmp.eq.s32.totalorder %s17, 0
    %p169 = por %p167, %p168
    %p170 = scmp.ne.s32.totalorder %s156, %s157
    %p171 = scmp.eq.s32.totalorder %s18, 1
    %p172 = por %p170, %p171
    %p174 = scmp.ne.s32.totalorder %s157, %s173
    %p175 = scmp.eq.s32.totalorder %s18, 0
    %p176 = por %p174, %p175
    %p177 = scmp.le.s32.totalorder 1, %s12
    %p178 = scmp.lt.s32.totalorder %s12, 3
    %p179 = pnand %p177, %p178
    %p180 = pneg %p179
    // Predicated region
    $region9: #{encoder_forward.1} parent=5 // pred_check
      _
    $region10: #{encoder_forward.1} parent=5 // pred_check_branch
      %182 = sbr.rel (%p179) target = $region12
    $region11: #{encoder_forward.1} parent=5 // pred_region
      %s183 = ssub.s32 %s12, 1
      // Predicated region
      $region13: #{encoder_forward.1} parent=11 // pred_check
        %p184 = pneg %p33
      $region14: #{encoder_forward.1} parent=11 // pred_check_branch
        %186 = sbr.rel (%p184) target = $region16
      $region15: #{encoder_forward.1} parent=11 // pred_region
        _
      $region16: #{encoder_forward.1} parent=11 // pred_fallthru
        _
      // Predicated region
      $region17: #{encoder_forward.1} parent=11 // pred_check
        %p187 = pneg %p80
      $region18: #{encoder_forward.1} parent=11 // pred_check_branch
        %189 = sbr.rel (%p187) target = $region20
      $region19: #{encoder_forward.1} parent=11 // pred_region
        _
      $region20: #{encoder_forward.1} parent=11 // pred_fallthru
        _
      // Predicated region
      $region21: #{encoder_forward.1} parent=11 // pred_check
        %p190 = pneg %p101
      $region22: #{encoder_forward.1} parent=11 // pred_check_branch
        %192 = sbr.rel (%p190) target = $region24
      $region23: #{encoder_forward.1} parent=11 // pred_region
        _
      $region24: #{encoder_forward.1} parent=11 // pred_fallthru
        _
      // Predicated region
      $region25: #{encoder_forward.1} parent=11 // pred_check
        %p193 = pneg %p122
      $region26: #{encoder_forward.1} parent=11 // pred_check_branch
        %195 = sbr.rel (%p193) target = $region28
      $region27: #{encoder_forward.1} parent=11 // pred_region
        _
      $region28: #{encoder_forward.1} parent=11 // pred_fallthru
        _
      // Predicated region
      $region29: #{encoder_forward.1} parent=11 // pred_check
        %p196 = pneg %p143
      $region30: #{encoder_forward.1} parent=11 // pred_check_branch
        %198 = sbr.rel (%p196) target = $region32
      $region31: #{encoder_forward.1} parent=11 // pred_region
        _
      $region32: #{encoder_forward.1} parent=11 // pred_fallthru
        _
    $region12: #{encoder_forward.1} parent=5 // pred_fallthru
      _
    %p199 = scmp.lt.s32.totalorder %s12, 2
    // Predicated region
    $region33: #{encoder_forward.1} parent=5 // pred_check
      %p200 = pneg %p199
    $region34: #{encoder_forward.1} parent=5 // pred_check_branch
      %202 = sbr.rel (%p200) target = $region36
    $region35: #{encoder_forward.1} parent=5 // pred_region
      // Predicated region
      $region37: #{encoder_forward.1} parent=35 // pred_check
        %p203 = pneg %p53
      $region38: #{encoder_forward.1} parent=35 // pred_check_branch
        %205 = sbr.rel (%p203) target = $region40
      $region39: #{encoder_forward.1} parent=35 // pred_region
        %p206 = scmp.lt.s32.totalorder %s12, 1
        %s207 = scalar_select %p206, %s12, 1
        %s208 = smul.addr %s207, 2
        %s209 = scalar_lea.vmem %s1, %s208
      $region40: #{encoder_forward.1} parent=35 // pred_fallthru
        _
    $region36: #{encoder_forward.1} parent=5 // pred_fallthru
      _
    %p210 = scmp.le.s32.totalorder 1, %s12
    %p211 = scmp.lt.s32.totalorder %s12, 3
    %p212 = pnand %p210, %p211
    %p213 = pneg %p212
    // Predicated region
    $region41: #{encoder_forward.1} parent=5 // pred_check
      _
    $region42: #{encoder_forward.1} parent=5 // pred_check_branch
      %215 = sbr.rel (%p212) target = $region44
    $region43: #{encoder_forward.1} parent=5 // pred_region
      %s216 = ssub.s32 %s12, 1
      %p217 = pneg %p33
      %p218 = pneg %p30
      %p219 = scmp.lt.s32.totalorder %s17, 1
      %s220 = scalar_select %p219, %s17, 1
      %s221 = smul.addr %s220, 2
      %s222 = scalar_lea.vmem %s1, %s221
      %p223 = pneg %p59
      %p224 = pneg %p56
      %p225 = pneg %p80
      %p226 = pneg %p77
      %p227 = pneg %p101
      %p228 = pneg %p98
      %p229 = pneg %p122
      %p230 = pneg %p119
      %p231 = pneg %p143
      %p232 = pneg %p140
      %p233 = pneg %p169
      %p234 = pneg %p166
      %p235 = scmp.lt.s32.totalorder %s17, 1
      %s236 = scalar_select %p235, %s17, 1
      %s237 = smul.addr %s236, 8
      %s238 = smul.addr %s237, 8
      %s239 = scalar_lea.vmem %s6, %s238
      %p240 = scmp.lt.s32.totalorder %s17, 1
      %s241 = scalar_select %p240, %s17, 1
      %s242 = smul.addr %s241, 2
      %s243 = scalar_lea.vmem %s1, %s242
      %p244 = scmp.lt.s32.totalorder %s17, 1
      %s245 = scalar_select %p244, %s17, 1
      %s246 = smul.addr %s245, 8
      %s247 = smul.addr %s246, 8
      %s248 = scalar_lea.vmem %s6, %s247
      %v249 = vld [vmem:[%s243] sm:$0x3]
      %v251 = vperm.slane %v249, 0
      %v252 = vperm.slane %v249, 1
      %255 = vrot.lane.b32.xlu0 %v251, 34
      %v256 = vpop.permute.xlu0 %255
      %257 = vrot.lane.b32.xlu0 %v252, 34
      %v258 = vpop.permute.xlu0 %257
      %v259 = vlaneseq
      %v260 = vand.u32 %v259, 127
      %vm261 = vcmp.lt.s32.totalorder %v260, 34
      %v262 = vsel %vm261, %v256, %v258
      %v263 = vsel %vm261, %v258, %v256
      %v264 = vld [vmem:[%s0] ss:$8 sm:$0x3]
      %v266 = vperm.slane %v264, 0
      %v267 = vperm.slane %v264, 1
      %v270 = vmul.f32 %v263, %v266
      %v271 = vmul.f32 %v262, %v267
      %272 = vrot.lane.b32.xlu0 %v251, 33
      %v273 = vpop.permute.xlu0 %272
      %274 = vrot.lane.b32.xlu0 %v252, 33
      %v275 = vpop.permute.xlu0 %274
      %vm276 = vcmp.lt.s32.totalorder %v260, 33
      %v277 = vsel %vm276, %v273, %v275
      %v278 = vsel %vm276, %v275, %v273
      %s279 = scalar_lea.vmem %s0, 1
      %v280 = vld [vmem:[%s279] ss:$8 sm:$0x3]
      %v282 = vperm.slane %v280, 0
      %v283 = vperm.slane %v280, 1
      %v286 = vmul.f32 %v278, %v282
      %v287 = vmul.f32 %v277, %v283
      %288 = vrot.lane.b32.xlu0 %v251, 32
      %v289 = vpop.permute.xlu0 %288
      %290 = vrot.lane.b32.xlu0 %v252, 32
      %v291 = vpop.permute.xlu0 %290
      %vm292 = vcmp.lt.s32.totalorder %v260, 32
      %v293 = vsel %vm292, %v289, %v291
      %v294 = vsel %vm292, %v291, %v289
      %s295 = scalar_lea.vmem %s0, 2
      %v296 = vld [vmem:[%s295] ss:$8 sm:$0x3]
      %v298 = vperm.slane %v296, 0
      %v299 = vperm.slane %v296, 1
      %v302 = vmul.f32 %v294, %v298
      %v303 = vmul.f32 %v293, %v299
      %304 = vrot.lane.b32.xlu0 %v251, 31
      %v305 = vpop.permute.xlu0 %304
      %306 = vrot.lane.b32.xlu0 %v252, 31
      %v307 = vpop.permute.xlu0 %306
      %vm308 = vcmp.lt.s32.totalorder %v260, 31
      %v309 = vsel %vm308, %v305, %v307
      %v310 = vsel %vm308, %v307, %v305
      %s311 = scalar_lea.vmem %s0, 3
      %v312 = vld [vmem:[%s311] ss:$8 sm:$0x3]
      %v314 = vperm.slane %v312, 0
      %v315 = vperm.slane %v312, 1
      %v318 = vmul.f32 %v310, %v314
      %v319 = vmul.f32 %v309, %v315
      %320 = vrot.lane.b32.xlu0 %v251, 30
      %v321 = vpop.permute.xlu0 %320
      %322 = vrot.lane.b32.xlu0 %v252, 30
      %v323 = vpop.permute.xlu0 %322
      %vm324 = vcmp.lt.s32.totalorder %v260, 30
      %v325 = vsel %vm324, %v321, %v323
      %v326 = vsel %vm324, %v323, %v321
      %s327 = scalar_lea.vmem %s0, 4
      %v328 = vld [vmem:[%s327] ss:$8 sm:$0x3]
      %v330 = vperm.slane %v328, 0
      %v331 = vperm.slane %v328, 1
      %v334 = vmul.f32 %v326, %v330
      %v335 = vmul.f32 %v325, %v331
      %v338 = vrot.slane %v286, 7
      %v339 = vrot.slane %v287, 7
      %v344 = vrot.slane %v302, 6
      %v345 = vrot.slane %v303, 6
      %v350 = vrot.slane %v318, 5
      %v351 = vrot.slane %v319, 5
      %v356 = vrot.slane %v334, 4
      %v357 = vrot.slane %v335, 4
      %vm360 = vcmask 1040384
      %v361 = vsel %vm360, %v270, %v338
      %v362 = vsel %vm360, %v271, %v339
      %vm363 = vcmask 1041408
      %v364 = vsel %vm363, %v361, %v344
      %v365 = vsel %vm363, %v362, %v345
      %vm366 = vcmask 1042432
      %v367 = vsel %vm366, %v364, %v350
      %v368 = vsel %vm366, %v365, %v351
      %vm369 = vcmask 1043456
      %v370 = vsel %vm369, %v367, %v356
      %v371 = vsel %vm369, %v368, %v357
      %v372 = vld [vmem:[%s2] sm:$0xff]
      %v373 = vld [vmem:[%s2 + $0x8] sm:$0xff]
      %374 = vrot.lane.b32.xlu0 %v251, 18
      %v375 = vpop.permute.xlu0 %374
      %376 = vrot.lane.b32.xlu0 %v252, 18
      %v377 = vpop.permute.xlu0 %376
      %vm378 = vcmp.lt.s32.totalorder %v260, 18
      %v379 = vsel %vm378, %v375, %v377
      %v380 = vsel %vm378, %v377, %v375
      %s381 = scalar_lea.vmem %s0, 5
      %v382 = vld [vmem:[%s381] ss:$8 sm:$0x3]
      %v384 = vperm.slane %v382, 0
      %v385 = vperm.slane %v382, 1
      %v388 = vmul.f32 %v380, %v384
      %v389 = vmul.f32 %v379, %v385
      %390 = vrot.lane.b32.xlu0 %v251, 17
      %v391 = vpop.permute.xlu0 %390
      %392 = vrot.lane.b32.xlu0 %v252, 17
      %v393 = vpop.permute.xlu0 %392
      %vm394 = vcmp.lt.s32.totalorder %v260, 17
      %v395 = vsel %vm394, %v391, %v393
      %v396 = vsel %vm394, %v393, %v391
      %s397 = scalar_lea.vmem %s0, 6
      %v398 = vld [vmem:[%s397] ss:$8 sm:$0x3]
      %v400 = vperm.slane %v398, 0
      %v401 = vperm.slane %v398, 1
      %v404 = vmul.f32 %v396, %v400
      %v405 = vmul.f32 %v395, %v401
      %406 = vrot.lane.b32.xlu0 %v251, 16
      %v407 = vpop.permute.xlu0 %406
      %408 = vrot.lane.b32.xlu0 %v252, 16
      %v409 = vpop.permute.xlu0 %408
      %vm410 = vcmp.lt.s32.totalorder %v260, 16
      %v411 = vsel %vm410, %v407, %v409
      %v412 = vsel %vm410, %v409, %v407
      %s413 = scalar_lea.vmem %s0, 7
      %v414 = vld [vmem:[%s413] ss:$8 sm:$0x3]
      %v416 = vperm.slane %v414, 0
      %v417 = vperm.slane %v414, 1
      %v420 = vmul.f32 %v412, %v416
      %v421 = vmul.f32 %v411, %v417
      %422 = vrot.lane.b32.xlu0 %v251, 15
      %v423 = vpop.permute.xlu0 %422
      %424 = vrot.lane.b32.xlu0 %v252, 15
      %v425 = vpop.permute.xlu0 %424
      %vm426 = vcmp.lt.s32.totalorder %v260, 15
      %v427 = vsel %vm426, %v423, %v425
      %v428 = vsel %vm426, %v425, %v423
      %s429 = scalar_lea.vmem %s0, 16
      %v430 = vld [vmem:[%s429] ss:$8 sm:$0x3]
      %v432 = vperm.slane %v430, 0
      %v433 = vperm.slane %v430, 1
      %v436 = vmul.f32 %v428, %v432
      %v437 = vmul.f32 %v427, %v433
      %438 = vrot.lane.b32.xlu0 %v251, 14
      %v439 = vpop.permute.xlu0 %438
      %440 = vrot.lane.b32.xlu0 %v252, 14
      %v441 = vpop.permute.xlu0 %440
      %vm442 = vcmp.lt.s32.totalorder %v260, 14
      %v443 = vsel %vm442, %v439, %v441
      %v444 = vsel %vm442, %v441, %v439
      %s445 = scalar_lea.vmem %s0, 17
      %v446 = vld [vmem:[%s445] ss:$8 sm:$0x3]
      %v448 = vperm.slane %v446, 0
      %v449 = vperm.slane %v446, 1
      %v452 = vmul.f32 %v444, %v448
      %v453 = vmul.f32 %v443, %v449
      %v456 = vrot.slane %v404, 7
      %v457 = vrot.slane %v405, 7
      %v462 = vrot.slane %v420, 6
      %v463 = vrot.slane %v421, 6
      %v468 = vrot.slane %v436, 5
      %v469 = vrot.slane %v437, 5
      %v474 = vrot.slane %v452, 4
      %v475 = vrot.slane %v453, 4
      %v478 = vsel %vm360, %v388, %v456
      %v479 = vsel %vm360, %v389, %v457
      %v480 = vsel %vm363, %v478, %v462
      %v481 = vsel %vm363, %v479, %v463
      %v482 = vsel %vm366, %v480, %v468
      %v483 = vsel %vm366, %v481, %v469
      %v484 = vsel %vm369, %v482, %v474
      %v485 = vsel %vm369, %v483, %v475
      %s486 = scalar_lea.vmem %s2, 16
      %v487 = vld [vmem:[%s486] sm:$0xff]
      %v488 = vld [vmem:[%s486 + $0x8] sm:$0xff]
      %vm489 = vcmask 39936
      %v491 = vsel %vm489, %v487, 0
      %v494 = vsel %vm489, %v488, 0
      %vm496 = vcmask 1044480
      %v498 = vsel %vm496, %v484, 0
      %v501 = vsel %vm496, %v485, 0
      %503 = vmatpush.msra.mxu0 0.0
      %504 = vmatpush.msra.mxu0 0.0
      %505 = vmatpush.msra.mxu0 0.0
      %506 = vmatpush.msra.mxu0 0.0
      %507 = vmatpush.msra.mxu0 0.0
      %508 = vmatpush.msra.mxu0 0.0
      %509 = vmatpush.msra.mxu0 0.0
      %510 = vmatpush.msra.mxu0 0.0
      %511 = vmatpush.msra.mxu0 0.0
      %512 = vmatpush.msra.mxu0 0.0
      %513 = vmatpush.msra.mxu0 0.0
      %514 = vmatpush.msra.mxu0 0.0
      %515 = vmatpush.msra.mxu0 0.0
      %516 = vmatpush.msra.mxu0 0.0
      %517 = vmatpush.msra.mxu0 0.0
      %518 = vmatpush.msra.mxu0 %v498
      %519 = vmatmul.f32.gmra.mxu0 %v491
      %v520 = vpop.f32.mrf.mxu0
      %v521 = vadd.f32 0.0, %v520
      %522 = vmatmul.f32.gmra.mxu0 %v494
      %v523 = vpop.f32.mrf.mxu0
      %v524 = vadd.f32 0.0, %v523
      %525 = vdwg.mxu0
      %526 = vmatpush.msra.mxu0 0.0
      %527 = vmatpush.msra.mxu0 0.0
      %528 = vmatpush.msra.mxu0 0.0
      %529 = vmatpush.msra.mxu0 0.0
      %530 = vmatpush.msra.mxu0 0.0
      %531 = vmatpush.msra.mxu0 0.0
      %532 = vmatpush.msra.mxu0 0.0
      %533 = vmatpush.msra.mxu0 0.0
      %534 = vmatpush.msra.mxu0 0.0
      %535 = vmatpush.msra.mxu0 0.0
      %536 = vmatpush.msra.mxu0 0.0
      %537 = vmatpush.msra.mxu0 0.0
      %538 = vmatpush.msra.mxu0 0.0
      %539 = vmatpush.msra.mxu0 0.0
      %540 = vmatpush.msra.mxu0 0.0
      %541 = vmatpush.msra.mxu0 %v501
      %542 = vmatmul.f32.gmra.mxu0 %v491
      %v543 = vpop.f32.mrf.mxu0
      %v544 = vadd.f32 0.0, %v543
      %545 = vmatmul.f32.gmra.mxu0 %v494
      %v546 = vpop.f32.mrf.mxu0
      %v547 = vadd.f32 0.0, %v546
      %548 = vdwg.mxu0
      %v550 = vsel %vm489, %v372, 0
      %v553 = vsel %vm489, %v373, 0
      %v556 = vsel %vm496, %v370, 0
      %v559 = vsel %vm496, %v371, 0
      %561 = vmatpush.msra.mxu0 0.0
      %562 = vmatpush.msra.mxu0 0.0
      %563 = vmatpush.msra.mxu0 0.0
      %564 = vmatpush.msra.mxu0 0.0
      %565 = vmatpush.msra.mxu0 0.0
      %566 = vmatpush.msra.mxu0 0.0
      %567 = vmatpush.msra.mxu0 0.0
      %568 = vmatpush.msra.mxu0 0.0
      %569 = vmatpush.msra.mxu0 0.0
      %570 = vmatpush.msra.mxu0 0.0
      %571 = vmatpush.msra.mxu0 0.0
      %572 = vmatpush.msra.mxu0 0.0
      %573 = vmatpush.msra.mxu0 0.0
      %574 = vmatpush.msra.mxu0 0.0
      %575 = vmatpush.msra.mxu0 0.0
      %576 = vmatpush.msra.mxu0 %v556
      %577 = vmatmul.f32.gmra.mxu0 %v550
      %v578 = vpop.f32.mrf.mxu0
      %v579 = vadd.f32 %v521, %v578
      %580 = vmatmul.f32.gmra.mxu0 %v553
      %v581 = vpop.f32.mrf.mxu0
      %v582 = vadd.f32 %v524, %v581
      %583 = vdwg.mxu0
      %584 = vmatpush.msra.mxu0 0.0
      %585 = vmatpush.msra.mxu0 0.0
      %586 = vmatpush.msra.mxu0 0.0
      %587 = vmatpush.msra.mxu0 0.0
      %588 = vmatpush.msra.mxu0 0.0
      %589 = vmatpush.msra.mxu0 0.0
      %590 = vmatpush.msra.mxu0 0.0
      %591 = vmatpush.msra.mxu0 0.0
      %592 = vmatpush.msra.mxu0 0.0
      %593 = vmatpush.msra.mxu0 0.0
      %594 = vmatpush.msra.mxu0 0.0
      %595 = vmatpush.msra.mxu0 0.0
      %596 = vmatpush.msra.mxu0 0.0
      %597 = vmatpush.msra.mxu0 0.0
      %598 = vmatpush.msra.mxu0 0.0
      %599 = vmatpush.msra.mxu0 %v559
      %600 = vmatmul.f32.gmra.mxu0 %v550
      %v601 = vpop.f32.mrf.mxu0
      %v602 = vadd.f32 %v544, %v601
      %603 = vmatmul.f32.gmra.mxu0 %v553
      %v604 = vpop.f32.mrf.mxu0
      %v605 = vadd.f32 %v547, %v604
      %606 = vdwg.mxu0
      %607 = vrot.lane.b32.xlu0 %v251, 2
      %v608 = vpop.permute.xlu0 %607
      %609 = vrot.lane.b32.xlu0 %v252, 2
      %v610 = vpop.permute.xlu0 %609
      %vm611 = vcmp.lt.s32.totalorder %v260, 2
      %v612 = vsel %vm611, %v608, %v610
      %v613 = vsel %vm611, %v610, %v608
      %s614 = scalar_lea.vmem %s0, 18
      %v615 = vld [vmem:[%s614] ss:$8 sm:$0x3]
      %v617 = vperm.slane %v615, 0
      %v618 = vperm.slane %v615, 1
      %v621 = vmul.f32 %v613, %v617
      %v622 = vmul.f32 %v612, %v618
      %623 = vrot.lane.b32.xlu0 %v251, 1
      %v624 = vpop.permute.xlu0 %623
      %625 = vrot.lane.b32.xlu0 %v252, 1
      %v626 = vpop.permute.xlu0 %625
      %vm627 = vcmp.lt.s32.totalorder %v260, 1
      %v628 = vsel %vm627, %v624, %v626
      %v629 = vsel %vm627, %v626, %v624
      %s630 = scalar_lea.vmem %s0, 19
      %v631 = vld [vmem:[%s630] ss:$8 sm:$0x3]
      %v633 = vperm.slane %v631, 0
      %v634 = vperm.slane %v631, 1
      %v637 = vmul.f32 %v629, %v633
      %v638 = vmul.f32 %v628, %v634
      %639 = vrot.lane.b32.xlu0 %v251, 127
      %v640 = vpop.permute.xlu0 %639
      %641 = vrot.lane.b32.xlu0 %v252, 127
      %v642 = vpop.permute.xlu0 %641
      %vm643 = vcmp.lt.s32.totalorder %v260, 127
      %v644 = vsel %vm643, %v640, %v642
      %v645 = vsel %vm643, %v642, %v640
      %s646 = scalar_lea.vmem %s0, 21
      %v647 = vld [vmem:[%s646] ss:$8 sm:$0x3]
      %v649 = vperm.slane %v647, 0
      %v650 = vperm.slane %v647, 1
      %v653 = vmul.f32 %v644, %v649
      %v654 = vmul.f32 %v645, %v650
      %655 = vrot.lane.b32.xlu0 %v251, 126
      %v656 = vpop.permute.xlu0 %655
      %657 = vrot.lane.b32.xlu0 %v252, 126
      %v658 = vpop.permute.xlu0 %657
      %vm659 = vcmp.lt.s32.totalorder %v260, 126
      %v660 = vsel %vm659, %v656, %v658
      %v661 = vsel %vm659, %v658, %v656
      %s662 = scalar_lea.vmem %s0, 22
      %v663 = vld [vmem:[%s662] ss:$8 sm:$0x3]
      %v665 = vperm.slane %v663, 0
      %v666 = vperm.slane %v663, 1
      %v669 = vmul.f32 %v660, %v665
      %v670 = vmul.f32 %v661, %v666
      %v673 = vrot.slane %v637, 7
      %v674 = vrot.slane %v638, 7
      %v679 = vrot.slane %v653, 5
      %v680 = vrot.slane %v654, 5
      %v685 = vrot.slane %v669, 4
      %v686 = vrot.slane %v670, 4
      %v689 = vsel %vm360, %v621, %v673
      %v690 = vsel %vm360, %v622, %v674
      %v691 = vsel %vm363, %v689, %v251
      %v692 = vsel %vm363, %v690, %v252
      %v693 = vsel %vm366, %v691, %v679
      %v694 = vsel %vm366, %v692, %v680
      %v695 = vsel %vm369, %v693, %v685
      %v696 = vsel %vm369, %v694, %v686
      %s697 = scalar_lea.vmem %s2, 32
      %v698 = vld [vmem:[%s697] sm:$0xff]
      %v699 = vld [vmem:[%s697 + $0x8] sm:$0xff]
      %v701 = vsel %vm489, %v698, 0
      %v704 = vsel %vm489, %v699, 0
      %v707 = vsel %vm496, %v695, 0
      %v710 = vsel %vm496, %v696, 0
      %712 = vmatpush.msra.mxu0 0.0
      %713 = vmatpush.msra.mxu0 0.0
      %714 = vmatpush.msra.mxu0 0.0
      %715 = vmatpush.msra.mxu0 0.0
      %716 = vmatpush.msra.mxu0 0.0
      %717 = vmatpush.msra.mxu0 0.0
      %718 = vmatpush.msra.mxu0 0.0
      %719 = vmatpush.msra.mxu0 0.0
      %720 = vmatpush.msra.mxu0 0.0
      %721 = vmatpush.msra.mxu0 0.0
      %722 = vmatpush.msra.mxu0 0.0
      %723 = vmatpush.msra.mxu0 0.0
      %724 = vmatpush.msra.mxu0 0.0
      %725 = vmatpush.msra.mxu0 0.0
      %726 = vmatpush.msra.mxu0 0.0
      %727 = vmatpush.msra.mxu0 %v707
      %728 = vmatmul.f32.gmra.mxu0 %v701
      %v729 = vpop.f32.mrf.mxu0
      %v730 = vadd.f32 0.0, %v729
      %731 = vmatmul.f32.gmra.mxu0 %v704
      %v732 = vpop.f32.mrf.mxu0
      %v733 = vadd.f32 0.0, %v732
      %734 = vdwg.mxu0
      %735 = vmatpush.msra.mxu0 0.0
      %736 = vmatpush.msra.mxu0 0.0
      %737 = vmatpush.msra.mxu0 0.0
      %738 = vmatpush.msra.mxu0 0.0
      %739 = vmatpush.msra.mxu0 0.0
      %740 = vmatpush.msra.mxu0 0.0
      %741 = vmatpush.msra.mxu0 0.0
      %742 = vmatpush.msra.mxu0 0.0
      %743 = vmatpush.msra.mxu0 0.0
      %744 = vmatpush.msra.mxu0 0.0
      %745 = vmatpush.msra.mxu0 0.0
      %746 = vmatpush.msra.mxu0 0.0
      %747 = vmatpush.msra.mxu0 0.0
      %748 = vmatpush.msra.mxu0 0.0
      %749 = vmatpush.msra.mxu0 0.0
      %750 = vmatpush.msra.mxu0 %v710
      %751 = vmatmul.f32.gmra.mxu0 %v701
      %v752 = vpop.f32.mrf.mxu0
      %v753 = vadd.f32 0.0, %v752
      %754 = vmatmul.f32.gmra.mxu0 %v704
      %v755 = vpop.f32.mrf.mxu0
      %v756 = vadd.f32 0.0, %v755
      %757 = vdwg.mxu0
      %v758 = vadd.f32 %v579, %v730
      %v759 = vadd.f32 %v602, %v753
      %v760 = vadd.f32 %v582, %v733
      %v761 = vadd.f32 %v605, %v756
      %762 = vrot.lane.b32.xlu0 %v251, 114
      %v763 = vpop.permute.xlu0 %762
      %764 = vrot.lane.b32.xlu0 %v252, 114
      %v765 = vpop.permute.xlu0 %764
      %vm766 = vcmp.lt.s32.totalorder %v260, 114
      %v767 = vsel %vm766, %v763, %v765
      %v768 = vsel %vm766, %v765, %v763
      %s769 = scalar_lea.vmem %s0, 23
      %v770 = vld [vmem:[%s769] ss:$8 sm:$0x3]
      %v772 = vperm.slane %v770, 0
      %v773 = vperm.slane %v770, 1
      %v776 = vmul.f32 %v767, %v772
      %v777 = vmul.f32 %v768, %v773
      %778 = vrot.lane.b32.xlu0 %v251, 113
      %v779 = vpop.permute.xlu0 %778
      %780 = vrot.lane.b32.xlu0 %v252, 113
      %v781 = vpop.permute.xlu0 %780
      %vm782 = vcmp.lt.s32.totalorder %v260, 113
      %v783 = vsel %vm782, %v779, %v781
      %v784 = vsel %vm782, %v781, %v779
      %s785 = scalar_lea.vmem %s0, 32
      %v786 = vld [vmem:[%s785] ss:$8 sm:$0x3]
      %v788 = vperm.slane %v786, 0
      %v789 = vperm.slane %v786, 1
      %v792 = vmul.f32 %v783, %v788
      %v793 = vmul.f32 %v784, %v789
      %794 = vrot.lane.b32.xlu0 %v251, 112
      %v795 = vpop.permute.xlu0 %794
      %796 = vrot.lane.b32.xlu0 %v252, 112
      %v797 = vpop.permute.xlu0 %796
      %vm798 = vcmp.lt.s32.totalorder %v260, 112
      %v799 = vsel %vm798, %v795, %v797
      %v800 = vsel %vm798, %v797, %v795
      %s801 = scalar_lea.vmem %s0, 33
      %v802 = vld [vmem:[%s801] ss:$8 sm:$0x3]
      %v804 = vperm.slane %v802, 0
      %v805 = vperm.slane %v802, 1
      %v808 = vmul.f32 %v799, %v804
      %v809 = vmul.f32 %v800, %v805
      %810 = vrot.lane.b32.xlu0 %v251, 111
      %v811 = vpop.permute.xlu0 %810
      %812 = vrot.lane.b32.xlu0 %v252, 111
      %v813 = vpop.permute.xlu0 %812
      %vm814 = vcmp.lt.s32.totalorder %v260, 111
      %v815 = vsel %vm814, %v811, %v813
      %v816 = vsel %vm814, %v813, %v811
      %s817 = scalar_lea.vmem %s0, 34
      %v818 = vld [vmem:[%s817] ss:$8 sm:$0x3]
      %v820 = vperm.slane %v818, 0
      %v821 = vperm.slane %v818, 1
      %v824 = vmul.f32 %v815, %v820
      %v825 = vmul.f32 %v816, %v821
      %826 = vrot.lane.b32.xlu0 %v251, 110
      %v827 = vpop.permute.xlu0 %826
      %828 = vrot.lane.b32.xlu0 %v252, 110
      %v829 = vpop.permute.xlu0 %828
      %vm830 = vcmp.lt.s32.totalorder %v260, 110
      %v831 = vsel %vm830, %v827, %v829
      %v832 = vsel %vm830, %v829, %v827
      %s833 = scalar_lea.vmem %s0, 35
      %v834 = vld [vmem:[%s833] ss:$8 sm:$0x3]
      %v836 = vperm.slane %v834, 0
      %v837 = vperm.slane %v834, 1
      %v840 = vmul.f32 %v831, %v836
      %v841 = vmul.f32 %v832, %v837
      %v844 = vrot.slane %v792, 7
      %v845 = vrot.slane %v793, 7
      %v850 = vrot.slane %v808, 6
      %v851 = vrot.slane %v809, 6
      %v856 = vrot.slane %v824, 5
      %v857 = vrot.slane %v825, 5
      %v862 = vrot.slane %v840, 4
      %v863 = vrot.slane %v841, 4
      %v866 = vsel %vm360, %v776, %v844
      %v867 = vsel %vm360, %v777, %v845
      %v868 = vsel %vm363, %v866, %v850
      %v869 = vsel %vm363, %v867, %v851
      %v870 = vsel %vm366, %v868, %v856
      %v871 = vsel %vm366, %v869, %v857
      %v872 = vsel %vm369, %v870, %v862
      %v873 = vsel %vm369, %v871, %v863
      %s874 = scalar_lea.vmem %s2, 48
      %v875 = vld [vmem:[%s874] sm:$0xff]
      %v876 = vld [vmem:[%s874 + $0x8] sm:$0xff]
      %v878 = vsel %vm489, %v875, 0
      %v881 = vsel %vm489, %v876, 0
      %v884 = vsel %vm496, %v872, 0
      %v887 = vsel %vm496, %v873, 0
      %889 = vmatpush.msra.mxu0 0.0
      %890 = vmatpush.msra.mxu0 0.0
      %891 = vmatpush.msra.mxu0 0.0
      %892 = vmatpush.msra.mxu0 0.0
      %893 = vmatpush.msra.mxu0 0.0
      %894 = vmatpush.msra.mxu0 0.0
      %895 = vmatpush.msra.mxu0 0.0
      %896 = vmatpush.msra.mxu0 0.0
      %897 = vmatpush.msra.mxu0 0.0
      %898 = vmatpush.msra.mxu0 0.0
      %899 = vmatpush.msra.mxu0 0.0
      %900 = vmatpush.msra.mxu0 0.0
      %901 = vmatpush.msra.mxu0 0.0
      %902 = vmatpush.msra.mxu0 0.0
      %903 = vmatpush.msra.mxu0 0.0
      %904 = vmatpush.msra.mxu0 %v884
      %905 = vmatmul.f32.gmra.mxu0 %v878
      %v906 = vpop.f32.mrf.mxu0
      %v907 = vadd.f32 0.0, %v906
      %908 = vmatmul.f32.gmra.mxu0 %v881
      %v909 = vpop.f32.mrf.mxu0
      %v910 = vadd.f32 0.0, %v909
      %911 = vdwg.mxu0
      %912 = vmatpush.msra.mxu0 0.0
      %913 = vmatpush.msra.mxu0 0.0
      %914 = vmatpush.msra.mxu0 0.0
      %915 = vmatpush.msra.mxu0 0.0
      %916 = vmatpush.msra.mxu0 0.0
      %917 = vmatpush.msra.mxu0 0.0
      %918 = vmatpush.msra.mxu0 0.0
      %919 = vmatpush.msra.mxu0 0.0
      %920 = vmatpush.msra.mxu0 0.0
      %921 = vmatpush.msra.mxu0 0.0
      %922 = vmatpush.msra.mxu0 0.0
      %923 = vmatpush.msra.mxu0 0.0
      %924 = vmatpush.msra.mxu0 0.0
      %925 = vmatpush.msra.mxu0 0.0
      %926 = vmatpush.msra.mxu0 0.0
      %927 = vmatpush.msra.mxu0 %v887
      %928 = vmatmul.f32.gmra.mxu0 %v878
      %v929 = vpop.f32.mrf.mxu0
      %v930 = vadd.f32 0.0, %v929
      %931 = vmatmul.f32.gmra.mxu0 %v881
      %v932 = vpop.f32.mrf.mxu0
      %v933 = vadd.f32 0.0, %v932
      %934 = vdwg.mxu0
      %v935 = vadd.f32 %v758, %v907
      %v936 = vadd.f32 %v759, %v930
      %v937 = vadd.f32 %v760, %v910
      %v938 = vadd.f32 %v761, %v933
      %939 = vrot.lane.b32.xlu0 %v251, 98
      %v940 = vpop.permute.xlu0 %939
      %941 = vrot.lane.b32.xlu0 %v252, 98
      %v942 = vpop.permute.xlu0 %941
      %vm943 = vcmp.lt.s32.totalorder %v260, 98
      %v944 = vsel %vm943, %v940, %v942
      %v945 = vsel %vm943, %v942, %v940
      %s946 = scalar_lea.vmem %s0, 36
      %v947 = vld [vmem:[%s946] ss:$8 sm:$0x3]
      %v949 = vperm.slane %v947, 0
      %v950 = vperm.slane %v947, 1
      %v953 = vmul.f32 %v944, %v949
      %v954 = vmul.f32 %v945, %v950
      %955 = vrot.lane.b32.xlu0 %v251, 97
      %v956 = vpop.permute.xlu0 %955
      %957 = vrot.lane.b32.xlu0 %v252, 97
      %v958 = vpop.permute.xlu0 %957
      %vm959 = vcmp.lt.s32.totalorder %v260, 97
      %v960 = vsel %vm959, %v956, %v958
      %v961 = vsel %vm959, %v958, %v956
      %s962 = scalar_lea.vmem %s0, 37
      %v963 = vld [vmem:[%s962] ss:$8 sm:$0x3]
      %v965 = vperm.slane %v963, 0
      %v966 = vperm.slane %v963, 1
      %v969 = vmul.f32 %v960, %v965
      %v970 = vmul.f32 %v961, %v966
      %971 = vrot.lane.b32.xlu0 %v251, 96
      %v972 = vpop.permute.xlu0 %971
      %973 = vrot.lane.b32.xlu0 %v252, 96
      %v974 = vpop.permute.xlu0 %973
      %vm975 = vcmp.lt.s32.totalorder %v260, 96
      %v976 = vsel %vm975, %v972, %v974
      %v977 = vsel %vm975, %v974, %v972
      %s978 = scalar_lea.vmem %s0, 38
      %v979 = vld [vmem:[%s978] ss:$8 sm:$0x3]
      %v981 = vperm.slane %v979, 0
      %v982 = vperm.slane %v979, 1
      %v985 = vmul.f32 %v976, %v981
      %v986 = vmul.f32 %v977, %v982
      %987 = vrot.lane.b32.xlu0 %v251, 95
      %v988 = vpop.permute.xlu0 %987
      %989 = vrot.lane.b32.xlu0 %v252, 95
      %v990 = vpop.permute.xlu0 %989
      %vm991 = vcmp.lt.s32.totalorder %v260, 95
      %v992 = vsel %vm991, %v988, %v990
      %v993 = vsel %vm991, %v990, %v988
      %s994 = scalar_lea.vmem %s0, 39
      %v995 = vld [vmem:[%s994] ss:$8 sm:$0x3]
      %v997 = vperm.slane %v995, 0
      %v998 = vperm.slane %v995, 1
      %v1001 = vmul.f32 %v992, %v997
      %v1002 = vmul.f32 %v993, %v998
      %1003 = vrot.lane.b32.xlu0 %v251, 94
      %v1004 = vpop.permute.xlu0 %1003
      %1005 = vrot.lane.b32.xlu0 %v252, 94
      %v1006 = vpop.permute.xlu0 %1005
      %vm1007 = vcmp.lt.s32.totalorder %v260, 94
      %v1008 = vsel %vm1007, %v1004, %v1006
      %v1009 = vsel %vm1007, %v1006, %v1004
      %s1010 = scalar_lea.vmem %s0, 48
      %v1011 = vld [vmem:[%s1010] ss:$8 sm:$0x3]
      %v1013 = vperm.slane %v1011, 0
      %v1014 = vperm.slane %v1011, 1
      %v1017 = vmul.f32 %v1008, %v1013
      %v1018 = vmul.f32 %v1009, %v1014
      %v1021 = vrot.slane %v969, 7
      %v1022 = vrot.slane %v970, 7
      %v1027 = vrot.slane %v985, 6
      %v1028 = vrot.slane %v986, 6
      %v1033 = vrot.slane %v1001, 5
      %v1034 = vrot.slane %v1002, 5
      %v1039 = vrot.slane %v1017, 4
      %v1040 = vrot.slane %v1018, 4
      %v1043 = vsel %vm360, %v953, %v1021
      %v1044 = vsel %vm360, %v954, %v1022
      %v1045 = vsel %vm363, %v1043, %v1027
      %v1046 = vsel %vm363, %v1044, %v1028
      %v1047 = vsel %vm366, %v1045, %v1033
      %v1048 = vsel %vm366, %v1046, %v1034
      %v1049 = vsel %vm369, %v1047, %v1039
      %v1050 = vsel %vm369, %v1048, %v1040
      %s1051 = scalar_lea.vmem %s2, 64
      %v1052 = vld [vmem:[%s1051] sm:$0xff]
      %v1053 = vld [vmem:[%s1051 + $0x8] sm:$0xff]
      %v1055 = vsel %vm489, %v1052, 0
      %v1058 = vsel %vm489, %v1053, 0
      %v1061 = vsel %vm496, %v1049, 0
      %v1064 = vsel %vm496, %v1050, 0
      %1066 = vmatpush.msra.mxu0 0.0
      %1067 = vmatpush.msra.mxu0 0.0
      %1068 = vmatpush.msra.mxu0 0.0
      %1069 = vmatpush.msra.mxu0 0.0
      %1070 = vmatpush.msra.mxu0 0.0
      %1071 = vmatpush.msra.mxu0 0.0
      %1072 = vmatpush.msra.mxu0 0.0
      %1073 = vmatpush.msra.mxu0 0.0
      %1074 = vmatpush.msra.mxu0 0.0
      %1075 = vmatpush.msra.mxu0 0.0
      %1076 = vmatpush.msra.mxu0 0.0
      %1077 = vmatpush.msra.mxu0 0.0
      %1078 = vmatpush.msra.mxu0 0.0
      %1079 = vmatpush.msra.mxu0 0.0
      %1080 = vmatpush.msra.mxu0 0.0
      %1081 = vmatpush.msra.mxu0 %v1061
      %1082 = vmatmul.f32.gmra.mxu0 %v1055
      %v1083 = vpop.f32.mrf.mxu0
      %v1084 = vadd.f32 0.0, %v1083
      %1085 = vmatmul.f32.gmra.mxu0 %v1058
      %v1086 = vpop.f32.mrf.mxu0
      %v1087 = vadd.f32 0.0, %v1086
      %1088 = vdwg.mxu0
      %1089 = vmatpush.msra.mxu0 0.0
      %1090 = vmatpush.msra.mxu0 0.0
      %1091 = vmatpush.msra.mxu0 0.0
      %1092 = vmatpush.msra.mxu0 0.0
      %1093 = vmatpush.msra.mxu0 0.0
      %1094 = vmatpush.msra.mxu0 0.0
      %1095 = vmatpush.msra.mxu0 0.0
      %1096 = vmatpush.msra.mxu0 0.0
      %1097 = vmatpush.msra.mxu0 0.0
      %1098 = vmatpush.msra.mxu0 0.0
      %1099 = vmatpush.msra.mxu0 0.0
      %1100 = vmatpush.msra.mxu0 0.0
      %1101 = vmatpush.msra.mxu0 0.0
      %1102 = vmatpush.msra.mxu0 0.0
      %1103 = vmatpush.msra.mxu0 0.0
      %1104 = vmatpush.msra.mxu0 %v1064
      %1105 = vmatmul.f32.gmra.mxu0 %v1055
      %v1106 = vpop.f32.mrf.mxu0
      %v1107 = vadd.f32 0.0, %v1106
      %1108 = vmatmul.f32.gmra.mxu0 %v1058
      %v1109 = vpop.f32.mrf.mxu0
      %v1110 = vadd.f32 0.0, %v1109
      %1111 = vdwg.mxu0
      %v1112 = vadd.f32 %v935, %v1084
      %v1113 = vadd.f32 %v936, %v1107
      %v1114 = vadd.f32 %v937, %v1087
      %v1115 = vadd.f32 %v938, %v1110
      %v1116 = vld [vmem:[%s3] sm:$0xff]
      %v1117 = vld [vmem:[%s3 + $0x8] sm:$0xff]
      %1119 = vset.pattern.permute.xlu0 0
      %1120 = vperm.xlu0 %1119, %v1116
      %v1121 = vpop.permute.xlu0 %1120
      %1124 = vset.pattern.permute.xlu0 0
      %1125 = vperm.xlu0 %1124, %v1117
      %v1126 = vpop.permute.xlu0 %1125
      %v1128 = vadd.f32 %v1112, %v1121
      %v1129 = vadd.f32 %v1113, %v1121
      %v1130 = vadd.f32 %v1114, %v1126
      %v1131 = vadd.f32 %v1115, %v1126
      %v1132 = vmax.f32 %v1128, 0.0
      %v1133 = vmax.f32 %v1129, 0.0
      %v1134 = vmax.f32 %v1130, 0.0
      %v1135 = vmax.f32 %v1131, 0.0
      %1136 = vrot.lane.b32.xlu0 %v1132, 1
      %v1137 = vpop.permute.xlu0 %1136
      %1138 = vrot.lane.b32.xlu0 %v1134, 1
      %v1139 = vpop.permute.xlu0 %1138
      %1140 = vrot.lane.b32.xlu0 %v1133, 1
      %v1141 = vpop.permute.xlu0 %1140
      %1142 = vrot.lane.b32.xlu0 %v1135, 1
      %v1143 = vpop.permute.xlu0 %1142
      %v1144 = vsel %vm627, %v1137, %v1141
      %v1145 = vsel %vm627, %v1139, %v1143
      %v1146 = vsel %vm627, %v1141, %v1137
      %v1147 = vsel %vm627, %v1143, %v1139
      %v1148 = vmul.f32 %v1146, %v633
      %v1149 = vmul.f32 %v1144, %v634
      %v1150 = vmul.f32 %v1147, %v633
      %v1151 = vmul.f32 %v1145, %v634
      %1152 = vrot.lane.b32.xlu0 %v1132, 127
      %v1153 = vpop.permute.xlu0 %1152
      %1154 = vrot.lane.b32.xlu0 %v1134, 127
      %v1155 = vpop.permute.xlu0 %1154
      %1156 = vrot.lane.b32.xlu0 %v1133, 127
      %v1157 = vpop.permute.xlu0 %1156
      %1158 = vrot.lane.b32.xlu0 %v1135, 127
      %v1159 = vpop.permute.xlu0 %1158
      %v1160 = vsel %vm643, %v1153, %v1157
      %v1161 = vsel %vm643, %v1155, %v1159
      %v1162 = vsel %vm643, %v1157, %v1153
      %v1163 = vsel %vm643, %v1159, %v1155
      %v1164 = vmul.f32 %v1160, %v649
      %v1165 = vmul.f32 %v1162, %v650
      %v1166 = vmul.f32 %v1161, %v649
      %v1167 = vmul.f32 %v1163, %v650
      %v1168 = vmax.f32 %v1148, %v1164
      %v1169 = vmax.f32 %v1149, %v1165
      %v1170 = vmax.f32 %v1150, %v1166
      %v1171 = vmax.f32 %v1151, %v1167
      %v1172 = vmax.f32 %v1132, %v1168
      %v1173 = vmax.f32 %v1133, %v1169
      %v1174 = vmax.f32 %v1134, %v1170
      %v1175 = vmax.f32 %v1135, %v1171
      %1176 = vrot.lane.b32.xlu0 %v1172, 16
      %v1177 = vpop.permute.xlu0 %1176
      %1178 = vrot.lane.b32.xlu0 %v1174, 16
      %v1179 = vpop.permute.xlu0 %1178
      %1180 = vrot.lane.b32.xlu0 %v1173, 16
      %v1181 = vpop.permute.xlu0 %1180
      %1182 = vrot.lane.b32.xlu0 %v1175, 16
      %v1183 = vpop.permute.xlu0 %1182
      %v1184 = vsel %vm410, %v1177, %v1181
      %v1185 = vsel %vm410, %v1179, %v1183
      %v1186 = vsel %vm410, %v1181, %v1177
      %v1187 = vsel %vm410, %v1183, %v1179
      %v1188 = vmul.f32 %v1186, %v416
      %v1189 = vmul.f32 %v1184, %v417
      %v1190 = vmul.f32 %v1187, %v416
      %v1191 = vmul.f32 %v1185, %v417
      %1192 = vrot.lane.b32.xlu0 %v1172, 112
      %v1193 = vpop.permute.xlu0 %1192
      %1194 = vrot.lane.b32.xlu0 %v1174, 112
      %v1195 = vpop.permute.xlu0 %1194
      %1196 = vrot.lane.b32.xlu0 %v1173, 112
      %v1197 = vpop.permute.xlu0 %1196
      %1198 = vrot.lane.b32.xlu0 %v1175, 112
      %v1199 = vpop.permute.xlu0 %1198
      %v1200 = vsel %vm798, %v1193, %v1197
      %v1201 = vsel %vm798, %v1195, %v1199
      %v1202 = vsel %vm798, %v1197, %v1193
      %v1203 = vsel %vm798, %v1199, %v1195
      %v1204 = vmul.f32 %v1200, %v804
      %v1205 = vmul.f32 %v1202, %v805
      %v1206 = vmul.f32 %v1201, %v804
      %v1207 = vmul.f32 %v1203, %v805
      %v1208 = vmax.f32 %v1188, %v1204
      %v1209 = vmax.f32 %v1189, %v1205
      %v1210 = vmax.f32 %v1190, %v1206
      %v1211 = vmax.f32 %v1191, %v1207
      %v1212 = vmax.f32 %v1172, %v1208
      %v1213 = vmax.f32 %v1173, %v1209
      %v1214 = vmax.f32 %v1174, %v1210
      %v1215 = vmax.f32 %v1175, %v1211
      %1216 = vrot.lane.b32.xlu0 %v1212, 34
      %v1217 = vpop.permute.xlu0 %1216
      %1218 = vrot.lane.b32.xlu0 %v1214, 34
      %v1219 = vpop.permute.xlu0 %1218
      %1220 = vrot.lane.b32.xlu0 %v1213, 34
      %v1221 = vpop.permute.xlu0 %1220
      %1222 = vrot.lane.b32.xlu0 %v1215, 34
      %v1223 = vpop.permute.xlu0 %1222
      %v1224 = vsel %vm261, %v1217, %v1221
      %v1225 = vsel %vm261, %v1219, %v1223
      %v1226 = vsel %vm261, %v1221, %v1217
      %v1227 = vsel %vm261, %v1223, %v1219
      %v1228 = vmul.f32 %v1226, %v266
      %v1229 = vmul.f32 %v1224, %v267
      %v1230 = vmul.f32 %v1227, %v266
      %v1231 = vmul.f32 %v1225, %v267
      %1232 = vrot.lane.b32.xlu0 %v1212, 33
      %v1233 = vpop.permute.xlu0 %1232
      %1234 = vrot.lane.b32.xlu0 %v1214, 33
      %v1235 = vpop.permute.xlu0 %1234
      %1236 = vrot.lane.b32.xlu0 %v1213, 33
      %v1237 = vpop.permute.xlu0 %1236
      %1238 = vrot.lane.b32.xlu0 %v1215, 33
      %v1239 = vpop.permute.xlu0 %1238
      %v1240 = vsel %vm276, %v1233, %v1237
      %v1241 = vsel %vm276, %v1235, %v1239
      %v1242 = vsel %vm276, %v1237, %v1233
      %v1243 = vsel %vm276, %v1239, %v1235
      %v1244 = vmul.f32 %v1242, %v282
      %v1245 = vmul.f32 %v1240, %v283
      %v1246 = vmul.f32 %v1243, %v282
      %v1247 = vmul.f32 %v1241, %v283
      %1248 = vrot.lane.b32.xlu0 %v1212, 32
      %v1249 = vpop.permute.xlu0 %1248
      %1250 = vrot.lane.b32.xlu0 %v1214, 32
      %v1251 = vpop.permute.xlu0 %1250
      %1252 = vrot.lane.b32.xlu0 %v1213, 32
      %v1253 = vpop.permute.xlu0 %1252
      %1254 = vrot.lane.b32.xlu0 %v1215, 32
      %v1255 = vpop.permute.xlu0 %1254
      %v1256 = vsel %vm292, %v1249, %v1253
      %v1257 = vsel %vm292, %v1251, %v1255
      %v1258 = vsel %vm292, %v1253, %v1249
      %v1259 = vsel %vm292, %v1255, %v1251
      %v1260 = vmul.f32 %v1258, %v298
      %v1261 = vmul.f32 %v1256, %v299
      %v1262 = vmul.f32 %v1259, %v298
      %v1263 = vmul.f32 %v1257, %v299
      %1264 = vrot.lane.b32.xlu0 %v1212, 31
      %v1265 = vpop.permute.xlu0 %1264
      %1266 = vrot.lane.b32.xlu0 %v1214, 31
      %v1267 = vpop.permute.xlu0 %1266
      %1268 = vrot.lane.b32.xlu0 %v1213, 31
      %v1269 = vpop.permute.xlu0 %1268
      %1270 = vrot.lane.b32.xlu0 %v1215, 31
      %v1271 = vpop.permute.xlu0 %1270
      %v1272 = vsel %vm308, %v1265, %v1269
      %v1273 = vsel %vm308, %v1267, %v1271
      %v1274 = vsel %vm308, %v1269, %v1265
      %v1275 = vsel %vm308, %v1271, %v1267
      %v1276 = vmul.f32 %v1274, %v314
      %v1277 = vmul.f32 %v1272, %v315
      %v1278 = vmul.f32 %v1275, %v314
      %v1279 = vmul.f32 %v1273, %v315
      %1280 = vrot.lane.b32.xlu0 %v1212, 30
      %v1281 = vpop.permute.xlu0 %1280
      %1282 = vrot.lane.b32.xlu0 %v1214, 30
      %v1283 = vpop.permute.xlu0 %1282
      %1284 = vrot.lane.b32.xlu0 %v1213, 30
      %v1285 = vpop.permute.xlu0 %1284
      %1286 = vrot.lane.b32.xlu0 %v1215, 30
      %v1287 = vpop.permute.xlu0 %1286
      %v1288 = vsel %vm324, %v1281, %v1285
      %v1289 = vsel %vm324, %v1283, %v1287
      %v1290 = vsel %vm324, %v1285, %v1281
      %v1291 = vsel %vm324, %v1287, %v1283
      %v1292 = vmul.f32 %v1290, %v330
      %v1293 = vmul.f32 %v1288, %v331
      %v1294 = vmul.f32 %v1291, %v330
      %v1295 = vmul.f32 %v1289, %v331
      %v1296 = vld [vmem:[%s4] sm:$0xff]
      %v1297 = vld [vmem:[%s4 + $0x8] sm:$0xff]
      %v1298 = vld [vmem:[%s4 + $0x10] sm:$0xff]
      %v1299 = vld [vmem:[%s4 + $0x18] sm:$0xff]
      %1300 = vrot.lane.b32.xlu0 %v1212, 18
      %v1301 = vpop.permute.xlu0 %1300
      %1302 = vrot.lane.b32.xlu0 %v1214, 18
      %v1303 = vpop.permute.xlu0 %1302
      %1304 = vrot.lane.b32.xlu0 %v1213, 18
      %v1305 = vpop.permute.xlu0 %1304
      %1306 = vrot.lane.b32.xlu0 %v1215, 18
      %v1307 = vpop.permute.xlu0 %1306
      %v1308 = vsel %vm378, %v1301, %v1305
      %v1309 = vsel %vm378, %v1303, %v1307
      %v1310 = vsel %vm378, %v1305, %v1301
      %v1311 = vsel %vm378, %v1307, %v1303
      %v1312 = vmul.f32 %v1310, %v384
      %v1313 = vmul.f32 %v1308, %v385
      %v1314 = vmul.f32 %v1311, %v384
      %v1315 = vmul.f32 %v1309, %v385
      %1316 = vrot.lane.b32.xlu0 %v1212, 17
      %v1317 = vpop.permute.xlu0 %1316
      %1318 = vrot.lane.b32.xlu0 %v1214, 17
      %v1319 = vpop.permute.xlu0 %1318
      %1320 = vrot.lane.b32.xlu0 %v1213, 17
      %v1321 = vpop.permute.xlu0 %1320
      %1322 = vrot.lane.b32.xlu0 %v1215, 17
      %v1323 = vpop.permute.xlu0 %1322
      %v1324 = vsel %vm394, %v1317, %v1321
      %v1325 = vsel %vm394, %v1319, %v1323
      %v1326 = vsel %vm394, %v1321, %v1317
      %v1327 = vsel %vm394, %v1323, %v1319
      %v1328 = vmul.f32 %v1326, %v400
      %v1329 = vmul.f32 %v1324, %v401
      %v1330 = vmul.f32 %v1327, %v400
      %v1331 = vmul.f32 %v1325, %v401
      %1332 = vrot.lane.b32.xlu0 %v1212, 16
      %v1333 = vpop.permute.xlu0 %1332
      %1334 = vrot.lane.b32.xlu0 %v1214, 16
      %v1335 = vpop.permute.xlu0 %1334
      %1336 = vrot.lane.b32.xlu0 %v1213, 16
      %v1337 = vpop.permute.xlu0 %1336
      %1338 = vrot.lane.b32.xlu0 %v1215, 16
      %v1339 = vpop.permute.xlu0 %1338
      %v1340 = vsel %vm410, %v1333, %v1337
      %v1341 = vsel %vm410, %v1335, %v1339
      %v1342 = vsel %vm410, %v1337, %v1333
      %v1343 = vsel %vm410, %v1339, %v1335
      %v1344 = vmul.f32 %v1342, %v416
      %v1345 = vmul.f32 %v1340, %v417
      %v1346 = vmul.f32 %v1343, %v416
      %v1347 = vmul.f32 %v1341, %v417
      %1348 = vrot.lane.b32.xlu0 %v1212, 15
      %v1349 = vpop.permute.xlu0 %1348
      %1350 = vrot.lane.b32.xlu0 %v1214, 15
      %v1351 = vpop.permute.xlu0 %1350
      %1352 = vrot.lane.b32.xlu0 %v1213, 15
      %v1353 = vpop.permute.xlu0 %1352
      %1354 = vrot.lane.b32.xlu0 %v1215, 15
      %v1355 = vpop.permute.xlu0 %1354
      %v1356 = vsel %vm426, %v1349, %v1353
      %v1357 = vsel %vm426, %v1351, %v1355
      %v1358 = vsel %vm426, %v1353, %v1349
      %v1359 = vsel %vm426, %v1355, %v1351
      %v1360 = vmul.f32 %v1358, %v432
      %v1361 = vmul.f32 %v1356, %v433
      %v1362 = vmul.f32 %v1359, %v432
      %v1363 = vmul.f32 %v1357, %v433
      %1364 = vrot.lane.b32.xlu0 %v1212, 14
      %v1365 = vpop.permute.xlu0 %1364
      %1366 = vrot.lane.b32.xlu0 %v1214, 14
      %v1367 = vpop.permute.xlu0 %1366
      %1368 = vrot.lane.b32.xlu0 %v1213, 14
      %v1369 = vpop.permute.xlu0 %1368
      %1370 = vrot.lane.b32.xlu0 %v1215, 14
      %v1371 = vpop.permute.xlu0 %1370
      %v1372 = vsel %vm442, %v1365, %v1369
      %v1373 = vsel %vm442, %v1367, %v1371
      %v1374 = vsel %vm442, %v1369, %v1365
      %v1375 = vsel %vm442, %v1371, %v1367
      %v1376 = vmul.f32 %v1374, %v448
      %v1377 = vmul.f32 %v1372, %v449
      %v1378 = vmul.f32 %v1375, %v448
      %v1379 = vmul.f32 %v1373, %v449
      %s1380 = scalar_lea.vmem %s4, 32
      %v1381 = vld [vmem:[%s1380] sm:$0xff]
      %v1382 = vld [vmem:[%s1380 + $0x8] sm:$0xff]
      %v1383 = vld [vmem:[%s1380 + $0x10] sm:$0xff]
      %v1384 = vld [vmem:[%s1380 + $0x18] sm:$0xff]
      %vm1385 = vcmask 654336
      %v1387 = vsel %vm1385, %v1381, 0
      %v1390 = vsel %vm1385, %v1382, 0
      %v1393 = vsel %vm1385, %v1383, 0
      %v1396 = vsel %vm1385, %v1384, 0
      %1398 = vmatpush.msra.mxu0 0.0
      %1399 = vmatpush.msra.mxu0 0.0
      %1400 = vmatpush.msra.mxu0 0.0
      %1401 = vmatpush.msra.mxu0 0.0
      %1402 = vmatpush.msra.mxu0 0.0
      %1403 = vmatpush.msra.mxu0 0.0
      %1404 = vmatpush.msra.mxu0 %v1378
      %1405 = vmatpush.msra.mxu0 %v1376
      %1406 = vmatpush.msra.mxu0 %v1362
      %1407 = vmatpush.msra.mxu0 %v1360
      %1408 = vmatpush.msra.mxu0 %v1346
      %1409 = vmatpush.msra.mxu0 %v1344
      %1410 = vmatpush.msra.mxu0 %v1330
      %1411 = vmatpush.msra.mxu0 %v1328
      %1412 = vmatpush.msra.mxu0 %v1314
      %1413 = vmatpush.msra.mxu0 %v1312
      %1414 = vmatmul.f32.gmra.mxu0 %v1387
      %v1415 = vpop.f32.mrf.mxu0
      %v1416 = vadd.f32 0.0, %v1415
      %1417 = vmatmul.f32.gmra.mxu0 %v1390
      %v1418 = vpop.f32.mrf.mxu0
      %v1419 = vadd.f32 0.0, %v1418
      %1420 = vmatmul.f32.gmra.mxu0 %v1393
      %v1421 = vpop.f32.mrf.mxu0
      %v1422 = vadd.f32 0.0, %v1421
      %1423 = vmatmul.f32.gmra.mxu0 %v1396
      %v1424 = vpop.f32.mrf.mxu0
      %v1425 = vadd.f32 0.0, %v1424
      %1426 = vdwg.mxu0
      %1427 = vmatpush.msra.mxu0 0.0
      %1428 = vmatpush.msra.mxu0 0.0
      %1429 = vmatpush.msra.mxu0 0.0
      %1430 = vmatpush.msra.mxu0 0.0
      %1431 = vmatpush.msra.mxu0 0.0
      %1432 = vmatpush.msra.mxu0 0.0
      %1433 = vmatpush.msra.mxu0 %v1379
      %1434 = vmatpush.msra.mxu0 %v1377
      %1435 = vmatpush.msra.mxu0 %v1363
      %1436 = vmatpush.msra.mxu0 %v1361
      %1437 = vmatpush.msra.mxu0 %v1347
      %1438 = vmatpush.msra.mxu0 %v1345
      %1439 = vmatpush.msra.mxu0 %v1331
      %1440 = vmatpush.msra.mxu0 %v1329
      %1441 = vmatpush.msra.mxu0 %v1315
      %1442 = vmatpush.msra.mxu0 %v1313
      %1443 = vmatmul.f32.gmra.mxu0 %v1387
      %v1444 = vpop.f32.mrf.mxu0
      %v1445 = vadd.f32 0.0, %v1444
      %1446 = vmatmul.f32.gmra.mxu0 %v1390
      %v1447 = vpop.f32.mrf.mxu0
      %v1448 = vadd.f32 0.0, %v1447
      %1449 = vmatmul.f32.gmra.mxu0 %v1393
      %v1450 = vpop.f32.mrf.mxu0
      %v1451 = vadd.f32 0.0, %v1450
      %1452 = vmatmul.f32.gmra.mxu0 %v1396
      %v1453 = vpop.f32.mrf.mxu0
      %v1454 = vadd.f32 0.0, %v1453
      %1455 = vdwg.mxu0
      %v1457 = vsel %vm1385, %v1296, 0
      %v1460 = vsel %vm1385, %v1297, 0
      %v1463 = vsel %vm1385, %v1298, 0
      %v1466 = vsel %vm1385, %v1299, 0
      %1468 = vmatpush.msra.mxu0 0.0
      %1469 = vmatpush.msra.mxu0 0.0
      %1470 = vmatpush.msra.mxu0 0.0
      %1471 = vmatpush.msra.mxu0 0.0
      %1472 = vmatpush.msra.mxu0 0.0
      %1473 = vmatpush.msra.mxu0 0.0
      %1474 = vmatpush.msra.mxu0 %v1294
      %1475 = vmatpush.msra.mxu0 %v1292
      %1476 = vmatpush.msra.mxu0 %v1278
      %1477 = vmatpush.msra.mxu0 %v1276
      %1478 = vmatpush.msra.mxu0 %v1262
      %1479 = vmatpush.msra.mxu0 %v1260
      %1480 = vmatpush.msra.mxu0 %v1246
      %1481 = vmatpush.msra.mxu0 %v1244
      %1482 = vmatpush.msra.mxu0 %v1230
      %1483 = vmatpush.msra.mxu0 %v1228
      %1484 = vmatmul.f32.gmra.mxu0 %v1457
      %v1485 = vpop.f32.mrf.mxu0
      %v1486 = vadd.f32 %v1416, %v1485
      %1487 = vmatmul.f32.gmra.mxu0 %v1460
      %v1488 = vpop.f32.mrf.mxu0
      %v1489 = vadd.f32 %v1419, %v1488
      %1490 = vmatmul.f32.gmra.mxu0 %v1463
      %v1491 = vpop.f32.mrf.mxu0
      %v1492 = vadd.f32 %v1422, %v1491
      %1493 = vmatmul.f32.gmra.mxu0 %v1466
      %v1494 = vpop.f32.mrf.mxu0
      %v1495 = vadd.f32 %v1425, %v1494
      %1496 = vdwg.mxu0
      %1497 = vmatpush.msra.mxu0 0.0
      %1498 = vmatpush.msra.mxu0 0.0
      %1499 = vmatpush.msra.mxu0 0.0
      %1500 = vmatpush.msra.mxu0 0.0
      %1501 = vmatpush.msra.mxu0 0.0
      %1502 = vmatpush.msra.mxu0 0.0
      %1503 = vmatpush.msra.mxu0 %v1295
      %1504 = vmatpush.msra.mxu0 %v1293
      %1505 = vmatpush.msra.mxu0 %v1279
      %1506 = vmatpush.msra.mxu0 %v1277
      %1507 = vmatpush.msra.mxu0 %v1263
      %1508 = vmatpush.msra.mxu0 %v1261
      %1509 = vmatpush.msra.mxu0 %v1247
      %1510 = vmatpush.msra.mxu0 %v1245
      %1511 = vmatpush.msra.mxu0 %v1231
      %1512 = vmatpush.msra.mxu0 %v1229
      %1513 = vmatmul.f32.gmra.mxu0 %v1457
      %v1514 = vpop.f32.mrf.mxu0
      %v1515 = vadd.f32 %v1445, %v1514
      %1516 = vmatmul.f32.gmra.mxu0 %v1460
      %v1517 = vpop.f32.mrf.mxu0
      %v1518 = vadd.f32 %v1448, %v1517
      %1519 = vmatmul.f32.gmra.mxu0 %v1463
      %v1520 = vpop.f32.mrf.mxu0
      %v1521 = vadd.f32 %v1451, %v1520
      %1522 = vmatmul.f32.gmra.mxu0 %v1466
      %v1523 = vpop.f32.mrf.mxu0
      %v1524 = vadd.f32 %v1454, %v1523
      %1525 = vdwg.mxu0
      %1526 = vrot.lane.b32.xlu0 %v1212, 2
      %v1527 = vpop.permute.xlu0 %1526
      %1528 = vrot.lane.b32.xlu0 %v1214, 2
      %v1529 = vpop.permute.xlu0 %1528
      %1530 = vrot.lane.b32.xlu0 %v1213, 2
      %v1531 = vpop.permute.xlu0 %1530
      %1532 = vrot.lane.b32.xlu0 %v1215, 2
      %v1533 = vpop.permute.xlu0 %1532
      %v1534 = vsel %vm611, %v1527, %v1531
      %v1535 = vsel %vm611, %v1529, %v1533
      %v1536 = vsel %vm611, %v1531, %v1527
      %v1537 = vsel %vm611, %v1533, %v1529
      %v1538 = vmul.f32 %v1536, %v617
      %v1539 = vmul.f32 %v1534, %v618
      %v1540 = vmul.f32 %v1537, %v617
      %v1541 = vmul.f32 %v1535, %v618
      %1542 = vrot.lane.b32.xlu0 %v1212, 1
      %v1543 = vpop.permute.xlu0 %1542
      %1544 = vrot.lane.b32.xlu0 %v1214, 1
      %v1545 = vpop.permute.xlu0 %1544
      %1546 = vrot.lane.b32.xlu0 %v1213, 1
      %v1547 = vpop.permute.xlu0 %1546
      %1548 = vrot.lane.b32.xlu0 %v1215, 1
      %v1549 = vpop.permute.xlu0 %1548
      %v1550 = vsel %vm627, %v1543, %v1547
      %v1551 = vsel %vm627, %v1545, %v1549
      %v1552 = vsel %vm627, %v1547, %v1543
      %v1553 = vsel %vm627, %v1549, %v1545
      %v1554 = vmul.f32 %v1552, %v633
      %v1555 = vmul.f32 %v1550, %v634
      %v1556 = vmul.f32 %v1553, %v633
      %v1557 = vmul.f32 %v1551, %v634
      %1558 = vrot.lane.b32.xlu0 %v1212, 127
      %v1559 = vpop.permute.xlu0 %1558
      %1560 = vrot.lane.b32.xlu0 %v1214, 127
      %v1561 = vpop.permute.xlu0 %1560
      %1562 = vrot.lane.b32.xlu0 %v1213, 127
      %v1563 = vpop.permute.xlu0 %1562
      %1564 = vrot.lane.b32.xlu0 %v1215, 127
      %v1565 = vpop.permute.xlu0 %1564
      %v1566 = vsel %vm643, %v1559, %v1563
      %v1567 = vsel %vm643, %v1561, %v1565
      %v1568 = vsel %vm643, %v1563, %v1559
      %v1569 = vsel %vm643, %v1565, %v1561
      %v1570 = vmul.f32 %v1566, %v649
      %v1571 = vmul.f32 %v1568, %v650
      %v1572 = vmul.f32 %v1567, %v649
      %v1573 = vmul.f32 %v1569, %v650
      %1574 = vrot.lane.b32.xlu0 %v1212, 126
      %v1575 = vpop.permute.xlu0 %1574
      %1576 = vrot.lane.b32.xlu0 %v1214, 126
      %v1577 = vpop.permute.xlu0 %1576
      %1578 = vrot.lane.b32.xlu0 %v1213, 126
      %v1579 = vpop.permute.xlu0 %1578
      %1580 = vrot.lane.b32.xlu0 %v1215, 126
      %v1581 = vpop.permute.xlu0 %1580
      %v1582 = vsel %vm659, %v1575, %v1579
      %v1583 = vsel %vm659, %v1577, %v1581
      %v1584 = vsel %vm659, %v1579, %v1575
      %v1585 = vsel %vm659, %v1581, %v1577
      %v1586 = vmul.f32 %v1582, %v665
      %v1587 = vmul.f32 %v1584, %v666
      %v1588 = vmul.f32 %v1583, %v665
      %v1589 = vmul.f32 %v1585, %v666
      %s1590 = scalar_lea.vmem %s4, 64
      %v1591 = vld [vmem:[%s1590] sm:$0xff]
      %v1592 = vld [vmem:[%s1590 + $0x8] sm:$0xff]
      %v1593 = vld [vmem:[%s1590 + $0x10] sm:$0xff]
      %v1594 = vld [vmem:[%s1590 + $0x18] sm:$0xff]
      %v1596 = vsel %vm1385, %v1591, 0
      %v1599 = vsel %vm1385, %v1592, 0
      %v1602 = vsel %vm1385, %v1593, 0
      %v1605 = vsel %vm1385, %v1594, 0
      %1607 = vmatpush.msra.mxu0 0.0
      %1608 = vmatpush.msra.mxu0 0.0
      %1609 = vmatpush.msra.mxu0 0.0
      %1610 = vmatpush.msra.mxu0 0.0
      %1611 = vmatpush.msra.mxu0 0.0
      %1612 = vmatpush.msra.mxu0 0.0
      %1613 = vmatpush.msra.mxu0 %v1588
      %1614 = vmatpush.msra.mxu0 %v1586
      %1615 = vmatpush.msra.mxu0 %v1572
      %1616 = vmatpush.msra.mxu0 %v1570
      %1617 = vmatpush.msra.mxu0 %v1214
      %1618 = vmatpush.msra.mxu0 %v1212
      %1619 = vmatpush.msra.mxu0 %v1556
      %1620 = vmatpush.msra.mxu0 %v1554
      %1621 = vmatpush.msra.mxu0 %v1540
      %1622 = vmatpush.msra.mxu0 %v1538
      %1623 = vmatmul.f32.gmra.mxu0 %v1596
      %v1624 = vpop.f32.mrf.mxu0
      %v1625 = vadd.f32 0.0, %v1624
      %1626 = vmatmul.f32.gmra.mxu0 %v1599
      %v1627 = vpop.f32.mrf.mxu0
      %v1628 = vadd.f32 0.0, %v1627
      %1629 = vmatmul.f32.gmra.mxu0 %v1602
      %v1630 = vpop.f32.mrf.mxu0
      %v1631 = vadd.f32 0.0, %v1630
      %1632 = vmatmul.f32.gmra.mxu0 %v1605
      %v1633 = vpop.f32.mrf.mxu0
      %v1634 = vadd.f32 0.0, %v1633
      %1635 = vdwg.mxu0
      %1636 = vmatpush.msra.mxu0 0.0
      %1637 = vmatpush.msra.mxu0 0.0
      %1638 = vmatpush.msra.mxu0 0.0
      %1639 = vmatpush.msra.mxu0 0.0
      %1640 = vmatpush.msra.mxu0 0.0
      %1641 = vmatpush.msra.mxu0 0.0
      %1642 = vmatpush.msra.mxu0 %v1589
      %1643 = vmatpush.msra.mxu0 %v1587
      %1644 = vmatpush.msra.mxu0 %v1573
      %1645 = vmatpush.msra.mxu0 %v1571
      %1646 = vmatpush.msra.mxu0 %v1215
      %1647 = vmatpush.msra.mxu0 %v1213
      %1648 = vmatpush.msra.mxu0 %v1557
      %1649 = vmatpush.msra.mxu0 %v1555
      %1650 = vmatpush.msra.mxu0 %v1541
      %1651 = vmatpush.msra.mxu0 %v1539
      %1652 = vmatmul.f32.gmra.mxu0 %v1596
      %v1653 = vpop.f32.mrf.mxu0
      %v1654 = vadd.f32 0.0, %v1653
      %1655 = vmatmul.f32.gmra.mxu0 %v1599
      %v1656 = vpop.f32.mrf.mxu0
      %v1657 = vadd.f32 0.0, %v1656
      %1658 = vmatmul.f32.gmra.mxu0 %v1602
      %v1659 = vpop.f32.mrf.mxu0
      %v1660 = vadd.f32 0.0, %v1659
      %1661 = vmatmul.f32.gmra.mxu0 %v1605
      %v1662 = vpop.f32.mrf.mxu0
      %v1663 = vadd.f32 0.0, %v1662
      %1664 = vdwg.mxu0
      %v1665 = vadd.f32 %v1486, %v1625
      %v1666 = vadd.f32 %v1515, %v1654
      %v1667 = vadd.f32 %v1489, %v1628
      %v1668 = vadd.f32 %v1518, %v1657
      %v1669 = vadd.f32 %v1492, %v1631
      %v1670 = vadd.f32 %v1521, %v1660
      %v1671 = vadd.f32 %v1495, %v1634
      %v1672 = vadd.f32 %v1524, %v1663
      %1673 = vrot.lane.b32.xlu0 %v1212, 114
      %v1674 = vpop.permute.xlu0 %1673
      %1675 = vrot.lane.b32.xlu0 %v1214, 114
      %v1676 = vpop.permute.xlu0 %1675
      %1677 = vrot.lane.b32.xlu0 %v1213, 114
      %v1678 = vpop.permute.xlu0 %1677
      %1679 = vrot.lane.b32.xlu0 %v1215, 114
      %v1680 = vpop.permute.xlu0 %1679
      %v1681 = vsel %vm766, %v1674, %v1678
      %v1682 = vsel %vm766, %v1676, %v1680
      %v1683 = vsel %vm766, %v1678, %v1674
      %v1684 = vsel %vm766, %v1680, %v1676
      %v1685 = vmul.f32 %v1681, %v772
      %v1686 = vmul.f32 %v1683, %v773
      %v1687 = vmul.f32 %v1682, %v772
      %v1688 = vmul.f32 %v1684, %v773
      %1689 = vrot.lane.b32.xlu0 %v1212, 113
      %v1690 = vpop.permute.xlu0 %1689
      %1691 = vrot.lane.b32.xlu0 %v1214, 113
      %v1692 = vpop.permute.xlu0 %1691
      %1693 = vrot.lane.b32.xlu0 %v1213, 113
      %v1694 = vpop.permute.xlu0 %1693
      %1695 = vrot.lane.b32.xlu0 %v1215, 113
      %v1696 = vpop.permute.xlu0 %1695
      %v1697 = vsel %vm782, %v1690, %v1694
      %v1698 = vsel %vm782, %v1692, %v1696
      %v1699 = vsel %vm782, %v1694, %v1690
      %v1700 = vsel %vm782, %v1696, %v1692
      %v1701 = vmul.f32 %v1697, %v788
      %v1702 = vmul.f32 %v1699, %v789
      %v1703 = vmul.f32 %v1698, %v788
      %v1704 = vmul.f32 %v1700, %v789
      %1705 = vrot.lane.b32.xlu0 %v1212, 112
      %v1706 = vpop.permute.xlu0 %1705
      %1707 = vrot.lane.b32.xlu0 %v1214, 112
      %v1708 = vpop.permute.xlu0 %1707
      %1709 = vrot.lane.b32.xlu0 %v1213, 112
      %v1710 = vpop.permute.xlu0 %1709
      %1711 = vrot.lane.b32.xlu0 %v1215, 112
      %v1712 = vpop.permute.xlu0 %1711
      %v1713 = vsel %vm798, %v1706, %v1710
      %v1714 = vsel %vm798, %v1708, %v1712
      %v1715 = vsel %vm798, %v1710, %v1706
      %v1716 = vsel %vm798, %v1712, %v1708
      %v1717 = vmul.f32 %v1713, %v804
      %v1718 = vmul.f32 %v1715, %v805
      %v1719 = vmul.f32 %v1714, %v804
      %v1720 = vmul.f32 %v1716, %v805
      %1721 = vrot.lane.b32.xlu0 %v1212, 111
      %v1722 = vpop.permute.xlu0 %1721
      %1723 = vrot.lane.b32.xlu0 %v1214, 111
      %v1724 = vpop.permute.xlu0 %1723
      %1725 = vrot.lane.b32.xlu0 %v1213, 111
      %v1726 = vpop.permute.xlu0 %1725
      %1727 = vrot.lane.b32.xlu0 %v1215, 111
      %v1728 = vpop.permute.xlu0 %1727
      %v1729 = vsel %vm814, %v1722, %v1726
      %v1730 = vsel %vm814, %v1724, %v1728
      %v1731 = vsel %vm814, %v1726, %v1722
      %v1732 = vsel %vm814, %v1728, %v1724
      %v1733 = vmul.f32 %v1729, %v820
      %v1734 = vmul.f32 %v1731, %v821
      %v1735 = vmul.f32 %v1730, %v820
      %v1736 = vmul.f32 %v1732, %v821
      %1737 = vrot.lane.b32.xlu0 %v1212, 110
      %v1738 = vpop.permute.xlu0 %1737
      %1739 = vrot.lane.b32.xlu0 %v1214, 110
      %v1740 = vpop.permute.xlu0 %1739
      %1741 = vrot.lane.b32.xlu0 %v1213, 110
      %v1742 = vpop.permute.xlu0 %1741
      %1743 = vrot.lane.b32.xlu0 %v1215, 110
      %v1744 = vpop.permute.xlu0 %1743
      %v1745 = vsel %vm830, %v1738, %v1742
      %v1746 = vsel %vm830, %v1740, %v1744
      %v1747 = vsel %vm830, %v1742, %v1738
      %v1748 = vsel %vm830, %v1744, %v1740
      %v1749 = vmul.f32 %v1745, %v836
      %v1750 = vmul.f32 %v1747, %v837
      %v1751 = vmul.f32 %v1746, %v836
      %v1752 = vmul.f32 %v1748, %v837
      %s1753 = scalar_lea.vmem %s4, 96
      %v1754 = vld [vmem:[%s1753] sm:$0xff]
      %v1755 = vld [vmem:[%s1753 + $0x8] sm:$0xff]
      %v1756 = vld [vmem:[%s1753 + $0x10] sm:$0xff]
      %v1757 = vld [vmem:[%s1753 + $0x18] sm:$0xff]
      %v1759 = vsel %vm1385, %v1754, 0
      %v1762 = vsel %vm1385, %v1755, 0
      %v1765 = vsel %vm1385, %v1756, 0
      %v1768 = vsel %vm1385, %v1757, 0
      %1770 = vmatpush.msra.mxu0 0.0
      %1771 = vmatpush.msra.mxu0 0.0
      %1772 = vmatpush.msra.mxu0 0.0
      %1773 = vmatpush.msra.mxu0 0.0
      %1774 = vmatpush.msra.mxu0 0.0
      %1775 = vmatpush.msra.mxu0 0.0
      %1776 = vmatpush.msra.mxu0 %v1751
      %1777 = vmatpush.msra.mxu0 %v1749
      %1778 = vmatpush.msra.mxu0 %v1735
      %1779 = vmatpush.msra.mxu0 %v1733
      %1780 = vmatpush.msra.mxu0 %v1719
      %1781 = vmatpush.msra.mxu0 %v1717
      %1782 = vmatpush.msra.mxu0 %v1703
      %1783 = vmatpush.msra.mxu0 %v1701
      %1784 = vmatpush.msra.mxu0 %v1687
      %1785 = vmatpush.msra.mxu0 %v1685
      %1786 = vmatmul.f32.gmra.mxu0 %v1759
      %v1787 = vpop.f32.mrf.mxu0
      %v1788 = vadd.f32 0.0, %v1787
      %1789 = vmatmul.f32.gmra.mxu0 %v1762
      %v1790 = vpop.f32.mrf.mxu0
      %v1791 = vadd.f32 0.0, %v1790
      %1792 = vmatmul.f32.gmra.mxu0 %v1765
      %v1793 = vpop.f32.mrf.mxu0
      %v1794 = vadd.f32 0.0, %v1793
      %1795 = vmatmul.f32.gmra.mxu0 %v1768
      %v1796 = vpop.f32.mrf.mxu0
      %v1797 = vadd.f32 0.0, %v1796
      %1798 = vdwg.mxu0
      %1799 = vmatpush.msra.mxu0 0.0
      %1800 = vmatpush.msra.mxu0 0.0
      %1801 = vmatpush.msra.mxu0 0.0
      %1802 = vmatpush.msra.mxu0 0.0
      %1803 = vmatpush.msra.mxu0 0.0
      %1804 = vmatpush.msra.mxu0 0.0
      %1805 = vmatpush.msra.mxu0 %v1752
      %1806 = vmatpush.msra.mxu0 %v1750
      %1807 = vmatpush.msra.mxu0 %v1736
      %1808 = vmatpush.msra.mxu0 %v1734
      %1809 = vmatpush.msra.mxu0 %v1720
      %1810 = vmatpush.msra.mxu0 %v1718
      %1811 = vmatpush.msra.mxu0 %v1704
      %1812 = vmatpush.msra.mxu0 %v1702
      %1813 = vmatpush.msra.mxu0 %v1688
      %1814 = vmatpush.msra.mxu0 %v1686
      %1815 = vmatmul.f32.gmra.mxu0 %v1759
      %v1816 = vpop.f32.mrf.mxu0
      %v1817 = vadd.f32 0.0, %v1816
      %1818 = vmatmul.f32.gmra.mxu0 %v1762
      %v1819 = vpop.f32.mrf.mxu0
      %v1820 = vadd.f32 0.0, %v1819
      %1821 = vmatmul.f32.gmra.mxu0 %v1765
      %v1822 = vpop.f32.mrf.mxu0
      %v1823 = vadd.f32 0.0, %v1822
      %1824 = vmatmul.f32.gmra.mxu0 %v1768
      %v1825 = vpop.f32.mrf.mxu0
      %v1826 = vadd.f32 0.0, %v1825
      %1827 = vdwg.mxu0
      %v1828 = vadd.f32 %v1665, %v1788
      %v1829 = vadd.f32 %v1666, %v1817
      %v1830 = vadd.f32 %v1667, %v1791
      %v1831 = vadd.f32 %v1668, %v1820
      %v1832 = vadd.f32 %v1669, %v1794
      %v1833 = vadd.f32 %v1670, %v1823
      %v1834 = vadd.f32 %v1671, %v1797
      %v1835 = vadd.f32 %v1672, %v1826
      %1836 = vrot.lane.b32.xlu0 %v1212, 98
      %v1837 = vpop.permute.xlu0 %1836
      %1838 = vrot.lane.b32.xlu0 %v1214, 98
      %v1839 = vpop.permute.xlu0 %1838
      %1840 = vrot.lane.b32.xlu0 %v1213, 98
      %v1841 = vpop.permute.xlu0 %1840
      %1842 = vrot.lane.b32.xlu0 %v1215, 98
      %v1843 = vpop.permute.xlu0 %1842
      %v1844 = vsel %vm943, %v1837, %v1841
      %v1845 = vsel %vm943, %v1839, %v1843
      %v1846 = vsel %vm943, %v1841, %v1837
      %v1847 = vsel %vm943, %v1843, %v1839
      %v1848 = vmul.f32 %v1844, %v949
      %v1849 = vmul.f32 %v1846, %v950
      %v1850 = vmul.f32 %v1845, %v949
      %v1851 = vmul.f32 %v1847, %v950
      %1852 = vrot.lane.b32.xlu0 %v1212, 97
      %v1853 = vpop.permute.xlu0 %1852
      %1854 = vrot.lane.b32.xlu0 %v1214, 97
      %v1855 = vpop.permute.xlu0 %1854
      %1856 = vrot.lane.b32.xlu0 %v1213, 97
      %v1857 = vpop.permute.xlu0 %1856
      %1858 = vrot.lane.b32.xlu0 %v1215, 97
      %v1859 = vpop.permute.xlu0 %1858
      %v1860 = vsel %vm959, %v1853, %v1857
      %v1861 = vsel %vm959, %v1855, %v1859
      %v1862 = vsel %vm959, %v1857, %v1853
      %v1863 = vsel %vm959, %v1859, %v1855
      %v1864 = vmul.f32 %v1860, %v965
      %v1865 = vmul.f32 %v1862, %v966
      %v1866 = vmul.f32 %v1861, %v965
      %v1867 = vmul.f32 %v1863, %v966
      %1868 = vrot.lane.b32.xlu0 %v1212, 96
      %v1869 = vpop.permute.xlu0 %1868
      %1870 = vrot.lane.b32.xlu0 %v1214, 96
      %v1871 = vpop.permute.xlu0 %1870
      %1872 = vrot.lane.b32.xlu0 %v1213, 96
      %v1873 = vpop.permute.xlu0 %1872
      %1874 = vrot.lane.b32.xlu0 %v1215, 96
      %v1875 = vpop.permute.xlu0 %1874
      %v1876 = vsel %vm975, %v1869, %v1873
      %v1877 = vsel %vm975, %v1871, %v1875
      %v1878 = vsel %vm975, %v1873, %v1869
      %v1879 = vsel %vm975, %v1875, %v1871
      %v1880 = vmul.f32 %v1876, %v981
      %v1881 = vmul.f32 %v1878, %v982
      %v1882 = vmul.f32 %v1877, %v981
      %v1883 = vmul.f32 %v1879, %v982
      %1884 = vrot.lane.b32.xlu0 %v1212, 95
      %v1885 = vpop.permute.xlu0 %1884
      %1886 = vrot.lane.b32.xlu0 %v1214, 95
      %v1887 = vpop.permute.xlu0 %1886
      %1888 = vrot.lane.b32.xlu0 %v1213, 95
      %v1889 = vpop.permute.xlu0 %1888
      %1890 = vrot.lane.b32.xlu0 %v1215, 95
      %v1891 = vpop.permute.xlu0 %1890
      %v1892 = vsel %vm991, %v1885, %v1889
      %v1893 = vsel %vm991, %v1887, %v1891
      %v1894 = vsel %vm991, %v1889, %v1885
      %v1895 = vsel %vm991, %v1891, %v1887
      %v1896 = vmul.f32 %v1892, %v997
      %v1897 = vmul.f32 %v1894, %v998
      %v1898 = vmul.f32 %v1893, %v997
      %v1899 = vmul.f32 %v1895, %v998
      %1900 = vrot.lane.b32.xlu0 %v1212, 94
      %v1901 = vpop.permute.xlu0 %1900
      %1902 = vrot.lane.b32.xlu0 %v1214, 94
      %v1903 = vpop.permute.xlu0 %1902
      %1904 = vrot.lane.b32.xlu0 %v1213, 94
      %v1905 = vpop.permute.xlu0 %1904
      %1906 = vrot.lane.b32.xlu0 %v1215, 94
      %v1907 = vpop.permute.xlu0 %1906
      %v1908 = vsel %vm1007, %v1901, %v1905
      %v1909 = vsel %vm1007, %v1903, %v1907
      %v1910 = vsel %vm1007, %v1905, %v1901
      %v1911 = vsel %vm1007, %v1907, %v1903
      %v1912 = vmul.f32 %v1908, %v1013
      %v1913 = vmul.f32 %v1910, %v1014
      %v1914 = vmul.f32 %v1909, %v1013
      %v1915 = vmul.f32 %v1911, %v1014
      %s1916 = scalar_lea.vmem %s4, 128
      %v1917 = vld [vmem:[%s1916] sm:$0xff]
      %v1918 = vld [vmem:[%s1916 + $0x8] sm:$0xff]
      %v1919 = vld [vmem:[%s1916 + $0x10] sm:$0xff]
      %v1920 = vld [vmem:[%s1916 + $0x18] sm:$0xff]
      %v1922 = vsel %vm1385, %v1917, 0
      %v1925 = vsel %vm1385, %v1918, 0
      %v1928 = vsel %vm1385, %v1919, 0
      %v1931 = vsel %vm1385, %v1920, 0
      %1933 = vmatpush.msra.mxu0 0.0
      %1934 = vmatpush.msra.mxu0 0.0
      %1935 = vmatpush.msra.mxu0 0.0
      %1936 = vmatpush.msra.mxu0 0.0
      %1937 = vmatpush.msra.mxu0 0.0
      %1938 = vmatpush.msra.mxu0 0.0
      %1939 = vmatpush.msra.mxu0 %v1914
      %1940 = vmatpush.msra.mxu0 %v1912
      %1941 = vmatpush.msra.mxu0 %v1898
      %1942 = vmatpush.msra.mxu0 %v1896
      %1943 = vmatpush.msra.mxu0 %v1882
      %1944 = vmatpush.msra.mxu0 %v1880
      %1945 = vmatpush.msra.mxu0 %v1866
      %1946 = vmatpush.msra.mxu0 %v1864
      %1947 = vmatpush.msra.mxu0 %v1850
      %1948 = vmatpush.msra.mxu0 %v1848
      %1949 = vmatmul.f32.gmra.mxu0 %v1922
      %v1950 = vpop.f32.mrf.mxu0
      %v1951 = vadd.f32 0.0, %v1950
      %1952 = vmatmul.f32.gmra.mxu0 %v1925
      %v1953 = vpop.f32.mrf.mxu0
      %v1954 = vadd.f32 0.0, %v1953
      %1955 = vmatmul.f32.gmra.mxu0 %v1928
      %v1956 = vpop.f32.mrf.mxu0
      %v1957 = vadd.f32 0.0, %v1956
      %1958 = vmatmul.f32.gmra.mxu0 %v1931
      %v1959 = vpop.f32.mrf.mxu0
      %v1960 = vadd.f32 0.0, %v1959
      %1961 = vdwg.mxu0
      %1962 = vmatpush.msra.mxu0 0.0
      %1963 = vmatpush.msra.mxu0 0.0
      %1964 = vmatpush.msra.mxu0 0.0
      %1965 = vmatpush.msra.mxu0 0.0
      %1966 = vmatpush.msra.mxu0 0.0
      %1967 = vmatpush.msra.mxu0 0.0
      %1968 = vmatpush.msra.mxu0 %v1915
      %1969 = vmatpush.msra.mxu0 %v1913
      %1970 = vmatpush.msra.mxu0 %v1899
      %1971 = vmatpush.msra.mxu0 %v1897
      %1972 = vmatpush.msra.mxu0 %v1883
      %1973 = vmatpush.msra.mxu0 %v1881
      %1974 = vmatpush.msra.mxu0 %v1867
      %1975 = vmatpush.msra.mxu0 %v1865
      %1976 = vmatpush.msra.mxu0 %v1851
      %1977 = vmatpush.msra.mxu0 %v1849
      %1978 = vmatmul.f32.gmra.mxu0 %v1922
      %v1979 = vpop.f32.mrf.mxu0
      %v1980 = vadd.f32 0.0, %v1979
      %1981 = vmatmul.f32.gmra.mxu0 %v1925
      %v1982 = vpop.f32.mrf.mxu0
      %v1983 = vadd.f32 0.0, %v1982
      %1984 = vmatmul.f32.gmra.mxu0 %v1928
      %v1985 = vpop.f32.mrf.mxu0
      %v1986 = vadd.f32 0.0, %v1985
      %1987 = vmatmul.f32.gmra.mxu0 %v1931
      %v1988 = vpop.f32.mrf.mxu0
      %v1989 = vadd.f32 0.0, %v1988
      %1990 = vdwg.mxu0
      %v1991 = vadd.f32 %v1828, %v1951
      %v1992 = vadd.f32 %v1829, %v1980
      %v1993 = vadd.f32 %v1830, %v1954
      %v1994 = vadd.f32 %v1831, %v1983
      %v1995 = vadd.f32 %v1832, %v1957
      %v1996 = vadd.f32 %v1833, %v1986
      %v1997 = vadd.f32 %v1834, %v1960
      %v1998 = vadd.f32 %v1835, %v1989
      %v1999 = vld [vmem:[%s5] sm:$0xff]
      %v2000 = vld [vmem:[%s5 + $0x8] sm:$0xff]
      %v2001 = vld [vmem:[%s5 + $0x10] sm:$0xff]
      %v2002 = vld [vmem:[%s5 + $0x18] sm:$0xff]
      %2004 = vset.pattern.permute.xlu0 0
      %2005 = vperm.xlu0 %2004, %v1999
      %v2006 = vpop.permute.xlu0 %2005
      %2009 = vset.pattern.permute.xlu0 0
      %2010 = vperm.xlu0 %2009, %v2000
      %v2011 = vpop.permute.xlu0 %2010
      %2014 = vset.pattern.permute.xlu0 0
      %2015 = vperm.xlu0 %2014, %v2001
      %v2016 = vpop.permute.xlu0 %2015
      %2019 = vset.pattern.permute.xlu0 0
      %2020 = vperm.xlu0 %2019, %v2002
      %v2021 = vpop.permute.xlu0 %2020
      %v2023 = vadd.f32 %v1991, %v2006
      %v2024 = vadd.f32 %v1992, %v2006
      %v2025 = vadd.f32 %v1993, %v2011
      %v2026 = vadd.f32 %v1994, %v2011
      %v2027 = vadd.f32 %v1995, %v2016
      %v2028 = vadd.f32 %v1996, %v2016
      %v2029 = vadd.f32 %v1997, %v2021
      %v2030 = vadd.f32 %v1998, %v2021
      %v2031 = vmax.f32 %v2023, 0.0
      %v2032 = vmax.f32 %v2024, 0.0
      %v2033 = vmax.f32 %v2025, 0.0
      %v2034 = vmax.f32 %v2026, 0.0
      %v2035 = vmax.f32 %v2027, 0.0
      %v2036 = vmax.f32 %v2028, 0.0
      %v2037 = vmax.f32 %v2029, 0.0
      %v2038 = vmax.f32 %v2030, 0.0
      %2039 = vrot.lane.b32.xlu0 %v2031, 1
      %v2040 = vpop.permute.xlu0 %2039
      %2041 = vrot.lane.b32.xlu0 %v2033, 1
      %v2042 = vpop.permute.xlu0 %2041
      %2043 = vrot.lane.b32.xlu0 %v2035, 1
      %v2044 = vpop.permute.xlu0 %2043
      %2045 = vrot.lane.b32.xlu0 %v2037, 1
      %v2046 = vpop.permute.xlu0 %2045
      %2047 = vrot.lane.b32.xlu0 %v2032, 1
      %v2048 = vpop.permute.xlu0 %2047
      %2049 = vrot.lane.b32.xlu0 %v2034, 1
      %v2050 = vpop.permute.xlu0 %2049
      %2051 = vrot.lane.b32.xlu0 %v2036, 1
      %v2052 = vpop.permute.xlu0 %2051
      %2053 = vrot.lane.b32.xlu0 %v2038, 1
      %v2054 = vpop.permute.xlu0 %2053
      %v2055 = vsel %vm627, %v2040, %v2048
      %v2056 = vsel %vm627, %v2042, %v2050
      %v2057 = vsel %vm627, %v2044, %v2052
      %v2058 = vsel %vm627, %v2046, %v2054
      %v2059 = vsel %vm627, %v2048, %v2040
      %v2060 = vsel %vm627, %v2050, %v2042
      %v2061 = vsel %vm627, %v2052, %v2044
      %v2062 = vsel %vm627, %v2054, %v2046
      %v2063 = vmul.f32 %v2059, %v633
      %v2064 = vmul.f32 %v2055, %v634
      %v2065 = vmul.f32 %v2060, %v633
      %v2066 = vmul.f32 %v2056, %v634
      %v2067 = vmul.f32 %v2061, %v633
      %v2068 = vmul.f32 %v2057, %v634
      %v2069 = vmul.f32 %v2062, %v633
      %v2070 = vmul.f32 %v2058, %v634
      %2071 = vrot.lane.b32.xlu0 %v2031, 127
      %v2072 = vpop.permute.xlu0 %2071
      %2073 = vrot.lane.b32.xlu0 %v2033, 127
      %v2074 = vpop.permute.xlu0 %2073
      %2075 = vrot.lane.b32.xlu0 %v2035, 127
      %v2076 = vpop.permute.xlu0 %2075
      %2077 = vrot.lane.b32.xlu0 %v2037, 127
      %v2078 = vpop.permute.xlu0 %2077
      %2079 = vrot.lane.b32.xlu0 %v2032, 127
      %v2080 = vpop.permute.xlu0 %2079
      %2081 = vrot.lane.b32.xlu0 %v2034, 127
      %v2082 = vpop.permute.xlu0 %2081
      %2083 = vrot.lane.b32.xlu0 %v2036, 127
      %v2084 = vpop.permute.xlu0 %2083
      %2085 = vrot.lane.b32.xlu0 %v2038, 127
      %v2086 = vpop.permute.xlu0 %2085
      %v2087 = vsel %vm643, %v2072, %v2080
      %v2088 = vsel %vm643, %v2074, %v2082
      %v2089 = vsel %vm643, %v2076, %v2084
      %v2090 = vsel %vm643, %v2078, %v2086
      %v2091 = vsel %vm643, %v2080, %v2072
      %v2092 = vsel %vm643, %v2082, %v2074
      %v2093 = vsel %vm643, %v2084, %v2076
      %v2094 = vsel %vm643, %v2086, %v2078
      %v2095 = vmul.f32 %v2087, %v649
      %v2096 = vmul.f32 %v2091, %v650
      %v2097 = vmul.f32 %v2088, %v649
      %v2098 = vmul.f32 %v2092, %v650
      %v2099 = vmul.f32 %v2089, %v649
      %v2100 = vmul.f32 %v2093, %v650
      %v2101 = vmul.f32 %v2090, %v649
      %v2102 = vmul.f32 %v2094, %v650
      %v2103 = vmax.f32 %v2063, %v2095
      %v2104 = vmax.f32 %v2064, %v2096
      %v2105 = vmax.f32 %v2065, %v2097
      %v2106 = vmax.f32 %v2066, %v2098
      %v2107 = vmax.f32 %v2067, %v2099
      %v2108 = vmax.f32 %v2068, %v2100
      %v2109 = vmax.f32 %v2069, %v2101
      %v2110 = vmax.f32 %v2070, %v2102
      %v2111 = vmax.f32 %v2031, %v2103
      %v2112 = vmax.f32 %v2032, %v2104
      %v2113 = vmax.f32 %v2033, %v2105
      %v2114 = vmax.f32 %v2034, %v2106
      %v2115 = vmax.f32 %v2035, %v2107
      %v2116 = vmax.f32 %v2036, %v2108
      %v2117 = vmax.f32 %v2037, %v2109
      %v2118 = vmax.f32 %v2038, %v2110
      %2119 = vrot.lane.b32.xlu0 %v2111, 16
      %v2120 = vpop.permute.xlu0 %2119
      %2121 = vrot.lane.b32.xlu0 %v2113, 16
      %v2122 = vpop.permute.xlu0 %2121
      %2123 = vrot.lane.b32.xlu0 %v2115, 16
      %v2124 = vpop.permute.xlu0 %2123
      %2125 = vrot.lane.b32.xlu0 %v2117, 16
      %v2126 = vpop.permute.xlu0 %2125
      %2127 = vrot.lane.b32.xlu0 %v2112, 16
      %v2128 = vpop.permute.xlu0 %2127
      %2129 = vrot.lane.b32.xlu0 %v2114, 16
      %v2130 = vpop.permute.xlu0 %2129
      %2131 = vrot.lane.b32.xlu0 %v2116, 16
      %v2132 = vpop.permute.xlu0 %2131
      %2133 = vrot.lane.b32.xlu0 %v2118, 16
      %v2134 = vpop.permute.xlu0 %2133
      %v2135 = vsel %vm410, %v2120, %v2128
      %v2136 = vsel %vm410, %v2122, %v2130
      %v2137 = vsel %vm410, %v2124, %v2132
      %v2138 = vsel %vm410, %v2126, %v2134
      %v2139 = vsel %vm410, %v2128, %v2120
      %v2140 = vsel %vm410, %v2130, %v2122
      %v2141 = vsel %vm410, %v2132, %v2124
      %v2142 = vsel %vm410, %v2134, %v2126
      %v2143 = vmul.f32 %v2139, %v416
      %v2144 = vmul.f32 %v2135, %v417
      %v2145 = vmul.f32 %v2140, %v416
      %v2146 = vmul.f32 %v2136, %v417
      %v2147 = vmul.f32 %v2141, %v416
      %v2148 = vmul.f32 %v2137, %v417
      %v2149 = vmul.f32 %v2142, %v416
      %v2150 = vmul.f32 %v2138, %v417
      %2151 = vrot.lane.b32.xlu0 %v2111, 112
      %v2152 = vpop.permute.xlu0 %2151
      %2153 = vrot.lane.b32.xlu0 %v2113, 112
      %v2154 = vpop.permute.xlu0 %2153
      %2155 = vrot.lane.b32.xlu0 %v2115, 112
      %v2156 = vpop.permute.xlu0 %2155
      %2157 = vrot.lane.b32.xlu0 %v2117, 112
      %v2158 = vpop.permute.xlu0 %2157
      %2159 = vrot.lane.b32.xlu0 %v2112, 112
      %v2160 = vpop.permute.xlu0 %2159
      %2161 = vrot.lane.b32.xlu0 %v2114, 112
      %v2162 = vpop.permute.xlu0 %2161
      %2163 = vrot.lane.b32.xlu0 %v2116, 112
      %v2164 = vpop.permute.xlu0 %2163
      %2165 = vrot.lane.b32.xlu0 %v2118, 112
      %v2166 = vpop.permute.xlu0 %2165
      %v2167 = vsel %vm798, %v2152, %v2160
      %v2168 = vsel %vm798, %v2154, %v2162
      %v2169 = vsel %vm798, %v2156, %v2164
      %v2170 = vsel %vm798, %v2158, %v2166
      %v2171 = vsel %vm798, %v2160, %v2152
      %v2172 = vsel %vm798, %v2162, %v2154
      %v2173 = vsel %vm798, %v2164, %v2156
      %v2174 = vsel %vm798, %v2166, %v2158
      %v2175 = vmul.f32 %v2167, %v804
      %v2176 = vmul.f32 %v2171, %v805
      %v2177 = vmul.f32 %v2168, %v804
      %v2178 = vmul.f32 %v2172, %v805
      %v2179 = vmul.f32 %v2169, %v804
      %v2180 = vmul.f32 %v2173, %v805
      %v2181 = vmul.f32 %v2170, %v804
      %v2182 = vmul.f32 %v2174, %v805
      %v2183 = vmax.f32 %v2143, %v2175
      %v2184 = vmax.f32 %v2144, %v2176
      %v2185 = vmax.f32 %v2145, %v2177
      %v2186 = vmax.f32 %v2146, %v2178
      %v2187 = vmax.f32 %v2147, %v2179
      %v2188 = vmax.f32 %v2148, %v2180
      %v2189 = vmax.f32 %v2149, %v2181
      %v2190 = vmax.f32 %v2150, %v2182
      %v2191 = vmax.f32 %v2111, %v2183
      %v2192 = vmax.f32 %v2112, %v2184
      %v2193 = vmax.f32 %v2113, %v2185
      %v2194 = vmax.f32 %v2114, %v2186
      %v2195 = vmax.f32 %v2115, %v2187
      %v2196 = vmax.f32 %v2116, %v2188
      %v2197 = vmax.f32 %v2117, %v2189
      %v2198 = vmax.f32 %v2118, %v2190
      %2199 = vst [vmem:[%s248] sm:$0xff] %v2191
      %2200 = vst [vmem:[%s248 + $0x8] sm:$0xff] %v2192
      %2201 = vst [vmem:[%s248 + $0x10] sm:$0xff] %v2193
      %2202 = vst [vmem:[%s248 + $0x18] sm:$0xff] %v2194
      %2203 = vst [vmem:[%s248 + $0x20] sm:$0xff] %v2195
      %2204 = vst [vmem:[%s248 + $0x28] sm:$0xff] %v2196
      %2205 = vst [vmem:[%s248 + $0x30] sm:$0xff] %v2197
      %2206 = vst [vmem:[%s248 + $0x38] sm:$0xff] %v2198
      %p2207 = scmp.lt.s32.totalorder %s17, 1
      %s2208 = scalar_select %p2207, %s17, 1
      %s2209 = smul.addr %s2208, 8
      %s2210 = smul.addr %s2209, 8
      %s2211 = scalar_lea.vmem %s6, %s2210
      // Predicated region
      $region45: #{encoder_forward.1} parent=43 // pred_check
        %p2212 = pneg %p166
      $region46: #{encoder_forward.1} parent=43 // pred_check_branch
        %2214 = sbr.rel (%p2212) target = $region48
      $region47: #{encoder_forward.1} parent=43 // pred_region
        _
      $region48: #{encoder_forward.1} parent=43 // pred_fallthru
        _
    $region44: #{encoder_forward.1} parent=5 // pred_fallthru
      _
    %p2215 = scmp.le.s32.totalorder 2, %s12
    // Predicated region
    $region49: #{encoder_forward.1} parent=5 // pred_check
      %p2216 = pneg %p2215
    $region50: #{encoder_forward.1} parent=5 // pred_check_branch
      %2218 = sbr.rel (%p2216) target = $region52
    $region51: #{encoder_forward.1} parent=5 // pred_region
      %s2219 = ssub.s32 %s12, 2
      // Predicated region
      $region53: #{encoder_forward.1} parent=51 // pred_check
        %p2220 = pneg %p172
      $region54: #{encoder_forward.1} parent=51 // pred_check_branch
        %2222 = sbr.rel (%p2220) target = $region56
      $region55: #{encoder_forward.1} parent=51 // pred_region
        %p2223 = scmp.lt.s32.totalorder %s18, 1
        %s2224 = scalar_select %p2223, %s18, 1
        %s2225 = smul.addr %s2224, 8
        %s2226 = smul.addr %s2225, 8
        %s2227 = scalar_lea.vmem %s6, %s2226
      $region56: #{encoder_forward.1} parent=51 // pred_fallthru
        _
    $region52: #{encoder_forward.1} parent=5 // pred_fallthru
      _
  $region6: #{encoder_forward.1} parent=0 // loop_footer
    %s16 = sadd.s32 1, %s12
  $region7: #{encoder_forward.1} parent=0 // loop_footer_branch
    %11 = sbr.rel target = $region3
  $region8: #{encoder_forward.1} parent=0 // loop_exit
    _

// kernel: encoder_forward.1
$region0: #{encoder_forward.1}
  #allocation0 [shape = 'u32[]', space=smem, size = 0x4, offset = 0x4, fixed_abs, tag = 'smem constant byte address 0x4 - core index']
  #allocation1 [shape = 'u32[72,128]{1,0:T(1,128)}', space=vmem, size = 0x9000, scoped, tag = 'internal scratch']
  %s0 = inlined_call_operand.vmem [shape: f32[25,256], index: 0, kind: input, shape index: {}]
  %s1 = inlined_call_operand.vmem [shape: f32[2,1,256], index: 1, kind: input, shape index: {}]
  %s2 = inlined_call_operand.vmem [shape: f32[5,16,5], index: 2, kind: input, shape index: {}]
  %s3 = inlined_call_operand.vmem [shape: f32[16,1], index: 3, kind: input, shape index: {}]
  %s4 = inlined_call_operand.vmem [shape: f32[5,32,80], index: 4, kind: input, shape index: {}]
  %s5 = inlined_call_operand.vmem [shape: f32[32,1], index: 5, kind: input, shape index: {}]
  %s6 = inlined_call_operand.vmem [shape: f32[2,32,256], index: 6, kind: output, shape index: {}]
  %s7 = sld [smem:[#allocation0]]
  $region57: #{encoder_forward.1} parent=0
    _
  %s9 = ssub.s32 1, %s7
  %s10 = scalar_select 0, %s9, %s7
  loop: start=0, step=1, limit=4
  $region2: #{encoder_forward.1} parent=0 // loop_pre_header
    _
  $region3: #{encoder_forward.1} parent=0 // loop_header
    %s12 = sphi 0, %s16
    %p13 = scmp.ge.s32.totalorder %s12, 4
    %s20 = sphi 0, %s20
    %s22 = sphi 0, %s20
    %s23 = sphi 0, %s22
    %s37 = sphi 0, %s23
    %s43 = sphi 0, %s45
    %s46 = sphi 0, %s43
    %s47 = sphi 0, %s46
    %s63 = sphi 0, %s47
    %s67 = sphi 0, %s67
    %s69 = sphi 0, %s67
    %s70 = sphi 0, %s69
    %s84 = sphi 0, %s70
    %s88 = sphi 0, %s88
    %s90 = sphi 0, %s88
    %s91 = sphi 0, %s90
    %s105 = sphi 0, %s91
    %s109 = sphi 0, %s109
    %s111 = sphi 0, %s109
    %s112 = sphi 0, %s111
    %s126 = sphi 0, %s112
    %s130 = sphi 0, %s130
    %s132 = sphi 0, %s130
    %s133 = sphi 0, %s132
    %s147 = sphi 0, %s133
    %s153 = sphi 0, %s155
    %s156 = sphi 0, %s153
    %s157 = sphi 0, %s156
    %s173 = sphi 0, %s157
  $region4: #{encoder_forward.1} parent=0 // loop_header_branch
    %15 = sbr.rel (%p13) target = $region8
  $region5: #{encoder_forward.1} parent=0 // loop_body
    %s17 = ssub.s32 %s12, 1
    %s18 = ssub.s32 %s12, 2
    %s19 = sadd.s32 %s12, 1
    %s21 = sadd.s32 %s20, 1
    %p24 = scmp.eq.s32.totalorder %s12, 1
    %p25 = scmp.ne.s32.totalorder %s20, %s22
    %p26 = scmp.eq.s32.totalorder %s12, 0
    %p27 = por %p25, %p26
    %p28 = scmp.ne.s32.totalorder %s20, %s22
    %p29 = scmp.eq.s32.totalorder %s17, 1
    %p30 = por %p28, %p29
    %p31 = scmp.ne.s32.totalorder %s22, %s23
    %p32 = scmp.eq.s32.totalorder %s17, 0
    %p33 = por %p31, %p32
    %p34 = scmp.ne.s32.totalorder %s22, %s23
    %p35 = scmp.eq.s32.totalorder %s18, 1
    %p36 = por %p34, %p35
    %p38 = scmp.ne.s32.totalorder %s23, %s37
    %p39 = scmp.eq.s32.totalorder %s18, 0
    %p40 = por %p38, %p39
    %s41 = ssub.s32 %s12, %s19
    %p42 = scmp.eq.s32.totalorder %s41, 0
    %s44 = sadd.s32 %s43, 1
    %s45 = scalar_select %p42, %s43, %s44
    %p48 = pneg %p42
    %p49 = scmp.eq.s32.totalorder %s12, 1
    %p50 = por %p48, %p49
    %p51 = scmp.ne.s32.totalorder %s43, %s46
    %p52 = scmp.eq.s32.totalorder %s12, 0
    %p53 = por %p51, %p52
    %p54 = scmp.ne.s32.totalorder %s43, %s46
    %p55 = scmp.eq.s32.totalorder %s17, 1
    %p56 = por %p54, %p55
    %p57 = scmp.ne.s32.totalorder %s46, %s47
    %p58 = scmp.eq.s32.totalorder %s17, 0
    %p59 = por %p57, %p58
    %p60 = scmp.ne.s32.totalorder %s46, %s47
    %p61 = scmp.eq.s32.totalorder %s18, 1
    %p62 = por %p60, %p61
    %p64 = scmp.ne.s32.totalorder %s47, %s63
    %p65 = scmp.eq.s32.totalorder %s18, 0
    %p66 = por %p64, %p65
    %s68 = sadd.s32 %s67, 1
    %p71 = scmp.eq.s32.totalorder %s12, 1
    %p72 = scmp.ne.s32.totalorder %s67, %s69
    %p73 = scmp.eq.s32.totalorder %s12, 0
    %p74 = por %p72, %p73
    %p75 = scmp.ne.s32.totalorder %s67, %s69
    %p76 = scmp.eq.s32.totalorder %s17, 1
    %p77 = por %p75, %p76
    %p78 = scmp.ne.s32.totalorder %s69, %s70
    %p79 = scmp.eq.s32.totalorder %s17, 0
    %p80 = por %p78, %p79
    %p81 = scmp.ne.s32.totalorder %s69, %s70
    %p82 = scmp.eq.s32.totalorder %s18, 1
    %p83 = por %p81, %p82
    %p85 = scmp.ne.s32.totalorder %s70, %s84
    %p86 = scmp.eq.s32.totalorder %s18, 0
    %p87 = por %p85, %p86
    %s89 = sadd.s32 %s88, 1
    %p92 = scmp.eq.s32.totalorder %s12, 1
    %p93 = scmp.ne.s32.totalorder %s88, %s90
    %p94 = scmp.eq.s32.totalorder %s12, 0
    %p95 = por %p93, %p94
    %p96 = scmp.ne.s32.totalorder %s88, %s90
    %p97 = scmp.eq.s32.totalorder %s17, 1
    %p98 = por %p96, %p97
    %p99 = scmp.ne.s32.totalorder %s90, %s91
    %p100 = scmp.eq.s32.totalorder %s17, 0
    %p101 = por %p99, %p100
    %p102 = scmp.ne.s32.totalorder %s90, %s91
    %p103 = scmp.eq.s32.totalorder %s18, 1
    %p104 = por %p102, %p103
    %p106 = scmp.ne.s32.totalorder %s91, %s105
    %p107 = scmp.eq.s32.totalorder %s18, 0
    %p108 = por %p106, %p107
    %s110 = sadd.s32 %s109, 1
    %p113 = scmp.eq.s32.totalorder %s12, 1
    %p114 = scmp.ne.s32.totalorder %s109, %s111
    %p115 = scmp.eq.s32.totalorder %s12, 0
    %p116 = por %p114, %p115
    %p117 = scmp.ne.s32.totalorder %s109, %s111
    %p118 = scmp.eq.s32.totalorder %s17, 1
    %p119 = por %p117, %p118
    %p120 = scmp.ne.s32.totalorder %s111, %s112
    %p121 = scmp.eq.s32.totalorder %s17, 0
    %p122 = por %p120, %p121
    %p123 = scmp.ne.s32.totalorder %s111, %s112
    %p124 = scmp.eq.s32.totalorder %s18, 1
    %p125 = por %p123, %p124
    %p127 = scmp.ne.s32.totalorder %s112, %s126
    %p128 = scmp.eq.s32.totalorder %s18, 0
    %p129 = por %p127, %p128
    %s131 = sadd.s32 %s130, 1
    %p134 = scmp.eq.s32.totalorder %s12, 1
    %p135 = scmp.ne.s32.totalorder %s130, %s132
    %p136 = scmp.eq.s32.totalorder %s12, 0
    %p137 = por %p135, %p136
    %p138 = scmp.ne.s32.totalorder %s130, %s132
    %p139 = scmp.eq.s32.totalorder %s17, 1
    %p140 = por %p138, %p139
    %p141 = scmp.ne.s32.totalorder %s132, %s133
    %p142 = scmp.eq.s32.totalorder %s17, 0
    %p143 = por %p141, %p142
    %p144 = scmp.ne.s32.totalorder %s132, %s133
    %p145 = scmp.eq.s32.totalorder %s18, 1
    %p146 = por %p144, %p145
    %p148 = scmp.ne.s32.totalorder %s133, %s147
    %p149 = scmp.eq.s32.totalorder %s18, 0
    %p150 = por %p148, %p149
    %s151 = ssub.s32 %s12, %s19
    %p152 = scmp.eq.s32.totalorder %s151, 0
    %s154 = sadd.s32 %s153, 1
    %s155 = scalar_select %p152, %s153, %s154
    %p158 = pneg %p152
    %p159 = scmp.eq.s32.totalorder %s12, 1
    %p160 = por %p158, %p159
    %p161 = scmp.ne.s32.totalorder %s153, %s156
    %p162 = scmp.eq.s32.totalorder %s12, 0
    %p163 = por %p161, %p162
    %p164 = scmp.ne.s32.totalorder %s153, %s156
    %p165 = scmp.eq.s32.totalorder %s17, 1
    %p166 = por %p164, %p165
    %p167 = scmp.ne.s32.totalorder %s156, %s157
    %p168 = scmp.eq.s32.totalorder %s17, 0
    %p169 = por %p167, %p168
    %p170 = scmp.ne.s32.totalorder %s156, %s157
    %p171 = scmp.eq.s32.totalorder %s18, 1
    %p172 = por %p170, %p171
    %p174 = scmp.ne.s32.totalorder %s157, %s173
    %p175 = scmp.eq.s32.totalorder %s18, 0
    %p176 = por %p174, %p175
    %p177 = scmp.le.s32.totalorder 1, %s12
    %p178 = scmp.lt.s32.totalorder %s12, 3
    %p179 = pnand %p177, %p178
    %p180 = pneg %p179
    // Predicated region
    $region9: #{encoder_forward.1} parent=5 // pred_check
      _
    $region10: #{encoder_forward.1} parent=5 // pred_check_branch
      %182 = sbr.rel (%p179) target = $region12
    $region11: #{encoder_forward.1} parent=5 // pred_region
      %s183 = ssub.s32 %s12, 1
      // Predicated region
      $region13: #{encoder_forward.1} parent=11 // pred_check
        %p184 = pneg %p33
      $region14: #{encoder_forward.1} parent=11 // pred_check_branch
        %186 = sbr.rel (%p184) target = $region16
      $region15: #{encoder_forward.1} parent=11 // pred_region
        _
      $region16: #{encoder_forward.1} parent=11 // pred_fallthru
        _
      // Predicated region
      $region17: #{encoder_forward.1} parent=11 // pred_check
        %p187 = pneg %p80
      $region18: #{encoder_forward.1} parent=11 // pred_check_branch
        %189 = sbr.rel (%p187) target = $region20
      $region19: #{encoder_forward.1} parent=11 // pred_region
        _
      $region20: #{encoder_forward.1} parent=11 // pred_fallthru
        _
      // Predicated region
      $region21: #{encoder_forward.1} parent=11 // pred_check
        %p190 = pneg %p101
      $region22: #{encoder_forward.1} parent=11 // pred_check_branch
        %192 = sbr.rel (%p190) target = $region24
      $region23: #{encoder_forward.1} parent=11 // pred_region
        _
      $region24: #{encoder_forward.1} parent=11 // pred_fallthru
        _
      // Predicated region
      $region25: #{encoder_forward.1} parent=11 // pred_check
        %p193 = pneg %p122
      $region26: #{encoder_forward.1} parent=11 // pred_check_branch
        %195 = sbr.rel (%p193) target = $region28
      $region27: #{encoder_forward.1} parent=11 // pred_region
        _
      $region28: #{encoder_forward.1} parent=11 // pred_fallthru
        _
      // Predicated region
      $region29: #{encoder_forward.1} parent=11 // pred_check
        %p196 = pneg %p143
      $region30: #{encoder_forward.1} parent=11 // pred_check_branch
        %198 = sbr.rel (%p196) target = $region32
      $region31: #{encoder_forward.1} parent=11 // pred_region
        _
      $region32: #{encoder_forward.1} parent=11 // pred_fallthru
        _
    $region12: #{encoder_forward.1} parent=5 // pred_fallthru
      _
    %p199 = scmp.lt.s32.totalorder %s12, 2
    // Predicated region
    $region33: #{encoder_forward.1} parent=5 // pred_check
      %p200 = pneg %p199
    $region34: #{encoder_forward.1} parent=5 // pred_check_branch
      %202 = sbr.rel (%p200) target = $region36
    $region35: #{encoder_forward.1} parent=5 // pred_region
      // Predicated region
      $region37: #{encoder_forward.1} parent=35 // pred_check
        %p203 = pneg %p53
      $region38: #{encoder_forward.1} parent=35 // pred_check_branch
        %205 = sbr.rel (%p203) target = $region40
      $region39: #{encoder_forward.1} parent=35 // pred_region
        %p206 = scmp.lt.s32.totalorder %s12, 1
        %s207 = scalar_select %p206, %s12, 1
        %s208 = smul.addr %s207, 2
        %s209 = scalar_lea.vmem %s1, %s208
      $region40: #{encoder_forward.1} parent=35 // pred_fallthru
        _
    $region36: #{encoder_forward.1} parent=5 // pred_fallthru
      _
    %p210 = scmp.le.s32.totalorder 1, %s12
    %p211 = scmp.lt.s32.totalorder %s12, 3
    %p212 = pnand %p210, %p211
    %p213 = pneg %p212
    // Predicated region
    $region41: #{encoder_forward.1} parent=5 // pred_check
      _
    $region42: #{encoder_forward.1} parent=5 // pred_check_branch
      %215 = sbr.rel (%p212) target = $region44
    $region43: #{encoder_forward.1} parent=5 // pred_region
      %s216 = ssub.s32 %s12, 1
      %p217 = pneg %p33
      %p218 = pneg %p30
      %p219 = scmp.lt.s32.totalorder %s17, 1
      %s220 = scalar_select %p219, %s17, 1
      %s221 = smul.addr %s220, 2
      %s222 = scalar_lea.vmem %s1, %s221
      %p223 = pneg %p59
      %p224 = pneg %p56
      %p225 = pneg %p80
      %p226 = pneg %p77
      %p227 = pneg %p101
      %p228 = pneg %p98
      %p229 = pneg %p122
      %p230 = pneg %p119
      %p231 = pneg %p143
      %p232 = pneg %p140
      %p233 = pneg %p169
      %p234 = pneg %p166
      %p235 = scmp.lt.s32.totalorder %s17, 1
      %s236 = scalar_select %p235, %s17, 1
      %s237 = smul.addr %s236, 8
      %s238 = smul.addr %s237, 8
      %s239 = scalar_lea.vmem %s6, %s238
      %p240 = scmp.lt.s32.totalorder %s17, 1
      %s241 = scalar_select %p240, %s17, 1
      %s242 = smul.addr %s241, 2
      %s243 = scalar_lea.vmem %s1, %s242
      %p244 = scmp.lt.s32.totalorder %s17, 1
      %s245 = scalar_select %p244, %s17, 1
      %s246 = smul.addr %s245, 8
      %s247 = smul.addr %s246, 8
      %s248 = scalar_lea.vmem %s6, %s247
      %v249 = vld [vmem:[%s243] sm:$0x3]
      %v251 = vperm.slane %v249, 1
      %252 = vrot.lane.b32.xlu0 %v251, 34
      %v253 = vpop.permute.xlu0 %252
      %v255 = vperm.slane %v249, 0
      %256 = vrot.lane.b32.xlu0 %v255, 34
      %v257 = vpop.permute.xlu0 %256
      %vm258 = vcmask 277504
      %v259 = vsel %vm258, %v257, %v253
      %v262 = vsel %vm258, %v253, %v257
      %v263 = vld [vmem:[%s0] ss:$8 sm:$0x3]
      %v265 = vperm.slane %v263, 0
      %v266 = vperm.slane %v263, 1
      %v269 = vmul.f32 %v262, %v265
      %v270 = vmul.f32 %v259, %v266
      %271 = vrot.lane.b32.xlu0 %v251, 33
      %v272 = vpop.permute.xlu0 %271
      %274 = vrot.lane.b32.xlu0 %v255, 33
      %v275 = vpop.permute.xlu0 %274
      %vm276 = vcmask 269312
      %v277 = vsel %vm276, %v275, %v272
      %v280 = vsel %vm276, %v272, %v275
      %s281 = scalar_lea.vmem %s0, 1
      %v282 = vld [vmem:[%s281] ss:$8 sm:$0x3]
      %v284 = vperm.slane %v282, 0
      %v285 = vperm.slane %v282, 1
      %v288 = vmul.f32 %v280, %v284
      %v289 = vmul.f32 %v277, %v285
      %290 = vrot.lane.b32.xlu0 %v251, 32
      %v291 = vpop.permute.xlu0 %290
      %293 = vrot.lane.b32.xlu0 %v255, 32
      %v294 = vpop.permute.xlu0 %293
      %vm295 = vcmask 261120
      %v296 = vsel %vm295, %v294, %v291
      %v299 = vsel %vm295, %v291, %v294
      %s300 = scalar_lea.vmem %s0, 2
      %v301 = vld [vmem:[%s300] ss:$8 sm:$0x3]
      %v303 = vperm.slane %v301, 0
      %v304 = vperm.slane %v301, 1
      %v307 = vmul.f32 %v299, %v303
      %v308 = vmul.f32 %v296, %v304
      %309 = vrot.lane.b32.xlu0 %v251, 31
      %v310 = vpop.permute.xlu0 %309
      %312 = vrot.lane.b32.xlu0 %v255, 31
      %v313 = vpop.permute.xlu0 %312
      %vm314 = vcmask 252928
      %v315 = vsel %vm314, %v313, %v310
      %v318 = vsel %vm314, %v310, %v313
      %s319 = scalar_lea.vmem %s0, 3
      %v320 = vld [vmem:[%s319] ss:$8 sm:$0x3]
      %v322 = vperm.slane %v320, 0
      %v323 = vperm.slane %v320, 1
      %v326 = vmul.f32 %v318, %v322
      %v327 = vmul.f32 %v315, %v323
      %328 = vrot.lane.b32.xlu0 %v251, 30
      %v329 = vpop.permute.xlu0 %328
      %331 = vrot.lane.b32.xlu0 %v255, 30
      %v332 = vpop.permute.xlu0 %331
      %vm333 = vcmask 244736
      %v334 = vsel %vm333, %v332, %v329
      %v337 = vsel %vm333, %v329, %v332
      %s338 = scalar_lea.vmem %s0, 4
      %v339 = vld [vmem:[%s338] ss:$8 sm:$0x3]
      %v341 = vperm.slane %v339, 0
      %v342 = vperm.slane %v339, 1
      %v345 = vmul.f32 %v337, %v341
      %v346 = vmul.f32 %v334, %v342
      %v349 = vrot.slane %v288, 7
      %v350 = vrot.slane %v289, 7
      %v355 = vrot.slane %v307, 6
      %v356 = vrot.slane %v308, 6
      %v361 = vrot.slane %v326, 5
      %v362 = vrot.slane %v327, 5
      %v367 = vrot.slane %v345, 4
      %v368 = vrot.slane %v346, 4
      %vm371 = vcmask 1040384
      %v372 = vsel %vm371, %v269, %v349
      %v373 = vsel %vm371, %v270, %v350
      %vm374 = vcmask 1041408
      %v375 = vsel %vm374, %v372, %v355
      %v376 = vsel %vm374, %v373, %v356
      %vm377 = vcmask 1042432
      %v378 = vsel %vm377, %v375, %v361
      %v379 = vsel %vm377, %v376, %v362
      %vm380 = vcmask 1043456
      %v381 = vsel %vm380, %v378, %v367
      %v382 = vsel %vm380, %v379, %v368
      %v383 = vld [vmem:[%s2] sm:$0xff]
      %v384 = vld [vmem:[%s2 + $0x8] sm:$0xff]
      %385 = vrot.lane.b32.xlu0 %v251, 18
      %v386 = vpop.permute.xlu0 %385
      %388 = vrot.lane.b32.xlu0 %v255, 18
      %v389 = vpop.permute.xlu0 %388
      %vm390 = vcmask 146432
      %v391 = vsel %vm390, %v389, %v386
      %v394 = vsel %vm390, %v386, %v389
      %s395 = scalar_lea.vmem %s0, 5
      %v396 = vld [vmem:[%s395] ss:$8 sm:$0x3]
      %v398 = vperm.slane %v396, 0
      %v399 = vperm.slane %v396, 1
      %v402 = vmul.f32 %v394, %v398
      %v403 = vmul.f32 %v391, %v399
      %404 = vrot.lane.b32.xlu0 %v251, 17
      %v405 = vpop.permute.xlu0 %404
      %407 = vrot.lane.b32.xlu0 %v255, 17
      %v408 = vpop.permute.xlu0 %407
      %vm409 = vcmask 138240
      %v410 = vsel %vm409, %v408, %v405
      %v413 = vsel %vm409, %v405, %v408
      %s414 = scalar_lea.vmem %s0, 6
      %v415 = vld [vmem:[%s414] ss:$8 sm:$0x3]
      %v417 = vperm.slane %v415, 0
      %v418 = vperm.slane %v415, 1
      %v421 = vmul.f32 %v413, %v417
      %v422 = vmul.f32 %v410, %v418
      %423 = vrot.lane.b32.xlu0 %v251, 16
      %v424 = vpop.permute.xlu0 %423
      %426 = vrot.lane.b32.xlu0 %v255, 16
      %v427 = vpop.permute.xlu0 %426
      %vm428 = vcmask 130048
      %v429 = vsel %vm428, %v427, %v424
      %v432 = vsel %vm428, %v424, %v427
      %s433 = scalar_lea.vmem %s0, 7
      %v434 = vld [vmem:[%s433] ss:$8 sm:$0x3]
      %v436 = vperm.slane %v434, 0
      %v437 = vperm.slane %v434, 1
      %v440 = vmul.f32 %v432, %v436
      %v441 = vmul.f32 %v429, %v437
      %442 = vrot.lane.b32.xlu0 %v251, 15
      %v443 = vpop.permute.xlu0 %442
      %445 = vrot.lane.b32.xlu0 %v255, 15
      %v446 = vpop.permute.xlu0 %445
      %vm447 = vcmask 121856
      %v448 = vsel %vm447, %v446, %v443
      %v451 = vsel %vm447, %v443, %v446
      %s452 = scalar_lea.vmem %s0, 16
      %v453 = vld [vmem:[%s452] ss:$8 sm:$0x3]
      %v455 = vperm.slane %v453, 0
      %v456 = vperm.slane %v453, 1
      %v459 = vmul.f32 %v451, %v455
      %v460 = vmul.f32 %v448, %v456
      %461 = vrot.lane.b32.xlu0 %v251, 14
      %v462 = vpop.permute.xlu0 %461
      %464 = vrot.lane.b32.xlu0 %v255, 14
      %v465 = vpop.permute.xlu0 %464
      %vm466 = vcmask 113664
      %v467 = vsel %vm466, %v465, %v462
      %v470 = vsel %vm466, %v462, %v465
      %s471 = scalar_lea.vmem %s0, 17
      %v472 = vld [vmem:[%s471] ss:$8 sm:$0x3]
      %v474 = vperm.slane %v472, 0
      %v475 = vperm.slane %v472, 1
      %v478 = vmul.f32 %v470, %v474
      %v479 = vmul.f32 %v467, %v475
      %v482 = vrot.slane %v421, 7
      %v483 = vrot.slane %v422, 7
      %v488 = vrot.slane %v440, 6
      %v489 = vrot.slane %v441, 6
      %v494 = vrot.slane %v459, 5
      %v495 = vrot.slane %v460, 5
      %v500 = vrot.slane %v478, 4
      %v501 = vrot.slane %v479, 4
      %v504 = vsel %vm371, %v402, %v482
      %v505 = vsel %vm371, %v403, %v483
      %v506 = vsel %vm374, %v504, %v488
      %v507 = vsel %vm374, %v505, %v489
      %v508 = vsel %vm377, %v506, %v494
      %v509 = vsel %vm377, %v507, %v495
      %v510 = vsel %vm380, %v508, %v500
      %v511 = vsel %vm380, %v509, %v501
      %s512 = scalar_lea.vmem %s2, 16
      %v513 = vld [vmem:[%s512] sm:$0xff]
      %v514 = vld [vmem:[%s512 + $0x8] sm:$0xff]
      %vm515 = vcmask 39936
      %v517 = vsel %vm515, %v513, 0
      %v520 = vsel %vm515, %v514, 0
      %vm522 = vcmask 1044480
      %v524 = vsel %vm522, %v510, 0
      %v527 = vsel %vm522, %v511, 0
      %529 = vmatpush.msra.mxu0 0.0
      %530 = vmatpush.msra.mxu0 0.0
      %531 = vmatpush.msra.mxu0 0.0
      %532 = vmatpush.msra.mxu0 0.0
      %533 = vmatpush.msra.mxu0 0.0
      %534 = vmatpush.msra.mxu0 0.0
      %535 = vmatpush.msra.mxu0 0.0
      %536 = vmatpush.msra.mxu0 0.0
      %537 = vmatpush.msra.mxu0 0.0
      %538 = vmatpush.msra.mxu0 0.0
      %539 = vmatpush.msra.mxu0 0.0
      %540 = vmatpush.msra.mxu0 0.0
      %541 = vmatpush.msra.mxu0 0.0
      %542 = vmatpush.msra.mxu0 0.0
      %543 = vmatpush.msra.mxu0 0.0
      %544 = vmatpush.msra.mxu0 %v524
      %545 = vmatmul.f32.gmra.mxu0 %v517
      %v546 = vpop.f32.mrf.mxu0
      %v547 = vadd.f32 0.0, %v546
      %548 = vmatmul.f32.gmra.mxu0 %v520
      %v549 = vpop.f32.mrf.mxu0
      %v550 = vadd.f32 0.0, %v549
      %551 = vdwg.mxu0
      %552 = vmatpush.msra.mxu0 0.0
      %553 = vmatpush.msra.mxu0 0.0
      %554 = vmatpush.msra.mxu0 0.0
      %555 = vmatpush.msra.mxu0 0.0
      %556 = vmatpush.msra.mxu0 0.0
      %557 = vmatpush.msra.mxu0 0.0
      %558 = vmatpush.msra.mxu0 0.0
      %559 = vmatpush.msra.mxu0 0.0
      %560 = vmatpush.msra.mxu0 0.0
      %561 = vmatpush.msra.mxu0 0.0
      %562 = vmatpush.msra.mxu0 0.0
      %563 = vmatpush.msra.mxu0 0.0
      %564 = vmatpush.msra.mxu0 0.0
      %565 = vmatpush.msra.mxu0 0.0
      %566 = vmatpush.msra.mxu0 0.0
      %567 = vmatpush.msra.mxu0 %v527
      %568 = vmatmul.f32.gmra.mxu0 %v517
      %v569 = vpop.f32.mrf.mxu0
      %v570 = vadd.f32 0.0, %v569
      %571 = vmatmul.f32.gmra.mxu0 %v520
      %v572 = vpop.f32.mrf.mxu0
      %v573 = vadd.f32 0.0, %v572
      %574 = vdwg.mxu0
      %v576 = vsel %vm515, %v383, 0
      %v579 = vsel %vm515, %v384, 0
      %v582 = vsel %vm522, %v381, 0
      %v585 = vsel %vm522, %v382, 0
      %587 = vmatpush.msra.mxu0 0.0
      %588 = vmatpush.msra.mxu0 0.0
      %589 = vmatpush.msra.mxu0 0.0
      %590 = vmatpush.msra.mxu0 0.0
      %591 = vmatpush.msra.mxu0 0.0
      %592 = vmatpush.msra.mxu0 0.0
      %593 = vmatpush.msra.mxu0 0.0
      %594 = vmatpush.msra.mxu0 0.0
      %595 = vmatpush.msra.mxu0 0.0
      %596 = vmatpush.msra.mxu0 0.0
      %597 = vmatpush.msra.mxu0 0.0
      %598 = vmatpush.msra.mxu0 0.0
      %599 = vmatpush.msra.mxu0 0.0
      %600 = vmatpush.msra.mxu0 0.0
      %601 = vmatpush.msra.mxu0 0.0
      %602 = vmatpush.msra.mxu0 %v582
      %603 = vmatmul.f32.gmra.mxu0 %v576
      %v604 = vpop.f32.mrf.mxu0
      %v605 = vadd.f32 %v547, %v604
      %606 = vmatmul.f32.gmra.mxu0 %v579
      %v607 = vpop.f32.mrf.mxu0
      %v608 = vadd.f32 %v550, %v607
      %609 = vdwg.mxu0
      %610 = vmatpush.msra.mxu0 0.0
      %611 = vmatpush.msra.mxu0 0.0
      %612 = vmatpush.msra.mxu0 0.0
      %613 = vmatpush.msra.mxu0 0.0
      %614 = vmatpush.msra.mxu0 0.0
      %615 = vmatpush.msra.mxu0 0.0
      %616 = vmatpush.msra.mxu0 0.0
      %617 = vmatpush.msra.mxu0 0.0
      %618 = vmatpush.msra.mxu0 0.0
      %619 = vmatpush.msra.mxu0 0.0
      %620 = vmatpush.msra.mxu0 0.0
      %621 = vmatpush.msra.mxu0 0.0
      %622 = vmatpush.msra.mxu0 0.0
      %623 = vmatpush.msra.mxu0 0.0
      %624 = vmatpush.msra.mxu0 0.0
      %625 = vmatpush.msra.mxu0 %v585
      %626 = vmatmul.f32.gmra.mxu0 %v576
      %v627 = vpop.f32.mrf.mxu0
      %v628 = vadd.f32 %v570, %v627
      %629 = vmatmul.f32.gmra.mxu0 %v579
      %v630 = vpop.f32.mrf.mxu0
      %v631 = vadd.f32 %v573, %v630
      %632 = vdwg.mxu0
      %633 = vrot.lane.b32.xlu0 %v251, 2
      %v634 = vpop.permute.xlu0 %633
      %636 = vrot.lane.b32.xlu0 %v255, 2
      %v637 = vpop.permute.xlu0 %636
      %vm638 = vcmask 15360
      %v639 = vsel %vm638, %v637, %v634
      %v642 = vsel %vm638, %v634, %v637
      %s643 = scalar_lea.vmem %s0, 18
      %v644 = vld [vmem:[%s643] ss:$8 sm:$0x3]
      %v646 = vperm.slane %v644, 0
      %v647 = vperm.slane %v644, 1
      %v650 = vmul.f32 %v642, %v646
      %v651 = vmul.f32 %v639, %v647
      %652 = vrot.lane.b32.xlu0 %v251, 1
      %v653 = vpop.permute.xlu0 %652
      %655 = vrot.lane.b32.xlu0 %v255, 1
      %v656 = vpop.permute.xlu0 %655
      %vm657 = vcmask 7168
      %v658 = vsel %vm657, %v656, %v653
      %v661 = vsel %vm657, %v653, %v656
      %s662 = scalar_lea.vmem %s0, 19
      %v663 = vld [vmem:[%s662] ss:$8 sm:$0x3]
      %v665 = vperm.slane %v663, 0
      %v666 = vperm.slane %v663, 1
      %v669 = vmul.f32 %v661, %v665
      %v670 = vmul.f32 %v658, %v666
      %671 = vrot.lane.b32.xlu0 %v255, 127
      %v672 = vpop.permute.xlu0 %671
      %673 = vrot.lane.b32.xlu0 %v251, 127
      %v674 = vpop.permute.xlu0 %673
      %vm675 = vcmask 1039360
      %v676 = vsel %vm675, %v672, %v674
      %v680 = vsel %vm675, %v674, %v672
      %s681 = scalar_lea.vmem %s0, 21
      %v682 = vld [vmem:[%s681] ss:$8 sm:$0x3]
      %v684 = vperm.slane %v682, 0
      %v685 = vperm.slane %v682, 1
      %v688 = vmul.f32 %v676, %v684
      %v689 = vmul.f32 %v680, %v685
      %690 = vrot.lane.b32.xlu0 %v255, 126
      %v691 = vpop.permute.xlu0 %690
      %692 = vrot.lane.b32.xlu0 %v251, 126
      %v693 = vpop.permute.xlu0 %692
      %vm694 = vcmask 1031168
      %v695 = vsel %vm694, %v691, %v693
      %v699 = vsel %vm694, %v693, %v691
      %s700 = scalar_lea.vmem %s0, 22
      %v701 = vld [vmem:[%s700] ss:$8 sm:$0x3]
      %v703 = vperm.slane %v701, 0
      %v704 = vperm.slane %v701, 1
      %v707 = vmul.f32 %v695, %v703
      %v708 = vmul.f32 %v699, %v704
      %v711 = vrot.slane %v669, 7
      %v712 = vrot.slane %v670, 7
      %v719 = vrot.slane %v688, 5
      %v720 = vrot.slane %v689, 5
      %v725 = vrot.slane %v707, 4
      %v726 = vrot.slane %v708, 4
      %v729 = vsel %vm371, %v650, %v711
      %v730 = vsel %vm371, %v651, %v712
      %v731 = vsel %vm374, %v729, %v255
      %v732 = vsel %vm374, %v730, %v251
      %v733 = vsel %vm377, %v731, %v719
      %v734 = vsel %vm377, %v732, %v720
      %v735 = vsel %vm380, %v733, %v725
      %v736 = vsel %vm380, %v734, %v726
      %s737 = scalar_lea.vmem %s2, 32
      %v738 = vld [vmem:[%s737] sm:$0xff]
      %v739 = vld [vmem:[%s737 + $0x8] sm:$0xff]
      %v741 = vsel %vm515, %v738, 0
      %v744 = vsel %vm515, %v739, 0
      %v747 = vsel %vm522, %v735, 0
      %v750 = vsel %vm522, %v736, 0
      %752 = vmatpush.msra.mxu0 0.0
      %753 = vmatpush.msra.mxu0 0.0
      %754 = vmatpush.msra.mxu0 0.0
      %755 = vmatpush.msra.mxu0 0.0
      %756 = vmatpush.msra.mxu0 0.0
      %757 = vmatpush.msra.mxu0 0.0
      %758 = vmatpush.msra.mxu0 0.0
      %759 = vmatpush.msra.mxu0 0.0
      %760 = vmatpush.msra.mxu0 0.0
      %761 = vmatpush.msra.mxu0 0.0
      %762 = vmatpush.msra.mxu0 0.0
      %763 = vmatpush.msra.mxu0 0.0
      %764 = vmatpush.msra.mxu0 0.0
      %765 = vmatpush.msra.mxu0 0.0
      %766 = vmatpush.msra.mxu0 0.0
      %767 = vmatpush.msra.mxu0 %v747
      %768 = vmatmul.f32.gmra.mxu0 %v741
      %v769 = vpop.f32.mrf.mxu0
      %v770 = vadd.f32 0.0, %v769
      %771 = vmatmul.f32.gmra.mxu0 %v744
      %v772 = vpop.f32.mrf.mxu0
      %v773 = vadd.f32 0.0, %v772
      %774 = vdwg.mxu0
      %775 = vmatpush.msra.mxu0 0.0
      %776 = vmatpush.msra.mxu0 0.0
      %777 = vmatpush.msra.mxu0 0.0
      %778 = vmatpush.msra.mxu0 0.0
      %779 = vmatpush.msra.mxu0 0.0
      %780 = vmatpush.msra.mxu0 0.0
      %781 = vmatpush.msra.mxu0 0.0
      %782 = vmatpush.msra.mxu0 0.0
      %783 = vmatpush.msra.mxu0 0.0
      %784 = vmatpush.msra.mxu0 0.0
      %785 = vmatpush.msra.mxu0 0.0
      %786 = vmatpush.msra.mxu0 0.0
      %787 = vmatpush.msra.mxu0 0.0
      %788 = vmatpush.msra.mxu0 0.0
      %789 = vmatpush.msra.mxu0 0.0
      %790 = vmatpush.msra.mxu0 %v750
      %791 = vmatmul.f32.gmra.mxu0 %v741
      %v792 = vpop.f32.mrf.mxu0
      %v793 = vadd.f32 0.0, %v792
      %794 = vmatmul.f32.gmra.mxu0 %v744
      %v795 = vpop.f32.mrf.mxu0
      %v796 = vadd.f32 0.0, %v795
      %797 = vdwg.mxu0
      %v798 = vadd.f32 %v605, %v770
      %v799 = vadd.f32 %v628, %v793
      %v800 = vadd.f32 %v608, %v773
      %v801 = vadd.f32 %v631, %v796
      %802 = vrot.lane.b32.xlu0 %v255, 114
      %v803 = vpop.permute.xlu0 %802
      %804 = vrot.lane.b32.xlu0 %v251, 114
      %v805 = vpop.permute.xlu0 %804
      %vm806 = vcmask 932864
      %v807 = vsel %vm806, %v803, %v805
      %v811 = vsel %vm806, %v805, %v803
      %s812 = scalar_lea.vmem %s0, 23
      %v813 = vld [vmem:[%s812] ss:$8 sm:$0x3]
      %v815 = vperm.slane %v813, 0
      %v816 = vperm.slane %v813, 1
      %v819 = vmul.f32 %v807, %v815
      %v820 = vmul.f32 %v811, %v816
      %821 = vrot.lane.b32.xlu0 %v255, 113
      %v822 = vpop.permute.xlu0 %821
      %823 = vrot.lane.b32.xlu0 %v251, 113
      %v824 = vpop.permute.xlu0 %823
      %vm825 = vcmask 924672
      %v826 = vsel %vm825, %v822, %v824
      %v830 = vsel %vm825, %v824, %v822
      %s831 = scalar_lea.vmem %s0, 32
      %v832 = vld [vmem:[%s831] ss:$8 sm:$0x3]
      %v834 = vperm.slane %v832, 0
      %v835 = vperm.slane %v832, 1
      %v838 = vmul.f32 %v826, %v834
      %v839 = vmul.f32 %v830, %v835
      %840 = vrot.lane.b32.xlu0 %v255, 112
      %v841 = vpop.permute.xlu0 %840
      %842 = vrot.lane.b32.xlu0 %v251, 112
      %v843 = vpop.permute.xlu0 %842
      %vm844 = vcmask 916480
      %v845 = vsel %vm844, %v841, %v843
      %v849 = vsel %vm844, %v843, %v841
      %s850 = scalar_lea.vmem %s0, 33
      %v851 = vld [vmem:[%s850] ss:$8 sm:$0x3]
      %v853 = vperm.slane %v851, 0
      %v854 = vperm.slane %v851, 1
      %v857 = vmul.f32 %v845, %v853
      %v858 = vmul.f32 %v849, %v854
      %859 = vrot.lane.b32.xlu0 %v255, 111
      %v860 = vpop.permute.xlu0 %859
      %861 = vrot.lane.b32.xlu0 %v251, 111
      %v862 = vpop.permute.xlu0 %861
      %vm863 = vcmask 908288
      %v864 = vsel %vm863, %v860, %v862
      %v868 = vsel %vm863, %v862, %v860
      %s869 = scalar_lea.vmem %s0, 34
      %v870 = vld [vmem:[%s869] ss:$8 sm:$0x3]
      %v872 = vperm.slane %v870, 0
      %v873 = vperm.slane %v870, 1
      %v876 = vmul.f32 %v864, %v872
      %v877 = vmul.f32 %v868, %v873
      %878 = vrot.lane.b32.xlu0 %v255, 110
      %v879 = vpop.permute.xlu0 %878
      %880 = vrot.lane.b32.xlu0 %v251, 110
      %v881 = vpop.permute.xlu0 %880
      %vm882 = vcmask 900096
      %v883 = vsel %vm882, %v879, %v881
      %v887 = vsel %vm882, %v881, %v879
      %s888 = scalar_lea.vmem %s0, 35
      %v889 = vld [vmem:[%s888] ss:$8 sm:$0x3]
      %v891 = vperm.slane %v889, 0
      %v892 = vperm.slane %v889, 1
      %v895 = vmul.f32 %v883, %v891
      %v896 = vmul.f32 %v887, %v892
      %v899 = vrot.slane %v838, 7
      %v900 = vrot.slane %v839, 7
      %v905 = vrot.slane %v857, 6
      %v906 = vrot.slane %v858, 6
      %v911 = vrot.slane %v876, 5
      %v912 = vrot.slane %v877, 5
      %v917 = vrot.slane %v895, 4
      %v918 = vrot.slane %v896, 4
      %v921 = vsel %vm371, %v819, %v899
      %v922 = vsel %vm371, %v820, %v900
      %v923 = vsel %vm374, %v921, %v905
      %v924 = vsel %vm374, %v922, %v906
      %v925 = vsel %vm377, %v923, %v911
      %v926 = vsel %vm377, %v924, %v912
      %v927 = vsel %vm380, %v925, %v917
      %v928 = vsel %vm380, %v926, %v918
      %s929 = scalar_lea.vmem %s2, 48
      %v930 = vld [vmem:[%s929] sm:$0xff]
      %v931 = vld [vmem:[%s929 + $0x8] sm:$0xff]
      %v933 = vsel %vm515, %v930, 0
      %v936 = vsel %vm515, %v931, 0
      %v939 = vsel %vm522, %v927, 0
      %v942 = vsel %vm522, %v928, 0
      %944 = vmatpush.msra.mxu0 0.0
      %945 = vmatpush.msra.mxu0 0.0
      %946 = vmatpush.msra.mxu0 0.0
      %947 = vmatpush.msra.mxu0 0.0
      %948 = vmatpush.msra.mxu0 0.0
      %949 = vmatpush.msra.mxu0 0.0
      %950 = vmatpush.msra.mxu0 0.0
      %951 = vmatpush.msra.mxu0 0.0
      %952 = vmatpush.msra.mxu0 0.0
      %953 = vmatpush.msra.mxu0 0.0
      %954 = vmatpush.msra.mxu0 0.0
      %955 = vmatpush.msra.mxu0 0.0
      %956 = vmatpush.msra.mxu0 0.0
      %957 = vmatpush.msra.mxu0 0.0
      %958 = vmatpush.msra.mxu0 0.0
      %959 = vmatpush.msra.mxu0 %v939
      %960 = vmatmul.f32.gmra.mxu0 %v933
      %v961 = vpop.f32.mrf.mxu0
      %v962 = vadd.f32 0.0, %v961
      %963 = vmatmul.f32.gmra.mxu0 %v936
      %v964 = vpop.f32.mrf.mxu0
      %v965 = vadd.f32 0.0, %v964
      %966 = vdwg.mxu0
      %967 = vmatpush.msra.mxu0 0.0
      %968 = vmatpush.msra.mxu0 0.0
      %969 = vmatpush.msra.mxu0 0.0
      %970 = vmatpush.msra.mxu0 0.0
      %971 = vmatpush.msra.mxu0 0.0
      %972 = vmatpush.msra.mxu0 0.0
      %973 = vmatpush.msra.mxu0 0.0
      %974 = vmatpush.msra.mxu0 0.0
      %975 = vmatpush.msra.mxu0 0.0
      %976 = vmatpush.msra.mxu0 0.0
      %977 = vmatpush.msra.mxu0 0.0
      %978 = vmatpush.msra.mxu0 0.0
      %979 = vmatpush.msra.mxu0 0.0
      %980 = vmatpush.msra.mxu0 0.0
      %981 = vmatpush.msra.mxu0 0.0
      %982 = vmatpush.msra.mxu0 %v942
      %983 = vmatmul.f32.gmra.mxu0 %v933
      %v984 = vpop.f32.mrf.mxu0
      %v985 = vadd.f32 0.0, %v984
      %986 = vmatmul.f32.gmra.mxu0 %v936
      %v987 = vpop.f32.mrf.mxu0
      %v988 = vadd.f32 0.0, %v987
      %989 = vdwg.mxu0
      %v990 = vadd.f32 %v798, %v962
      %v991 = vadd.f32 %v799, %v985
      %v992 = vadd.f32 %v800, %v965
      %v993 = vadd.f32 %v801, %v988
      %994 = vrot.lane.b32.xlu0 %v255, 98
      %v995 = vpop.permute.xlu0 %994
      %996 = vrot.lane.b32.xlu0 %v251, 98
      %v997 = vpop.permute.xlu0 %996
      %vm998 = vcmask 801792
      %v999 = vsel %vm998, %v995, %v997
      %v1003 = vsel %vm998, %v997, %v995
      %s1004 = scalar_lea.vmem %s0, 36
      %v1005 = vld [vmem:[%s1004] ss:$8 sm:$0x3]
      %v1007 = vperm.slane %v1005, 0
      %v1008 = vperm.slane %v1005, 1
      %v1011 = vmul.f32 %v999, %v1007
      %v1012 = vmul.f32 %v1003, %v1008
      %1013 = vrot.lane.b32.xlu0 %v255, 97
      %v1014 = vpop.permute.xlu0 %1013
      %1015 = vrot.lane.b32.xlu0 %v251, 97
      %v1016 = vpop.permute.xlu0 %1015
      %vm1017 = vcmask 793600
      %v1018 = vsel %vm1017, %v1014, %v1016
      %v1022 = vsel %vm1017, %v1016, %v1014
      %s1023 = scalar_lea.vmem %s0, 37
      %v1024 = vld [vmem:[%s1023] ss:$8 sm:$0x3]
      %v1026 = vperm.slane %v1024, 0
      %v1027 = vperm.slane %v1024, 1
      %v1030 = vmul.f32 %v1018, %v1026
      %v1031 = vmul.f32 %v1022, %v1027
      %1032 = vrot.lane.b32.xlu0 %v255, 96
      %v1033 = vpop.permute.xlu0 %1032
      %1034 = vrot.lane.b32.xlu0 %v251, 96
      %v1035 = vpop.permute.xlu0 %1034
      %vm1036 = vcmask 785408
      %v1037 = vsel %vm1036, %v1033, %v1035
      %v1041 = vsel %vm1036, %v1035, %v1033
      %s1042 = scalar_lea.vmem %s0, 38
      %v1043 = vld [vmem:[%s1042] ss:$8 sm:$0x3]
      %v1045 = vperm.slane %v1043, 0
      %v1046 = vperm.slane %v1043, 1
      %v1049 = vmul.f32 %v1037, %v1045
      %v1050 = vmul.f32 %v1041, %v1046
      %1051 = vrot.lane.b32.xlu0 %v255, 95
      %v1052 = vpop.permute.xlu0 %1051
      %1053 = vrot.lane.b32.xlu0 %v251, 95
      %v1054 = vpop.permute.xlu0 %1053
      %vm1055 = vcmask 777216
      %v1056 = vsel %vm1055, %v1052, %v1054
      %v1060 = vsel %vm1055, %v1054, %v1052
      %s1061 = scalar_lea.vmem %s0, 39
      %v1062 = vld [vmem:[%s1061] ss:$8 sm:$0x3]
      %v1064 = vperm.slane %v1062, 0
      %v1065 = vperm.slane %v1062, 1
      %v1068 = vmul.f32 %v1056, %v1064
      %v1069 = vmul.f32 %v1060, %v1065
      %1070 = vrot.lane.b32.xlu0 %v255, 94
      %v1071 = vpop.permute.xlu0 %1070
      %1072 = vrot.lane.b32.xlu0 %v251, 94
      %v1073 = vpop.permute.xlu0 %1072
      %vm1074 = vcmask 769024
      %v1075 = vsel %vm1074, %v1071, %v1073
      %v1079 = vsel %vm1074, %v1073, %v1071
      %s1080 = scalar_lea.vmem %s0, 48
      %v1081 = vld [vmem:[%s1080] ss:$8 sm:$0x3]
      %v1083 = vperm.slane %v1081, 0
      %v1084 = vperm.slane %v1081, 1
      %v1087 = vmul.f32 %v1075, %v1083
      %v1088 = vmul.f32 %v1079, %v1084
      %v1091 = vrot.slane %v1030, 7
      %v1092 = vrot.slane %v1031, 7
      %v1097 = vrot.slane %v1049, 6
      %v1098 = vrot.slane %v1050, 6
      %v1103 = vrot.slane %v1068, 5
      %v1104 = vrot.slane %v1069, 5
      %v1109 = vrot.slane %v1087, 4
      %v1110 = vrot.slane %v1088, 4
      %v1113 = vsel %vm371, %v1011, %v1091
      %v1114 = vsel %vm371, %v1012, %v1092
      %v1115 = vsel %vm374, %v1113, %v1097
      %v1116 = vsel %vm374, %v1114, %v1098
      %v1117 = vsel %vm377, %v1115, %v1103
      %v1118 = vsel %vm377, %v1116, %v1104
      %v1119 = vsel %vm380, %v1117, %v1109
      %v1120 = vsel %vm380, %v1118, %v1110
      %s1121 = scalar_lea.vmem %s2, 64
      %v1122 = vld [vmem:[%s1121] sm:$0xff]
      %v1123 = vld [vmem:[%s1121 + $0x8] sm:$0xff]
      %v1125 = vsel %vm515, %v1122, 0
      %v1128 = vsel %vm515, %v1123, 0
      %v1131 = vsel %vm522, %v1119, 0
      %v1134 = vsel %vm522, %v1120, 0
      %1136 = vmatpush.msra.mxu0 0.0
      %1137 = vmatpush.msra.mxu0 0.0
      %1138 = vmatpush.msra.mxu0 0.0
      %1139 = vmatpush.msra.mxu0 0.0
      %1140 = vmatpush.msra.mxu0 0.0
      %1141 = vmatpush.msra.mxu0 0.0
      %1142 = vmatpush.msra.mxu0 0.0
      %1143 = vmatpush.msra.mxu0 0.0
      %1144 = vmatpush.msra.mxu0 0.0
      %1145 = vmatpush.msra.mxu0 0.0
      %1146 = vmatpush.msra.mxu0 0.0
      %1147 = vmatpush.msra.mxu0 0.0
      %1148 = vmatpush.msra.mxu0 0.0
      %1149 = vmatpush.msra.mxu0 0.0
      %1150 = vmatpush.msra.mxu0 0.0
      %1151 = vmatpush.msra.mxu0 %v1131
      %1152 = vmatmul.f32.gmra.mxu0 %v1125
      %v1153 = vpop.f32.mrf.mxu0
      %v1154 = vadd.f32 0.0, %v1153
      %1155 = vmatmul.f32.gmra.mxu0 %v1128
      %v1156 = vpop.f32.mrf.mxu0
      %v1157 = vadd.f32 0.0, %v1156
      %1158 = vdwg.mxu0
      %1159 = vmatpush.msra.mxu0 0.0
      %1160 = vmatpush.msra.mxu0 0.0
      %1161 = vmatpush.msra.mxu0 0.0
      %1162 = vmatpush.msra.mxu0 0.0
      %1163 = vmatpush.msra.mxu0 0.0
      %1164 = vmatpush.msra.mxu0 0.0
      %1165 = vmatpush.msra.mxu0 0.0
      %1166 = vmatpush.msra.mxu0 0.0
      %1167 = vmatpush.msra.mxu0 0.0
      %1168 = vmatpush.msra.mxu0 0.0
      %1169 = vmatpush.msra.mxu0 0.0
      %1170 = vmatpush.msra.mxu0 0.0
      %1171 = vmatpush.msra.mxu0 0.0
      %1172 = vmatpush.msra.mxu0 0.0
      %1173 = vmatpush.msra.mxu0 0.0
      %1174 = vmatpush.msra.mxu0 %v1134
      %1175 = vmatmul.f32.gmra.mxu0 %v1125
      %v1176 = vpop.f32.mrf.mxu0
      %v1177 = vadd.f32 0.0, %v1176
      %1178 = vmatmul.f32.gmra.mxu0 %v1128
      %v1179 = vpop.f32.mrf.mxu0
      %v1180 = vadd.f32 0.0, %v1179
      %1181 = vdwg.mxu0
      %v1182 = vadd.f32 %v990, %v1154
      %v1183 = vadd.f32 %v991, %v1177
      %v1184 = vadd.f32 %v992, %v1157
      %v1185 = vadd.f32 %v993, %v1180
      %v1186 = vld [vmem:[%s3] sm:$0xff]
      %v1187 = vld [vmem:[%s3 + $0x8] sm:$0xff]
      %1189 = vset.pattern.permute.xlu0 0
      %1190 = vperm.xlu0 %1189, %v1186
      %v1191 = vpop.permute.xlu0 %1190
      %1194 = vset.pattern.permute.xlu0 0
      %1195 = vperm.xlu0 %1194, %v1187
      %v1196 = vpop.permute.xlu0 %1195
      %v1198 = vadd.f32 %v1182, %v1191
      %v1199 = vadd.f32 %v1183, %v1191
      %v1200 = vadd.f32 %v1184, %v1196
      %v1201 = vadd.f32 %v1185, %v1196
      %v1202 = vmax.f32 %v1198, 0.0
      %v1203 = vmax.f32 %v1199, 0.0
      %v1204 = vmax.f32 %v1200, 0.0
      %v1205 = vmax.f32 %v1201, 0.0
      %1208 = vrot.lane.b32.xlu0 %v1203, 1
      %v1209 = vpop.permute.xlu0 %1208
      %1210 = vrot.lane.b32.xlu0 %v1205, 1
      %v1211 = vpop.permute.xlu0 %1210
      %1216 = vrot.lane.b32.xlu0 %v1202, 1
      %v1217 = vpop.permute.xlu0 %1216
      %1218 = vrot.lane.b32.xlu0 %v1204, 1
      %v1219 = vpop.permute.xlu0 %1218
      %v1220 = vsel %vm657, %v1217, %v1209
      %v1221 = vsel %vm657, %v1219, %v1211
      %v1226 = vsel %vm657, %v1209, %v1217
      %v1227 = vsel %vm657, %v1211, %v1219
      %v1228 = vmul.f32 %v1226, %v665
      %v1229 = vmul.f32 %v1220, %v666
      %v1230 = vmul.f32 %v1227, %v665
      %v1231 = vmul.f32 %v1221, %v666
      %1232 = vrot.lane.b32.xlu0 %v1202, 127
      %v1233 = vpop.permute.xlu0 %1232
      %1234 = vrot.lane.b32.xlu0 %v1203, 127
      %v1235 = vpop.permute.xlu0 %1234
      %1236 = vrot.lane.b32.xlu0 %v1204, 127
      %v1237 = vpop.permute.xlu0 %1236
      %1238 = vrot.lane.b32.xlu0 %v1205, 127
      %v1239 = vpop.permute.xlu0 %1238
      %v1240 = vsel %vm675, %v1233, %v1235
      %v1241 = vsel %vm675, %v1237, %v1239
      %v1248 = vsel %vm675, %v1235, %v1233
      %v1249 = vsel %vm675, %v1239, %v1237
      %v1250 = vmul.f32 %v1240, %v684
      %v1251 = vmul.f32 %v1248, %v685
      %v1252 = vmul.f32 %v1241, %v684
      %v1253 = vmul.f32 %v1249, %v685
      %v1254 = vmax.f32 %v1228, %v1250
      %v1255 = vmax.f32 %v1229, %v1251
      %v1256 = vmax.f32 %v1230, %v1252
      %v1257 = vmax.f32 %v1231, %v1253
      %v1258 = vmax.f32 %v1202, %v1254
      %v1259 = vmax.f32 %v1203, %v1255
      %v1260 = vmax.f32 %v1204, %v1256
      %v1261 = vmax.f32 %v1205, %v1257
      %1264 = vrot.lane.b32.xlu0 %v1259, 16
      %v1265 = vpop.permute.xlu0 %1264
      %1266 = vrot.lane.b32.xlu0 %v1261, 16
      %v1267 = vpop.permute.xlu0 %1266
      %1272 = vrot.lane.b32.xlu0 %v1258, 16
      %v1273 = vpop.permute.xlu0 %1272
      %1274 = vrot.lane.b32.xlu0 %v1260, 16
      %v1275 = vpop.permute.xlu0 %1274
      %v1276 = vsel %vm428, %v1273, %v1265
      %v1277 = vsel %vm428, %v1275, %v1267
      %v1282 = vsel %vm428, %v1265, %v1273
      %v1283 = vsel %vm428, %v1267, %v1275
      %v1284 = vmul.f32 %v1282, %v436
      %v1285 = vmul.f32 %v1276, %v437
      %v1286 = vmul.f32 %v1283, %v436
      %v1287 = vmul.f32 %v1277, %v437
      %1288 = vrot.lane.b32.xlu0 %v1258, 112
      %v1289 = vpop.permute.xlu0 %1288
      %1290 = vrot.lane.b32.xlu0 %v1259, 112
      %v1291 = vpop.permute.xlu0 %1290
      %1292 = vrot.lane.b32.xlu0 %v1260, 112
      %v1293 = vpop.permute.xlu0 %1292
      %1294 = vrot.lane.b32.xlu0 %v1261, 112
      %v1295 = vpop.permute.xlu0 %1294
      %v1296 = vsel %vm844, %v1289, %v1291
      %v1297 = vsel %vm844, %v1293, %v1295
      %v1304 = vsel %vm844, %v1291, %v1289
      %v1305 = vsel %vm844, %v1295, %v1293
      %v1306 = vmul.f32 %v1296, %v853
      %v1307 = vmul.f32 %v1304, %v854
      %v1308 = vmul.f32 %v1297, %v853
      %v1309 = vmul.f32 %v1305, %v854
      %v1310 = vmax.f32 %v1284, %v1306
      %v1311 = vmax.f32 %v1285, %v1307
      %v1312 = vmax.f32 %v1286, %v1308
      %v1313 = vmax.f32 %v1287, %v1309
      %v1314 = vmax.f32 %v1258, %v1310
      %v1315 = vmax.f32 %v1259, %v1311
      %v1316 = vmax.f32 %v1260, %v1312
      %v1317 = vmax.f32 %v1261, %v1313
      %1320 = vrot.lane.b32.xlu0 %v1315, 34
      %v1321 = vpop.permute.xlu0 %1320
      %1322 = vrot.lane.b32.xlu0 %v1317, 34
      %v1323 = vpop.permute.xlu0 %1322
      %1328 = vrot.lane.b32.xlu0 %v1314, 34
      %v1329 = vpop.permute.xlu0 %1328
      %1330 = vrot.lane.b32.xlu0 %v1316, 34
      %v1331 = vpop.permute.xlu0 %1330
      %v1332 = vsel %vm258, %v1329, %v1321
      %v1333 = vsel %vm258, %v1331, %v1323
      %v1338 = vsel %vm258, %v1321, %v1329
      %v1339 = vsel %vm258, %v1323, %v1331
      %v1340 = vmul.f32 %v1338, %v265
      %v1341 = vmul.f32 %v1332, %v266
      %v1342 = vmul.f32 %v1339, %v265
      %v1343 = vmul.f32 %v1333, %v266
      %1344 = vrot.lane.b32.xlu0 %v1315, 33
      %v1345 = vpop.permute.xlu0 %1344
      %1346 = vrot.lane.b32.xlu0 %v1317, 33
      %v1347 = vpop.permute.xlu0 %1346
      %1350 = vrot.lane.b32.xlu0 %v1314, 33
      %v1351 = vpop.permute.xlu0 %1350
      %1352 = vrot.lane.b32.xlu0 %v1316, 33
      %v1353 = vpop.permute.xlu0 %1352
      %v1354 = vsel %vm276, %v1351, %v1345
      %v1355 = vsel %vm276, %v1353, %v1347
      %v1360 = vsel %vm276, %v1345, %v1351
      %v1361 = vsel %vm276, %v1347, %v1353
      %v1362 = vmul.f32 %v1360, %v284
      %v1363 = vmul.f32 %v1354, %v285
      %v1364 = vmul.f32 %v1361, %v284
      %v1365 = vmul.f32 %v1355, %v285
      %1366 = vrot.lane.b32.xlu0 %v1315, 32
      %v1367 = vpop.permute.xlu0 %1366
      %1368 = vrot.lane.b32.xlu0 %v1317, 32
      %v1369 = vpop.permute.xlu0 %1368
      %1372 = vrot.lane.b32.xlu0 %v1314, 32
      %v1373 = vpop.permute.xlu0 %1372
      %1374 = vrot.lane.b32.xlu0 %v1316, 32
      %v1375 = vpop.permute.xlu0 %1374
      %v1376 = vsel %vm295, %v1373, %v1367
      %v1377 = vsel %vm295, %v1375, %v1369
      %v1382 = vsel %vm295, %v1367, %v1373
      %v1383 = vsel %vm295, %v1369, %v1375
      %v1384 = vmul.f32 %v1382, %v303
      %v1385 = vmul.f32 %v1376, %v304
      %v1386 = vmul.f32 %v1383, %v303
      %v1387 = vmul.f32 %v1377, %v304
      %1388 = vrot.lane.b32.xlu0 %v1315, 31
      %v1389 = vpop.permute.xlu0 %1388
      %1390 = vrot.lane.b32.xlu0 %v1317, 31
      %v1391 = vpop.permute.xlu0 %1390
      %1394 = vrot.lane.b32.xlu0 %v1314, 31
      %v1395 = vpop.permute.xlu0 %1394
      %1396 = vrot.lane.b32.xlu0 %v1316, 31
      %v1397 = vpop.permute.xlu0 %1396
      %v1398 = vsel %vm314, %v1395, %v1389
      %v1399 = vsel %vm314, %v1397, %v1391
      %v1404 = vsel %vm314, %v1389, %v1395
      %v1405 = vsel %vm314, %v1391, %v1397
      %v1406 = vmul.f32 %v1404, %v322
      %v1407 = vmul.f32 %v1398, %v323
      %v1408 = vmul.f32 %v1405, %v322
      %v1409 = vmul.f32 %v1399, %v323
      %1410 = vrot.lane.b32.xlu0 %v1315, 30
      %v1411 = vpop.permute.xlu0 %1410
      %1412 = vrot.lane.b32.xlu0 %v1317, 30
      %v1413 = vpop.permute.xlu0 %1412
      %1416 = vrot.lane.b32.xlu0 %v1314, 30
      %v1417 = vpop.permute.xlu0 %1416
      %1418 = vrot.lane.b32.xlu0 %v1316, 30
      %v1419 = vpop.permute.xlu0 %1418
      %v1420 = vsel %vm333, %v1417, %v1411
      %v1421 = vsel %vm333, %v1419, %v1413
      %v1426 = vsel %vm333, %v1411, %v1417
      %v1427 = vsel %vm333, %v1413, %v1419
      %v1428 = vmul.f32 %v1426, %v341
      %v1429 = vmul.f32 %v1420, %v342
      %v1430 = vmul.f32 %v1427, %v341
      %v1431 = vmul.f32 %v1421, %v342
      %v1432 = vld [vmem:[%s4] sm:$0xff]
      %v1433 = vld [vmem:[%s4 + $0x8] sm:$0xff]
      %v1434 = vld [vmem:[%s4 + $0x10] sm:$0xff]
      %v1435 = vld [vmem:[%s4 + $0x18] sm:$0xff]
      %1436 = vrot.lane.b32.xlu0 %v1315, 18
      %v1437 = vpop.permute.xlu0 %1436
      %1438 = vrot.lane.b32.xlu0 %v1317, 18
      %v1439 = vpop.permute.xlu0 %1438
      %1442 = vrot.lane.b32.xlu0 %v1314, 18
      %v1443 = vpop.permute.xlu0 %1442
      %1444 = vrot.lane.b32.xlu0 %v1316, 18
      %v1445 = vpop.permute.xlu0 %1444
      %v1446 = vsel %vm390, %v1443, %v1437
      %v1447 = vsel %vm390, %v1445, %v1439
      %v1452 = vsel %vm390, %v1437, %v1443
      %v1453 = vsel %vm390, %v1439, %v1445
      %v1454 = vmul.f32 %v1452, %v398
      %v1455 = vmul.f32 %v1446, %v399
      %v1456 = vmul.f32 %v1453, %v398
      %v1457 = vmul.f32 %v1447, %v399
      %1458 = vrot.lane.b32.xlu0 %v1315, 17
      %v1459 = vpop.permute.xlu0 %1458
      %1460 = vrot.lane.b32.xlu0 %v1317, 17
      %v1461 = vpop.permute.xlu0 %1460
      %1464 = vrot.lane.b32.xlu0 %v1314, 17
      %v1465 = vpop.permute.xlu0 %1464
      %1466 = vrot.lane.b32.xlu0 %v1316, 17
      %v1467 = vpop.permute.xlu0 %1466
      %v1468 = vsel %vm409, %v1465, %v1459
      %v1469 = vsel %vm409, %v1467, %v1461
      %v1474 = vsel %vm409, %v1459, %v1465
      %v1475 = vsel %vm409, %v1461, %v1467
      %v1476 = vmul.f32 %v1474, %v417
      %v1477 = vmul.f32 %v1468, %v418
      %v1478 = vmul.f32 %v1475, %v417
      %v1479 = vmul.f32 %v1469, %v418
      %1480 = vrot.lane.b32.xlu0 %v1315, 16
      %v1481 = vpop.permute.xlu0 %1480
      %1482 = vrot.lane.b32.xlu0 %v1317, 16
      %v1483 = vpop.permute.xlu0 %1482
      %1486 = vrot.lane.b32.xlu0 %v1314, 16
      %v1487 = vpop.permute.xlu0 %1486
      %1488 = vrot.lane.b32.xlu0 %v1316, 16
      %v1489 = vpop.permute.xlu0 %1488
      %v1490 = vsel %vm428, %v1487, %v1481
      %v1491 = vsel %vm428, %v1489, %v1483
      %v1496 = vsel %vm428, %v1481, %v1487
      %v1497 = vsel %vm428, %v1483, %v1489
      %v1498 = vmul.f32 %v1496, %v436
      %v1499 = vmul.f32 %v1490, %v437
      %v1500 = vmul.f32 %v1497, %v436
      %v1501 = vmul.f32 %v1491, %v437
      %1502 = vrot.lane.b32.xlu0 %v1315, 15
      %v1503 = vpop.permute.xlu0 %1502
      %1504 = vrot.lane.b32.xlu0 %v1317, 15
      %v1505 = vpop.permute.xlu0 %1504
      %1508 = vrot.lane.b32.xlu0 %v1314, 15
      %v1509 = vpop.permute.xlu0 %1508
      %1510 = vrot.lane.b32.xlu0 %v1316, 15
      %v1511 = vpop.permute.xlu0 %1510
      %v1512 = vsel %vm447, %v1509, %v1503
      %v1513 = vsel %vm447, %v1511, %v1505
      %v1518 = vsel %vm447, %v1503, %v1509
      %v1519 = vsel %vm447, %v1505, %v1511
      %v1520 = vmul.f32 %v1518, %v455
      %v1521 = vmul.f32 %v1512, %v456
      %v1522 = vmul.f32 %v1519, %v455
      %v1523 = vmul.f32 %v1513, %v456
      %1524 = vrot.lane.b32.xlu0 %v1315, 14
      %v1525 = vpop.permute.xlu0 %1524
      %1526 = vrot.lane.b32.xlu0 %v1317, 14
      %v1527 = vpop.permute.xlu0 %1526
      %1530 = vrot.lane.b32.xlu0 %v1314, 14
      %v1531 = vpop.permute.xlu0 %1530
      %1532 = vrot.lane.b32.xlu0 %v1316, 14
      %v1533 = vpop.permute.xlu0 %1532
      %v1534 = vsel %vm466, %v1531, %v1525
      %v1535 = vsel %vm466, %v1533, %v1527
      %v1540 = vsel %vm466, %v1525, %v1531
      %v1541 = vsel %vm466, %v1527, %v1533
      %v1542 = vmul.f32 %v1540, %v474
      %v1543 = vmul.f32 %v1534, %v475
      %v1544 = vmul.f32 %v1541, %v474
      %v1545 = vmul.f32 %v1535, %v475
      %s1546 = scalar_lea.vmem %s4, 32
      %v1547 = vld [vmem:[%s1546] sm:$0xff]
      %v1548 = vld [vmem:[%s1546 + $0x8] sm:$0xff]
      %v1549 = vld [vmem:[%s1546 + $0x10] sm:$0xff]
      %v1550 = vld [vmem:[%s1546 + $0x18] sm:$0xff]
      %vm1551 = vcmask 654336
      %v1553 = vsel %vm1551, %v1547, 0
      %v1556 = vsel %vm1551, %v1548, 0
      %v1559 = vsel %vm1551, %v1549, 0
      %v1562 = vsel %vm1551, %v1550, 0
      %1564 = vmatpush.msra.mxu0 0.0
      %1565 = vmatpush.msra.mxu0 0.0
      %1566 = vmatpush.msra.mxu0 0.0
      %1567 = vmatpush.msra.mxu0 0.0
      %1568 = vmatpush.msra.mxu0 0.0
      %1569 = vmatpush.msra.mxu0 0.0
      %1570 = vmatpush.msra.mxu0 %v1544
      %1571 = vmatpush.msra.mxu0 %v1542
      %1572 = vmatpush.msra.mxu0 %v1522
      %1573 = vmatpush.msra.mxu0 %v1520
      %1574 = vmatpush.msra.mxu0 %v1500
      %1575 = vmatpush.msra.mxu0 %v1498
      %1576 = vmatpush.msra.mxu0 %v1478
      %1577 = vmatpush.msra.mxu0 %v1476
      %1578 = vmatpush.msra.mxu0 %v1456
      %1579 = vmatpush.msra.mxu0 %v1454
      %1580 = vmatmul.f32.gmra.mxu0 %v1553
      %v1581 = vpop.f32.mrf.mxu0
      %v1582 = vadd.f32 0.0, %v1581
      %1583 = vmatmul.f32.gmra.mxu0 %v1556
      %v1584 = vpop.f32.mrf.mxu0
      %v1585 = vadd.f32 0.0, %v1584
      %1586 = vmatmul.f32.gmra.mxu0 %v1559
      %v1587 = vpop.f32.mrf.mxu0
      %v1588 = vadd.f32 0.0, %v1587
      %1589 = vmatmul.f32.gmra.mxu0 %v1562
      %v1590 = vpop.f32.mrf.mxu0
      %v1591 = vadd.f32 0.0, %v1590
      %1592 = vdwg.mxu0
      %1593 = vmatpush.msra.mxu0 0.0
      %1594 = vmatpush.msra.mxu0 0.0
      %1595 = vmatpush.msra.mxu0 0.0
      %1596 = vmatpush.msra.mxu0 0.0
      %1597 = vmatpush.msra.mxu0 0.0
      %1598 = vmatpush.msra.mxu0 0.0
      %1599 = vmatpush.msra.mxu0 %v1545
      %1600 = vmatpush.msra.mxu0 %v1543
      %1601 = vmatpush.msra.mxu0 %v1523
      %1602 = vmatpush.msra.mxu0 %v1521
      %1603 = vmatpush.msra.mxu0 %v1501
      %1604 = vmatpush.msra.mxu0 %v1499
      %1605 = vmatpush.msra.mxu0 %v1479
      %1606 = vmatpush.msra.mxu0 %v1477
      %1607 = vmatpush.msra.mxu0 %v1457
      %1608 = vmatpush.msra.mxu0 %v1455
      %1609 = vmatmul.f32.gmra.mxu0 %v1553
      %v1610 = vpop.f32.mrf.mxu0
      %v1611 = vadd.f32 0.0, %v1610
      %1612 = vmatmul.f32.gmra.mxu0 %v1556
      %v1613 = vpop.f32.mrf.mxu0
      %v1614 = vadd.f32 0.0, %v1613
      %1615 = vmatmul.f32.gmra.mxu0 %v1559
      %v1616 = vpop.f32.mrf.mxu0
      %v1617 = vadd.f32 0.0, %v1616
      %1618 = vmatmul.f32.gmra.mxu0 %v1562
      %v1619 = vpop.f32.mrf.mxu0
      %v1620 = vadd.f32 0.0, %v1619
      %1621 = vdwg.mxu0
      %v1623 = vsel %vm1551, %v1432, 0
      %v1626 = vsel %vm1551, %v1433, 0
      %v1629 = vsel %vm1551, %v1434, 0
      %v1632 = vsel %vm1551, %v1435, 0
      %1634 = vmatpush.msra.mxu0 0.0
      %1635 = vmatpush.msra.mxu0 0.0
      %1636 = vmatpush.msra.mxu0 0.0
      %1637 = vmatpush.msra.mxu0 0.0
      %1638 = vmatpush.msra.mxu0 0.0
      %1639 = vmatpush.msra.mxu0 0.0
      %1640 = vmatpush.msra.mxu0 %v1430
      %1641 = vmatpush.msra.mxu0 %v1428
      %1642 = vmatpush.msra.mxu0 %v1408
      %1643 = vmatpush.msra.mxu0 %v1406
      %1644 = vmatpush.msra.mxu0 %v1386
      %1645 = vmatpush.msra.mxu0 %v1384
      %1646 = vmatpush.msra.mxu0 %v1364
      %1647 = vmatpush.msra.mxu0 %v1362
      %1648 = vmatpush.msra.mxu0 %v1342
      %1649 = vmatpush.msra.mxu0 %v1340
      %1650 = vmatmul.f32.gmra.mxu0 %v1623
      %v1651 = vpop.f32.mrf.mxu0
      %v1652 = vadd.f32 %v1582, %v1651
      %1653 = vmatmul.f32.gmra.mxu0 %v1626
      %v1654 = vpop.f32.mrf.mxu0
      %v1655 = vadd.f32 %v1585, %v1654
      %1656 = vmatmul.f32.gmra.mxu0 %v1629
      %v1657 = vpop.f32.mrf.mxu0
      %v1658 = vadd.f32 %v1588, %v1657
      %1659 = vmatmul.f32.gmra.mxu0 %v1632
      %v1660 = vpop.f32.mrf.mxu0
      %v1661 = vadd.f32 %v1591, %v1660
      %1662 = vdwg.mxu0
      %1663 = vmatpush.msra.mxu0 0.0
      %1664 = vmatpush.msra.mxu0 0.0
      %1665 = vmatpush.msra.mxu0 0.0
      %1666 = vmatpush.msra.mxu0 0.0
      %1667 = vmatpush.msra.mxu0 0.0
      %1668 = vmatpush.msra.mxu0 0.0
      %1669 = vmatpush.msra.mxu0 %v1431
      %1670 = vmatpush.msra.mxu0 %v1429
      %1671 = vmatpush.msra.mxu0 %v1409
      %1672 = vmatpush.msra.mxu0 %v1407
      %1673 = vmatpush.msra.mxu0 %v1387
      %1674 = vmatpush.msra.mxu0 %v1385
      %1675 = vmatpush.msra.mxu0 %v1365
      %1676 = vmatpush.msra.mxu0 %v1363
      %1677 = vmatpush.msra.mxu0 %v1343
      %1678 = vmatpush.msra.mxu0 %v1341
      %1679 = vmatmul.f32.gmra.mxu0 %v1623
      %v1680 = vpop.f32.mrf.mxu0
      %v1681 = vadd.f32 %v1611, %v1680
      %1682 = vmatmul.f32.gmra.mxu0 %v1626
      %v1683 = vpop.f32.mrf.mxu0
      %v1684 = vadd.f32 %v1614, %v1683
      %1685 = vmatmul.f32.gmra.mxu0 %v1629
      %v1686 = vpop.f32.mrf.mxu0
      %v1687 = vadd.f32 %v1617, %v1686
      %1688 = vmatmul.f32.gmra.mxu0 %v1632
      %v1689 = vpop.f32.mrf.mxu0
      %v1690 = vadd.f32 %v1620, %v1689
      %1691 = vdwg.mxu0
      %1692 = vrot.lane.b32.xlu0 %v1315, 2
      %v1693 = vpop.permute.xlu0 %1692
      %1694 = vrot.lane.b32.xlu0 %v1317, 2
      %v1695 = vpop.permute.xlu0 %1694
      %1698 = vrot.lane.b32.xlu0 %v1314, 2
      %v1699 = vpop.permute.xlu0 %1698
      %1700 = vrot.lane.b32.xlu0 %v1316, 2
      %v1701 = vpop.permute.xlu0 %1700
      %v1702 = vsel %vm638, %v1699, %v1693
      %v1703 = vsel %vm638, %v1701, %v1695
      %v1708 = vsel %vm638, %v1693, %v1699
      %v1709 = vsel %vm638, %v1695, %v1701
      %v1710 = vmul.f32 %v1708, %v646
      %v1711 = vmul.f32 %v1702, %v647
      %v1712 = vmul.f32 %v1709, %v646
      %v1713 = vmul.f32 %v1703, %v647
      %1714 = vrot.lane.b32.xlu0 %v1315, 1
      %v1715 = vpop.permute.xlu0 %1714
      %1716 = vrot.lane.b32.xlu0 %v1317, 1
      %v1717 = vpop.permute.xlu0 %1716
      %1720 = vrot.lane.b32.xlu0 %v1314, 1
      %v1721 = vpop.permute.xlu0 %1720
      %1722 = vrot.lane.b32.xlu0 %v1316, 1
      %v1723 = vpop.permute.xlu0 %1722
      %v1724 = vsel %vm657, %v1721, %v1715
      %v1725 = vsel %vm657, %v1723, %v1717
      %v1730 = vsel %vm657, %v1715, %v1721
      %v1731 = vsel %vm657, %v1717, %v1723
      %v1732 = vmul.f32 %v1730, %v665
      %v1733 = vmul.f32 %v1724, %v666
      %v1734 = vmul.f32 %v1731, %v665
      %v1735 = vmul.f32 %v1725, %v666
      %1736 = vrot.lane.b32.xlu0 %v1314, 127
      %v1737 = vpop.permute.xlu0 %1736
      %1738 = vrot.lane.b32.xlu0 %v1315, 127
      %v1739 = vpop.permute.xlu0 %1738
      %1740 = vrot.lane.b32.xlu0 %v1316, 127
      %v1741 = vpop.permute.xlu0 %1740
      %1742 = vrot.lane.b32.xlu0 %v1317, 127
      %v1743 = vpop.permute.xlu0 %1742
      %v1744 = vsel %vm675, %v1737, %v1739
      %v1745 = vsel %vm675, %v1741, %v1743
      %v1752 = vsel %vm675, %v1739, %v1737
      %v1753 = vsel %vm675, %v1743, %v1741
      %v1754 = vmul.f32 %v1744, %v684
      %v1755 = vmul.f32 %v1752, %v685
      %v1756 = vmul.f32 %v1745, %v684
      %v1757 = vmul.f32 %v1753, %v685
      %1758 = vrot.lane.b32.xlu0 %v1314, 126
      %v1759 = vpop.permute.xlu0 %1758
      %1760 = vrot.lane.b32.xlu0 %v1315, 126
      %v1761 = vpop.permute.xlu0 %1760
      %1762 = vrot.lane.b32.xlu0 %v1316, 126
      %v1763 = vpop.permute.xlu0 %1762
      %1764 = vrot.lane.b32.xlu0 %v1317, 126
      %v1765 = vpop.permute.xlu0 %1764
      %v1766 = vsel %vm694, %v1759, %v1761
      %v1767 = vsel %vm694, %v1763, %v1765
      %v1774 = vsel %vm694, %v1761, %v1759
      %v1775 = vsel %vm694, %v1765, %v1763
      %v1776 = vmul.f32 %v1766, %v703
      %v1777 = vmul.f32 %v1774, %v704
      %v1778 = vmul.f32 %v1767, %v703
      %v1779 = vmul.f32 %v1775, %v704
      %s1780 = scalar_lea.vmem %s4, 64
      %v1781 = vld [vmem:[%s1780] sm:$0xff]
      %v1782 = vld [vmem:[%s1780 + $0x8] sm:$0xff]
      %v1783 = vld [vmem:[%s1780 + $0x10] sm:$0xff]
      %v1784 = vld [vmem:[%s1780 + $0x18] sm:$0xff]
      %v1786 = vsel %vm1551, %v1781, 0
      %v1789 = vsel %vm1551, %v1782, 0
      %v1792 = vsel %vm1551, %v1783, 0
      %v1795 = vsel %vm1551, %v1784, 0
      %1797 = vmatpush.msra.mxu0 0.0
      %1798 = vmatpush.msra.mxu0 0.0
      %1799 = vmatpush.msra.mxu0 0.0
      %1800 = vmatpush.msra.mxu0 0.0
      %1801 = vmatpush.msra.mxu0 0.0
      %1802 = vmatpush.msra.mxu0 0.0
      %1803 = vmatpush.msra.mxu0 %v1778
      %1804 = vmatpush.msra.mxu0 %v1776
      %1805 = vmatpush.msra.mxu0 %v1756
      %1806 = vmatpush.msra.mxu0 %v1754
      %1807 = vmatpush.msra.mxu0 %v1316
      %1808 = vmatpush.msra.mxu0 %v1314
      %1809 = vmatpush.msra.mxu0 %v1734
      %1810 = vmatpush.msra.mxu0 %v1732
      %1811 = vmatpush.msra.mxu0 %v1712
      %1812 = vmatpush.msra.mxu0 %v1710
      %1813 = vmatmul.f32.gmra.mxu0 %v1786
      %v1814 = vpop.f32.mrf.mxu0
      %v1815 = vadd.f32 0.0, %v1814
      %1816 = vmatmul.f32.gmra.mxu0 %v1789
      %v1817 = vpop.f32.mrf.mxu0
      %v1818 = vadd.f32 0.0, %v1817
      %1819 = vmatmul.f32.gmra.mxu0 %v1792
      %v1820 = vpop.f32.mrf.mxu0
      %v1821 = vadd.f32 0.0, %v1820
      %1822 = vmatmul.f32.gmra.mxu0 %v1795
      %v1823 = vpop.f32.mrf.mxu0
      %v1824 = vadd.f32 0.0, %v1823
      %1825 = vdwg.mxu0
      %1826 = vmatpush.msra.mxu0 0.0
      %1827 = vmatpush.msra.mxu0 0.0
      %1828 = vmatpush.msra.mxu0 0.0
      %1829 = vmatpush.msra.mxu0 0.0
      %1830 = vmatpush.msra.mxu0 0.0
      %1831 = vmatpush.msra.mxu0 0.0
      %1832 = vmatpush.msra.mxu0 %v1779
      %1833 = vmatpush.msra.mxu0 %v1777
      %1834 = vmatpush.msra.mxu0 %v1757
      %1835 = vmatpush.msra.mxu0 %v1755
      %1836 = vmatpush.msra.mxu0 %v1317
      %1837 = vmatpush.msra.mxu0 %v1315
      %1838 = vmatpush.msra.mxu0 %v1735
      %1839 = vmatpush.msra.mxu0 %v1733
      %1840 = vmatpush.msra.mxu0 %v1713
      %1841 = vmatpush.msra.mxu0 %v1711
      %1842 = vmatmul.f32.gmra.mxu0 %v1786
      %v1843 = vpop.f32.mrf.mxu0
      %v1844 = vadd.f32 0.0, %v1843
      %1845 = vmatmul.f32.gmra.mxu0 %v1789
      %v1846 = vpop.f32.mrf.mxu0
      %v1847 = vadd.f32 0.0, %v1846
      %1848 = vmatmul.f32.gmra.mxu0 %v1792
      %v1849 = vpop.f32.mrf.mxu0
      %v1850 = vadd.f32 0.0, %v1849
      %1851 = vmatmul.f32.gmra.mxu0 %v1795
      %v1852 = vpop.f32.mrf.mxu0
      %v1853 = vadd.f32 0.0, %v1852
      %1854 = vdwg.mxu0
      %v1855 = vadd.f32 %v1652, %v1815
      %v1856 = vadd.f32 %v1681, %v1844
      %v1857 = vadd.f32 %v1655, %v1818
      %v1858 = vadd.f32 %v1684, %v1847
      %v1859 = vadd.f32 %v1658, %v1821
      %v1860 = vadd.f32 %v1687, %v1850
      %v1861 = vadd.f32 %v1661, %v1824
      %v1862 = vadd.f32 %v1690, %v1853
      %1863 = vrot.lane.b32.xlu0 %v1314, 114
      %v1864 = vpop.permute.xlu0 %1863
      %1865 = vrot.lane.b32.xlu0 %v1315, 114
      %v1866 = vpop.permute.xlu0 %1865
      %1867 = vrot.lane.b32.xlu0 %v1316, 114
      %v1868 = vpop.permute.xlu0 %1867
      %1869 = vrot.lane.b32.xlu0 %v1317, 114
      %v1870 = vpop.permute.xlu0 %1869
      %v1871 = vsel %vm806, %v1864, %v1866
      %v1872 = vsel %vm806, %v1868, %v1870
      %v1879 = vsel %vm806, %v1866, %v1864
      %v1880 = vsel %vm806, %v1870, %v1868
      %v1881 = vmul.f32 %v1871, %v815
      %v1882 = vmul.f32 %v1879, %v816
      %v1883 = vmul.f32 %v1872, %v815
      %v1884 = vmul.f32 %v1880, %v816
      %1885 = vrot.lane.b32.xlu0 %v1314, 113
      %v1886 = vpop.permute.xlu0 %1885
      %1887 = vrot.lane.b32.xlu0 %v1315, 113
      %v1888 = vpop.permute.xlu0 %1887
      %1889 = vrot.lane.b32.xlu0 %v1316, 113
      %v1890 = vpop.permute.xlu0 %1889
      %1891 = vrot.lane.b32.xlu0 %v1317, 113
      %v1892 = vpop.permute.xlu0 %1891
      %v1893 = vsel %vm825, %v1886, %v1888
      %v1894 = vsel %vm825, %v1890, %v1892
      %v1901 = vsel %vm825, %v1888, %v1886
      %v1902 = vsel %vm825, %v1892, %v1890
      %v1903 = vmul.f32 %v1893, %v834
      %v1904 = vmul.f32 %v1901, %v835
      %v1905 = vmul.f32 %v1894, %v834
      %v1906 = vmul.f32 %v1902, %v835
      %1907 = vrot.lane.b32.xlu0 %v1314, 112
      %v1908 = vpop.permute.xlu0 %1907
      %1909 = vrot.lane.b32.xlu0 %v1315, 112
      %v1910 = vpop.permute.xlu0 %1909
      %1911 = vrot.lane.b32.xlu0 %v1316, 112
      %v1912 = vpop.permute.xlu0 %1911
      %1913 = vrot.lane.b32.xlu0 %v1317, 112
      %v1914 = vpop.permute.xlu0 %1913
      %v1915 = vsel %vm844, %v1908, %v1910
      %v1916 = vsel %vm844, %v1912, %v1914
      %v1923 = vsel %vm844, %v1910, %v1908
      %v1924 = vsel %vm844, %v1914, %v1912
      %v1925 = vmul.f32 %v1915, %v853
      %v1926 = vmul.f32 %v1923, %v854
      %v1927 = vmul.f32 %v1916, %v853
      %v1928 = vmul.f32 %v1924, %v854
      %1929 = vrot.lane.b32.xlu0 %v1314, 111
      %v1930 = vpop.permute.xlu0 %1929
      %1931 = vrot.lane.b32.xlu0 %v1315, 111
      %v1932 = vpop.permute.xlu0 %1931
      %1933 = vrot.lane.b32.xlu0 %v1316, 111
      %v1934 = vpop.permute.xlu0 %1933
      %1935 = vrot.lane.b32.xlu0 %v1317, 111
      %v1936 = vpop.permute.xlu0 %1935
      %v1937 = vsel %vm863, %v1930, %v1932
      %v1938 = vsel %vm863, %v1934, %v1936
      %v1945 = vsel %vm863, %v1932, %v1930
      %v1946 = vsel %vm863, %v1936, %v1934
      %v1947 = vmul.f32 %v1937, %v872
      %v1948 = vmul.f32 %v1945, %v873
      %v1949 = vmul.f32 %v1938, %v872
      %v1950 = vmul.f32 %v1946, %v873
      %1951 = vrot.lane.b32.xlu0 %v1314, 110
      %v1952 = vpop.permute.xlu0 %1951
      %1953 = vrot.lane.b32.xlu0 %v1315, 110
      %v1954 = vpop.permute.xlu0 %1953
      %1955 = vrot.lane.b32.xlu0 %v1316, 110
      %v1956 = vpop.permute.xlu0 %1955
      %1957 = vrot.lane.b32.xlu0 %v1317, 110
      %v1958 = vpop.permute.xlu0 %1957
      %v1959 = vsel %vm882, %v1952, %v1954
      %v1960 = vsel %vm882, %v1956, %v1958
      %v1967 = vsel %vm882, %v1954, %v1952
      %v1968 = vsel %vm882, %v1958, %v1956
      %v1969 = vmul.f32 %v1959, %v891
      %v1970 = vmul.f32 %v1967, %v892
      %v1971 = vmul.f32 %v1960, %v891
      %v1972 = vmul.f32 %v1968, %v892
      %s1973 = scalar_lea.vmem %s4, 96
      %v1974 = vld [vmem:[%s1973] sm:$0xff]
      %v1975 = vld [vmem:[%s1973 + $0x8] sm:$0xff]
      %v1976 = vld [vmem:[%s1973 + $0x10] sm:$0xff]
      %v1977 = vld [vmem:[%s1973 + $0x18] sm:$0xff]
      %v1979 = vsel %vm1551, %v1974, 0
      %v1982 = vsel %vm1551, %v1975, 0
      %v1985 = vsel %vm1551, %v1976, 0
      %v1988 = vsel %vm1551, %v1977, 0
      %1990 = vmatpush.msra.mxu0 0.0
      %1991 = vmatpush.msra.mxu0 0.0
      %1992 = vmatpush.msra.mxu0 0.0
      %1993 = vmatpush.msra.mxu0 0.0
      %1994 = vmatpush.msra.mxu0 0.0
      %1995 = vmatpush.msra.mxu0 0.0
      %1996 = vmatpush.msra.mxu0 %v1971
      %1997 = vmatpush.msra.mxu0 %v1969
      %1998 = vmatpush.msra.mxu0 %v1949
      %1999 = vmatpush.msra.mxu0 %v1947
      %2000 = vmatpush.msra.mxu0 %v1927
      %2001 = vmatpush.msra.mxu0 %v1925
      %2002 = vmatpush.msra.mxu0 %v1905
      %2003 = vmatpush.msra.mxu0 %v1903
      %2004 = vmatpush.msra.mxu0 %v1883
      %2005 = vmatpush.msra.mxu0 %v1881
      %2006 = vmatmul.f32.gmra.mxu0 %v1979
      %v2007 = vpop.f32.mrf.mxu0
      %v2008 = vadd.f32 0.0, %v2007
      %2009 = vmatmul.f32.gmra.mxu0 %v1982
      %v2010 = vpop.f32.mrf.mxu0
      %v2011 = vadd.f32 0.0, %v2010
      %2012 = vmatmul.f32.gmra.mxu0 %v1985
      %v2013 = vpop.f32.mrf.mxu0
      %v2014 = vadd.f32 0.0, %v2013
      %2015 = vmatmul.f32.gmra.mxu0 %v1988
      %v2016 = vpop.f32.mrf.mxu0
      %v2017 = vadd.f32 0.0, %v2016
      %2018 = vdwg.mxu0
      %2019 = vmatpush.msra.mxu0 0.0
      %2020 = vmatpush.msra.mxu0 0.0
      %2021 = vmatpush.msra.mxu0 0.0
      %2022 = vmatpush.msra.mxu0 0.0
      %2023 = vmatpush.msra.mxu0 0.0
      %2024 = vmatpush.msra.mxu0 0.0
      %2025 = vmatpush.msra.mxu0 %v1972
      %2026 = vmatpush.msra.mxu0 %v1970
      %2027 = vmatpush.msra.mxu0 %v1950
      %2028 = vmatpush.msra.mxu0 %v1948
      %2029 = vmatpush.msra.mxu0 %v1928
      %2030 = vmatpush.msra.mxu0 %v1926
      %2031 = vmatpush.msra.mxu0 %v1906
      %2032 = vmatpush.msra.mxu0 %v1904
      %2033 = vmatpush.msra.mxu0 %v1884
      %2034 = vmatpush.msra.mxu0 %v1882
      %2035 = vmatmul.f32.gmra.mxu0 %v1979
      %v2036 = vpop.f32.mrf.mxu0
      %v2037 = vadd.f32 0.0, %v2036
      %2038 = vmatmul.f32.gmra.mxu0 %v1982
      %v2039 = vpop.f32.mrf.mxu0
      %v2040 = vadd.f32 0.0, %v2039
      %2041 = vmatmul.f32.gmra.mxu0 %v1985
      %v2042 = vpop.f32.mrf.mxu0
      %v2043 = vadd.f32 0.0, %v2042
      %2044 = vmatmul.f32.gmra.mxu0 %v1988
      %v2045 = vpop.f32.mrf.mxu0
      %v2046 = vadd.f32 0.0, %v2045
      %2047 = vdwg.mxu0
      %v2048 = vadd.f32 %v1855, %v2008
      %v2049 = vadd.f32 %v1856, %v2037
      %v2050 = vadd.f32 %v1857, %v2011
      %v2051 = vadd.f32 %v1858, %v2040
      %v2052 = vadd.f32 %v1859, %v2014
      %v2053 = vadd.f32 %v1860, %v2043
      %v2054 = vadd.f32 %v1861, %v2017
      %v2055 = vadd.f32 %v1862, %v2046
      %2056 = vrot.lane.b32.xlu0 %v1314, 98
      %v2057 = vpop.permute.xlu0 %2056
      %2058 = vrot.lane.b32.xlu0 %v1315, 98
      %v2059 = vpop.permute.xlu0 %2058
      %2060 = vrot.lane.b32.xlu0 %v1316, 98
      %v2061 = vpop.permute.xlu0 %2060
      %2062 = vrot.lane.b32.xlu0 %v1317, 98
      %v2063 = vpop.permute.xlu0 %2062
      %v2064 = vsel %vm998, %v2057, %v2059
      %v2065 = vsel %vm998, %v2061, %v2063
      %v2072 = vsel %vm998, %v2059, %v2057
      %v2073 = vsel %vm998, %v2063, %v2061
      %v2074 = vmul.f32 %v2064, %v1007
      %v2075 = vmul.f32 %v2072, %v1008
      %v2076 = vmul.f32 %v2065, %v1007
      %v2077 = vmul.f32 %v2073, %v1008
      %2078 = vrot.lane.b32.xlu0 %v1314, 97
      %v2079 = vpop.permute.xlu0 %2078
      %2080 = vrot.lane.b32.xlu0 %v1315, 97
      %v2081 = vpop.permute.xlu0 %2080
      %2082 = vrot.lane.b32.xlu0 %v1316, 97
      %v2083 = vpop.permute.xlu0 %2082
      %2084 = vrot.lane.b32.xlu0 %v1317, 97
      %v2085 = vpop.permute.xlu0 %2084
      %v2086 = vsel %vm1017, %v2079, %v2081
      %v2087 = vsel %vm1017, %v2083, %v2085
      %v2094 = vsel %vm1017, %v2081, %v2079
      %v2095 = vsel %vm1017, %v2085, %v2083
      %v2096 = vmul.f32 %v2086, %v1026
      %v2097 = vmul.f32 %v2094, %v1027
      %v2098 = vmul.f32 %v2087, %v1026
      %v2099 = vmul.f32 %v2095, %v1027
      %2100 = vrot.lane.b32.xlu0 %v1314, 96
      %v2101 = vpop.permute.xlu0 %2100
      %2102 = vrot.lane.b32.xlu0 %v1315, 96
      %v2103 = vpop.permute.xlu0 %2102
      %2104 = vrot.lane.b32.xlu0 %v1316, 96
      %v2105 = vpop.permute.xlu0 %2104
      %2106 = vrot.lane.b32.xlu0 %v1317, 96
      %v2107 = vpop.permute.xlu0 %2106
      %v2108 = vsel %vm1036, %v2101, %v2103
      %v2109 = vsel %vm1036, %v2105, %v2107
      %v2116 = vsel %vm1036, %v2103, %v2101
      %v2117 = vsel %vm1036, %v2107, %v2105
      %v2118 = vmul.f32 %v2108, %v1045
      %v2119 = vmul.f32 %v2116, %v1046
      %v2120 = vmul.f32 %v2109, %v1045
      %v2121 = vmul.f32 %v2117, %v1046
      %2122 = vrot.lane.b32.xlu0 %v1314, 95
      %v2123 = vpop.permute.xlu0 %2122
      %2124 = vrot.lane.b32.xlu0 %v1315, 95
      %v2125 = vpop.permute.xlu0 %2124
      %2126 = vrot.lane.b32.xlu0 %v1316, 95
      %v2127 = vpop.permute.xlu0 %2126
      %2128 = vrot.lane.b32.xlu0 %v1317, 95
      %v2129 = vpop.permute.xlu0 %2128
      %v2130 = vsel %vm1055, %v2123, %v2125
      %v2131 = vsel %vm1055, %v2127, %v2129
      %v2138 = vsel %vm1055, %v2125, %v2123
      %v2139 = vsel %vm1055, %v2129, %v2127
      %v2140 = vmul.f32 %v2130, %v1064
      %v2141 = vmul.f32 %v2138, %v1065
      %v2142 = vmul.f32 %v2131, %v1064
      %v2143 = vmul.f32 %v2139, %v1065
      %2144 = vrot.lane.b32.xlu0 %v1314, 94
      %v2145 = vpop.permute.xlu0 %2144
      %2146 = vrot.lane.b32.xlu0 %v1315, 94
      %v2147 = vpop.permute.xlu0 %2146
      %2148 = vrot.lane.b32.xlu0 %v1316, 94
      %v2149 = vpop.permute.xlu0 %2148
      %2150 = vrot.lane.b32.xlu0 %v1317, 94
      %v2151 = vpop.permute.xlu0 %2150
      %v2152 = vsel %vm1074, %v2145, %v2147
      %v2153 = vsel %vm1074, %v2149, %v2151
      %v2160 = vsel %vm1074, %v2147, %v2145
      %v2161 = vsel %vm1074, %v2151, %v2149
      %v2162 = vmul.f32 %v2152, %v1083
      %v2163 = vmul.f32 %v2160, %v1084
      %v2164 = vmul.f32 %v2153, %v1083
      %v2165 = vmul.f32 %v2161, %v1084
      %s2166 = scalar_lea.vmem %s4, 128
      %v2167 = vld [vmem:[%s2166] sm:$0xff]
      %v2168 = vld [vmem:[%s2166 + $0x8] sm:$0xff]
      %v2169 = vld [vmem:[%s2166 + $0x10] sm:$0xff]
      %v2170 = vld [vmem:[%s2166 + $0x18] sm:$0xff]
      %v2172 = vsel %vm1551, %v2167, 0
      %v2175 = vsel %vm1551, %v2168, 0
      %v2178 = vsel %vm1551, %v2169, 0
      %v2181 = vsel %vm1551, %v2170, 0
      %2183 = vmatpush.msra.mxu0 0.0
      %2184 = vmatpush.msra.mxu0 0.0
      %2185 = vmatpush.msra.mxu0 0.0
      %2186 = vmatpush.msra.mxu0 0.0
      %2187 = vmatpush.msra.mxu0 0.0
      %2188 = vmatpush.msra.mxu0 0.0
      %2189 = vmatpush.msra.mxu0 %v2164
      %2190 = vmatpush.msra.mxu0 %v2162
      %2191 = vmatpush.msra.mxu0 %v2142
      %2192 = vmatpush.msra.mxu0 %v2140
      %2193 = vmatpush.msra.mxu0 %v2120
      %2194 = vmatpush.msra.mxu0 %v2118
      %2195 = vmatpush.msra.mxu0 %v2098
      %2196 = vmatpush.msra.mxu0 %v2096
      %2197 = vmatpush.msra.mxu0 %v2076
      %2198 = vmatpush.msra.mxu0 %v2074
      %2199 = vmatmul.f32.gmra.mxu0 %v2172
      %v2200 = vpop.f32.mrf.mxu0
      %v2201 = vadd.f32 0.0, %v2200
      %2202 = vmatmul.f32.gmra.mxu0 %v2175
      %v2203 = vpop.f32.mrf.mxu0
      %v2204 = vadd.f32 0.0, %v2203
      %2205 = vmatmul.f32.gmra.mxu0 %v2178
      %v2206 = vpop.f32.mrf.mxu0
      %v2207 = vadd.f32 0.0, %v2206
      %2208 = vmatmul.f32.gmra.mxu0 %v2181
      %v2209 = vpop.f32.mrf.mxu0
      %v2210 = vadd.f32 0.0, %v2209
      %2211 = vdwg.mxu0
      %2212 = vmatpush.msra.mxu0 0.0
      %2213 = vmatpush.msra.mxu0 0.0
      %2214 = vmatpush.msra.mxu0 0.0
      %2215 = vmatpush.msra.mxu0 0.0
      %2216 = vmatpush.msra.mxu0 0.0
      %2217 = vmatpush.msra.mxu0 0.0
      %2218 = vmatpush.msra.mxu0 %v2165
      %2219 = vmatpush.msra.mxu0 %v2163
      %2220 = vmatpush.msra.mxu0 %v2143
      %2221 = vmatpush.msra.mxu0 %v2141
      %2222 = vmatpush.msra.mxu0 %v2121
      %2223 = vmatpush.msra.mxu0 %v2119
      %2224 = vmatpush.msra.mxu0 %v2099
      %2225 = vmatpush.msra.mxu0 %v2097
      %2226 = vmatpush.msra.mxu0 %v2077
      %2227 = vmatpush.msra.mxu0 %v2075
      %2228 = vmatmul.f32.gmra.mxu0 %v2172
      %v2229 = vpop.f32.mrf.mxu0
      %v2230 = vadd.f32 0.0, %v2229
      %2231 = vmatmul.f32.gmra.mxu0 %v2175
      %v2232 = vpop.f32.mrf.mxu0
      %v2233 = vadd.f32 0.0, %v2232
      %2234 = vmatmul.f32.gmra.mxu0 %v2178
      %v2235 = vpop.f32.mrf.mxu0
      %v2236 = vadd.f32 0.0, %v2235
      %2237 = vmatmul.f32.gmra.mxu0 %v2181
      %v2238 = vpop.f32.mrf.mxu0
      %v2239 = vadd.f32 0.0, %v2238
      %2240 = vdwg.mxu0
      %v2241 = vadd.f32 %v2048, %v2201
      %v2242 = vadd.f32 %v2049, %v2230
      %v2243 = vadd.f32 %v2050, %v2204
      %v2244 = vadd.f32 %v2051, %v2233
      %v2245 = vadd.f32 %v2052, %v2207
      %v2246 = vadd.f32 %v2053, %v2236
      %v2247 = vadd.f32 %v2054, %v2210
      %v2248 = vadd.f32 %v2055, %v2239
      %v2249 = vld [vmem:[%s5] sm:$0xff]
      %v2250 = vld [vmem:[%s5 + $0x8] sm:$0xff]
      %v2251 = vld [vmem:[%s5 + $0x10] sm:$0xff]
      %v2252 = vld [vmem:[%s5 + $0x18] sm:$0xff]
      %2254 = vset.pattern.permute.xlu0 0
      %2255 = vperm.xlu0 %2254, %v2249
      %v2256 = vpop.permute.xlu0 %2255
      %2259 = vset.pattern.permute.xlu0 0
      %2260 = vperm.xlu0 %2259, %v2250
      %v2261 = vpop.permute.xlu0 %2260
      %2264 = vset.pattern.permute.xlu0 0
      %2265 = vperm.xlu0 %2264, %v2251
      %v2266 = vpop.permute.xlu0 %2265
      %2269 = vset.pattern.permute.xlu0 0
      %2270 = vperm.xlu0 %2269, %v2252
      %v2271 = vpop.permute.xlu0 %2270
      %v2273 = vadd.f32 %v2241, %v2256
      %v2274 = vadd.f32 %v2242, %v2256
      %v2275 = vadd.f32 %v2243, %v2261
      %v2276 = vadd.f32 %v2244, %v2261
      %v2277 = vadd.f32 %v2245, %v2266
      %v2278 = vadd.f32 %v2246, %v2266
      %v2279 = vadd.f32 %v2247, %v2271
      %v2280 = vadd.f32 %v2248, %v2271
      %v2281 = vmax.f32 %v2273, 0.0
      %v2282 = vmax.f32 %v2274, 0.0
      %v2283 = vmax.f32 %v2275, 0.0
      %v2284 = vmax.f32 %v2276, 0.0
      %v2285 = vmax.f32 %v2277, 0.0
      %v2286 = vmax.f32 %v2278, 0.0
      %v2287 = vmax.f32 %v2279, 0.0
      %v2288 = vmax.f32 %v2280, 0.0
      %2293 = vrot.lane.b32.xlu0 %v2282, 1
      %v2294 = vpop.permute.xlu0 %2293
      %2295 = vrot.lane.b32.xlu0 %v2284, 1
      %v2296 = vpop.permute.xlu0 %2295
      %2297 = vrot.lane.b32.xlu0 %v2286, 1
      %v2298 = vpop.permute.xlu0 %2297
      %2299 = vrot.lane.b32.xlu0 %v2288, 1
      %v2300 = vpop.permute.xlu0 %2299
      %2309 = vrot.lane.b32.xlu0 %v2281, 1
      %v2310 = vpop.permute.xlu0 %2309
      %2311 = vrot.lane.b32.xlu0 %v2283, 1
      %v2312 = vpop.permute.xlu0 %2311
      %2313 = vrot.lane.b32.xlu0 %v2285, 1
      %v2314 = vpop.permute.xlu0 %2313
      %2315 = vrot.lane.b32.xlu0 %v2287, 1
      %v2316 = vpop.permute.xlu0 %2315
      %v2317 = vsel %vm657, %v2310, %v2294
      %v2318 = vsel %vm657, %v2312, %v2296
      %v2319 = vsel %vm657, %v2314, %v2298
      %v2320 = vsel %vm657, %v2316, %v2300
      %v2329 = vsel %vm657, %v2294, %v2310
      %v2330 = vsel %vm657, %v2296, %v2312
      %v2331 = vsel %vm657, %v2298, %v2314
      %v2332 = vsel %vm657, %v2300, %v2316
      %v2333 = vmul.f32 %v2329, %v665
      %v2334 = vmul.f32 %v2317, %v666
      %v2335 = vmul.f32 %v2330, %v665
      %v2336 = vmul.f32 %v2318, %v666
      %v2337 = vmul.f32 %v2331, %v665
      %v2338 = vmul.f32 %v2319, %v666
      %v2339 = vmul.f32 %v2332, %v665
      %v2340 = vmul.f32 %v2320, %v666
      %2341 = vrot.lane.b32.xlu0 %v2281, 127
      %v2342 = vpop.permute.xlu0 %2341
      %2343 = vrot.lane.b32.xlu0 %v2282, 127
      %v2344 = vpop.permute.xlu0 %2343
      %2345 = vrot.lane.b32.xlu0 %v2283, 127
      %v2346 = vpop.permute.xlu0 %2345
      %2347 = vrot.lane.b32.xlu0 %v2284, 127
      %v2348 = vpop.permute.xlu0 %2347
      %2349 = vrot.lane.b32.xlu0 %v2285, 127
      %v2350 = vpop.permute.xlu0 %2349
      %2351 = vrot.lane.b32.xlu0 %v2286, 127
      %v2352 = vpop.permute.xlu0 %2351
      %2353 = vrot.lane.b32.xlu0 %v2287, 127
      %v2354 = vpop.permute.xlu0 %2353
      %2355 = vrot.lane.b32.xlu0 %v2288, 127
      %v2356 = vpop.permute.xlu0 %2355
      %v2357 = vsel %vm675, %v2342, %v2344
      %v2358 = vsel %vm675, %v2346, %v2348
      %v2359 = vsel %vm675, %v2350, %v2352
      %v2360 = vsel %vm675, %v2354, %v2356
      %v2373 = vsel %vm675, %v2344, %v2342
      %v2374 = vsel %vm675, %v2348, %v2346
      %v2375 = vsel %vm675, %v2352, %v2350
      %v2376 = vsel %vm675, %v2356, %v2354
      %v2377 = vmul.f32 %v2357, %v684
      %v2378 = vmul.f32 %v2373, %v685
      %v2379 = vmul.f32 %v2358, %v684
      %v2380 = vmul.f32 %v2374, %v685
      %v2381 = vmul.f32 %v2359, %v684
      %v2382 = vmul.f32 %v2375, %v685
      %v2383 = vmul.f32 %v2360, %v684
      %v2384 = vmul.f32 %v2376, %v685
      %v2385 = vmax.f32 %v2333, %v2377
      %v2386 = vmax.f32 %v2334, %v2378
      %v2387 = vmax.f32 %v2335, %v2379
      %v2388 = vmax.f32 %v2336, %v2380
      %v2389 = vmax.f32 %v2337, %v2381
      %v2390 = vmax.f32 %v2338, %v2382
      %v2391 = vmax.f32 %v2339, %v2383
      %v2392 = vmax.f32 %v2340, %v2384
      %v2393 = vmax.f32 %v2281, %v2385
      %v2394 = vmax.f32 %v2282, %v2386
      %v2395 = vmax.f32 %v2283, %v2387
      %v2396 = vmax.f32 %v2284, %v2388
      %v2397 = vmax.f32 %v2285, %v2389
      %v2398 = vmax.f32 %v2286, %v2390
      %v2399 = vmax.f32 %v2287, %v2391
      %v2400 = vmax.f32 %v2288, %v2392
      %2405 = vrot.lane.b32.xlu0 %v2394, 16
      %v2406 = vpop.permute.xlu0 %2405
      %2407 = vrot.lane.b32.xlu0 %v2396, 16
      %v2408 = vpop.permute.xlu0 %2407
      %2409 = vrot.lane.b32.xlu0 %v2398, 16
      %v2410 = vpop.permute.xlu0 %2409
      %2411 = vrot.lane.b32.xlu0 %v2400, 16
      %v2412 = vpop.permute.xlu0 %2411
      %2421 = vrot.lane.b32.xlu0 %v2393, 16
      %v2422 = vpop.permute.xlu0 %2421
      %2423 = vrot.lane.b32.xlu0 %v2395, 16
      %v2424 = vpop.permute.xlu0 %2423
      %2425 = vrot.lane.b32.xlu0 %v2397, 16
      %v2426 = vpop.permute.xlu0 %2425
      %2427 = vrot.lane.b32.xlu0 %v2399, 16
      %v2428 = vpop.permute.xlu0 %2427
      %v2429 = vsel %vm428, %v2422, %v2406
      %v2430 = vsel %vm428, %v2424, %v2408
      %v2431 = vsel %vm428, %v2426, %v2410
      %v2432 = vsel %vm428, %v2428, %v2412
      %v2441 = vsel %vm428, %v2406, %v2422
      %v2442 = vsel %vm428, %v2408, %v2424
      %v2443 = vsel %vm428, %v2410, %v2426
      %v2444 = vsel %vm428, %v2412, %v2428
      %v2445 = vmul.f32 %v2441, %v436
      %v2446 = vmul.f32 %v2429, %v437
      %v2447 = vmul.f32 %v2442, %v436
      %v2448 = vmul.f32 %v2430, %v437
      %v2449 = vmul.f32 %v2443, %v436
      %v2450 = vmul.f32 %v2431, %v437
      %v2451 = vmul.f32 %v2444, %v436
      %v2452 = vmul.f32 %v2432, %v437
      %2453 = vrot.lane.b32.xlu0 %v2393, 112
      %v2454 = vpop.permute.xlu0 %2453
      %2455 = vrot.lane.b32.xlu0 %v2394, 112
      %v2456 = vpop.permute.xlu0 %2455
      %2457 = vrot.lane.b32.xlu0 %v2395, 112
      %v2458 = vpop.permute.xlu0 %2457
      %2459 = vrot.lane.b32.xlu0 %v2396, 112
      %v2460 = vpop.permute.xlu0 %2459
      %2461 = vrot.lane.b32.xlu0 %v2397, 112
      %v2462 = vpop.permute.xlu0 %2461
      %2463 = vrot.lane.b32.xlu0 %v2398, 112
      %v2464 = vpop.permute.xlu0 %2463
      %2465 = vrot.lane.b32.xlu0 %v2399, 112
      %v2466 = vpop.permute.xlu0 %2465
      %2467 = vrot.lane.b32.xlu0 %v2400, 112
      %v2468 = vpop.permute.xlu0 %2467
      %v2469 = vsel %vm844, %v2454, %v2456
      %v2470 = vsel %vm844, %v2458, %v2460
      %v2471 = vsel %vm844, %v2462, %v2464
      %v2472 = vsel %vm844, %v2466, %v2468
      %v2485 = vsel %vm844, %v2456, %v2454
      %v2486 = vsel %vm844, %v2460, %v2458
      %v2487 = vsel %vm844, %v2464, %v2462
      %v2488 = vsel %vm844, %v2468, %v2466
      %v2489 = vmul.f32 %v2469, %v853
      %v2490 = vmul.f32 %v2485, %v854
      %v2491 = vmul.f32 %v2470, %v853
      %v2492 = vmul.f32 %v2486, %v854
      %v2493 = vmul.f32 %v2471, %v853
      %v2494 = vmul.f32 %v2487, %v854
      %v2495 = vmul.f32 %v2472, %v853
      %v2496 = vmul.f32 %v2488, %v854
      %v2497 = vmax.f32 %v2445, %v2489
      %v2498 = vmax.f32 %v2446, %v2490
      %v2499 = vmax.f32 %v2447, %v2491
      %v2500 = vmax.f32 %v2448, %v2492
      %v2501 = vmax.f32 %v2449, %v2493
      %v2502 = vmax.f32 %v2450, %v2494
      %v2503 = vmax.f32 %v2451, %v2495
      %v2504 = vmax.f32 %v2452, %v2496
      %v2505 = vmax.f32 %v2393, %v2497
      %v2506 = vmax.f32 %v2394, %v2498
      %v2507 = vmax.f32 %v2395, %v2499
      %v2508 = vmax.f32 %v2396, %v2500
      %v2509 = vmax.f32 %v2397, %v2501
      %v2510 = vmax.f32 %v2398, %v2502
      %v2511 = vmax.f32 %v2399, %v2503
      %v2512 = vmax.f32 %v2400, %v2504
      %2513 = vst [vmem:[%s248] sm:$0xff] %v2505
      %2514 = vst [vmem:[%s248 + $0x8] sm:$0xff] %v2506
      %2515 = vst [vmem:[%s248 + $0x10] sm:$0xff] %v2507
      %2516 = vst [vmem:[%s248 + $0x18] sm:$0xff] %v2508
      %2517 = vst [vmem:[%s248 + $0x20] sm:$0xff] %v2509
      %2518 = vst [vmem:[%s248 + $0x28] sm:$0xff] %v2510
      %2519 = vst [vmem:[%s248 + $0x30] sm:$0xff] %v2511
      %2520 = vst [vmem:[%s248 + $0x38] sm:$0xff] %v2512
      %p2521 = scmp.lt.s32.totalorder %s17, 1
      %s2522 = scalar_select %p2521, %s17, 1
      %s2523 = smul.addr %s2522, 8
      %s2524 = smul.addr %s2523, 8
      %s2525 = scalar_lea.vmem %s6, %s2524
      // Predicated region
      $region45: #{encoder_forward.1} parent=43 // pred_check
        %p2526 = pneg %p166
      $region46: #{encoder_forward.1} parent=43 // pred_check_branch
        %2528 = sbr.rel (%p2526) target = $region48
      $region47: #{encoder_forward.1} parent=43 // pred_region
        _
      $region48: #{encoder_forward.1} parent=43 // pred_fallthru
        _
    $region44: #{encoder_forward.1} parent=5 // pred_fallthru
      _
    %p2529 = scmp.le.s32.totalorder 2, %s12
    // Predicated region
    $region49: #{encoder_forward.1} parent=5 // pred_check
      %p2530 = pneg %p2529
    $region50: #{encoder_forward.1} parent=5 // pred_check_branch
      %2532 = sbr.rel (%p2530) target = $region52
    $region51: #{encoder_forward.1} parent=5 // pred_region
      %s2533 = ssub.s32 %s12, 2
      // Predicated region
      $region53: #{encoder_forward.1} parent=51 // pred_check
        %p2534 = pneg %p172
      $region54: #{encoder_forward.1} parent=51 // pred_check_branch
        %2536 = sbr.rel (%p2534) target = $region56
      $region55: #{encoder_forward.1} parent=51 // pred_region
        %p2537 = scmp.lt.s32.totalorder %s18, 1
        %s2538 = scalar_select %p2537, %s18, 1
        %s2539 = smul.addr %s2538, 8
        %s2540 = smul.addr %s2539, 8
        %s2541 = scalar_lea.vmem %s6, %s2540
      $region56: #{encoder_forward.1} parent=51 // pred_fallthru
        _
    $region52: #{encoder_forward.1} parent=5 // pred_fallthru
      _
  $region6: #{encoder_forward.1} parent=0 // loop_footer
    %s16 = sadd.s32 1, %s12
  $region7: #{encoder_forward.1} parent=0 // loop_footer_branch
    %11 = sbr.rel target = $region3
  $region8: #{encoder_forward.1} parent=0 // loop_exit
    _

</llo_original>
